<compile_context>
chip_gen: v7x
topology: tpu7x:2x2x1
jax: 0.10.0
libtpu: 0.0.40
codegen_flags: <defaults>
</compile_context>

<pallas_src>
import jax
import jax.numpy as jnp
import numpy as np
from jax.experimental import pallas as pl
from jax.experimental.pallas import tpu as pltpu

BN_EPS = 1e-5
LANES = 128


def _round_up(a, b):
    return (a + b - 1) // b * b


def _im2col(x_nchw, kh, kw, stride):
    """(N,C,H,W) -> (N*OH*OW, C*KH*KW); column order matches PyTorch (Cin,KH,KW) flatten."""
    N, C, H, W = x_nchw.shape
    oh = (H - kh) // stride + 1
    ow = (W - kw) // stride + 1
    cols = []
    for i in range(kh):
        for j in range(kw):
            cols.append(x_nchw[:, :, i:i + stride * oh:stride, j:j + stride * ow:stride])
    p = jnp.stack(cols, axis=0).transpose(1, 3, 4, 2, 0)      # (N, OH, OW, C, KH*KW)
    return p.reshape(N * oh * ow, C * kh * kw), (oh, ow)


def _make_kernel(N, OH1, OW1, OH2, OW2, KH, KW, C1, M1, M1P, M2):
    """Build the fused kernel as a closure over the (static) problem dimensions."""
    n_taps = KH * KW
    inv_m1 = 1.0 / M1
    inv_m2 = 1.0 / M2
    pad_rows1 = float(M1P - M1)

    def kernel(p1_ref, w0_ref, gb0_ref, w1c_ref, gb1_ref, o_ref,
               inter_ref, p2_ref, w1big_ref):
        # ---- assemble conv1 deep-K weights (25*128, 128) from compact (25, C1, 128) ----
        # zero-init so the padded-channel rows are finite (they multiply exact zeros).
        w1big_ref[...] = jnp.zeros_like(w1big_ref)
        for t in range(n_taps):
            w1big_ref[t * LANES:t * LANES + C1, :] = w1c_ref[t]

        # ---- stage 1: conv0 as one im2col matmul + BN0 (batch stats over M1 rows) ----
        y1 = jnp.dot(p1_ref[...], w0_ref[...],
                     preferred_element_type=jnp.float32)          # (M1P, 128) f32
        mean1 = jnp.sum(y1, axis=0, keepdims=True) * inv_m1       # zero pad rows -> exact
        d1 = y1 - mean1
        # each zero pad row contributes mean^2 to sum(d1*d1); subtract it out (exact).
        var1 = (jnp.sum(d1 * d1, axis=0, keepdims=True)
                - pad_rows1 * mean1 * mean1) * inv_m1
        gb0 = gb0_ref[...]
        scale1 = gb0[0:1, :] * jax.lax.rsqrt(var1 + BN_EPS)       # rsqrt -> EUP
        shift1 = gb0[1:2, :] - mean1 * scale1
        inter_ref[...] = y1 * scale1 + shift1                     # (M1P,128) f32, stays in VMEM

        # ---- stage 2 im2col: static-slice gather of inter into (M2, 25*128) patches ----
        for n in range(N):
            for oy in range(OH2):
                g = n * OH2 + oy
                for i in range(KH):
                    for j in range(KW):
                        t = i * KW + j
                        base = (n * OH1 + oy + i) * OW1 + j
                        p2_ref[g * OW2:(g + 1) * OW2, t * LANES:(t + 1) * LANES] = (
                            inter_ref[base:base + OW2, :].astype(jnp.bfloat16))

        # ---- stage 2: conv1 as ONE deep-K matmul + BN1 ----
        y2 = jnp.dot(p2_ref[...], w1big_ref[...],
                     preferred_element_type=jnp.float32)          # (M2, 128) f32
        mean2 = jnp.sum(y2, axis=0, keepdims=True) * inv_m2
        d2 = y2 - mean2
        var2 = jnp.sum(d2 * d2, axis=0, keepdims=True) * inv_m2
        gb1 = gb1_ref[...]
        scale2 = gb1[0:1, :] * jax.lax.rsqrt(var2 + BN_EPS)
        o_ref[...] = d2 * scale2 + gb1[1:2, :]                    # lane-dense (M2,128) store

    return kernel


def model_forward(x, params):
    N, cin, H, W = x.shape
    c1, _, kh, kw = params["w0"].shape          # 20, 20, 5, 5
    c2 = params["w1"].shape[0]                  # 40
    s1 = 2
    oh1, ow1 = (H - kh) // s1 + 1, (W - kw) // s1 + 1
    oh2, ow2 = oh1 - kh + 1, ow1 - kw + 1
    m1, m2 = N * oh1 * ow1, N * oh2 * ow2
    k1 = cin * kh * kw
    m1p = _round_up(m1, 16)                     # bf16 sublane packing
    k1p = _round_up(k1, LANES)                  # lane alignment
    kdeep = kh * kw * LANES                     # deep-K contraction for conv1

    # ---- host-side prep (tiny at this size; fused under jit) -------------------
    # TODO(synk): for large N/H/W, build stage-1 im2col and BN stats tile-wise inside
    # the kernel over a grid (two-pass sum/sum-sq) instead of one whole-problem block.
    patches1, _ = _im2col(x, kh, kw, s1)                                       # (m1, k1)
    patches1 = jnp.pad(patches1, ((0, m1p - m1), (0, k1p - k1))).astype(jnp.bfloat16)
    w0mat = jnp.pad(params["w0"].reshape(c1, k1).T,
                    ((0, k1p - k1), (0, LANES - c1))).astype(jnp.bfloat16)      # (k1p,128)
    gb0 = jnp.stack([jnp.pad(params["g0"], (0, LANES - c1)),
                     jnp.pad(params["b0"], (0, LANES - c1))]).astype(jnp.float32)
    # compact conv1 weights: (taps, cin, cout->128); scattered in-kernel into (kdeep,128)
    w1c = jnp.pad(params["w1"].transpose(2, 3, 1, 0).reshape(kh * kw, c1, c2),
                  ((0, 0), (0, 0), (0, LANES - c2))).astype(jnp.bfloat16)       # (25,20,128)
    gb1 = jnp.stack([jnp.pad(params["g1"], (0, LANES - c2)),
                     jnp.pad(params["b1"], (0, LANES - c2))]).astype(jnp.float32)

    kernel = _make_kernel(N, oh1, ow1, oh2, ow2, kh, kw, c1, m1, m1p, m2)

    flops = 2 * m1p * k1p * LANES + 2 * m2 * kdeep * LANES
    bytes_accessed = ((patches1.size + w0mat.size + w1c.size) * 2
                      + (gb0.size + gb1.size + m2 * LANES) * 4)

    out = pl.pallas_call(
        kernel,
        out_shape=jax.ShapeDtypeStruct((m2, LANES), jnp.float32),
        scratch_shapes=[
            pltpu.VMEM((m1p, LANES), jnp.float32),      # BN0'd intermediate (stays on-chip)
            pltpu.VMEM((m2, kdeep), jnp.bfloat16),      # conv1 im2col patches
            pltpu.VMEM((kdeep, LANES), jnp.bfloat16),   # conv1 deep-K weights
        ],
        cost_estimate=pl.CostEstimate(flops=flops, transcendentals=2 * LANES,
                                      bytes_accessed=bytes_accessed),
    )(patches1, w0mat, gb0, w1c, gb1)

    # (m2, 128) -> valid channels -> NCHW
    return out[:, :c2].reshape(N, oh2, ow2, c2).transpose(0, 3, 1, 2)


def _reference_forward(x, params):
    """Pure-JAX reference with the same bf16-rounded matmul operands (f32 math)."""
    bf = lambda a: a.astype(jnp.bfloat16).astype(jnp.float32)

    def conv(xx, w, stride):
        return jax.lax.conv_general_dilated(
            bf(xx), bf(w), window_strides=(stride, stride), padding="VALID",
            dimension_numbers=("NCHW", "OIHW", "NCHW"),
            precision=jax.lax.Precision.HIGHEST)

    def bn(y, g, b):
        mean = jnp.mean(y, axis=(0, 2, 3), keepdims=True)
        var = jnp.mean((y - mean) ** 2, axis=(0, 2, 3), keepdims=True)
        return ((y - mean) * jax.lax.rsqrt(var + BN_EPS) * g.reshape(1, -1, 1, 1)
                + b.reshape(1, -1, 1, 1))

    y = bn(conv(x, params["w0"], 2), params["g0"], params["b0"])
    y = bn(conv(y, params["w1"], 1), params["g1"], params["b1"])
    return y


def init_params(key):
    k0, k1 = jax.random.split(key)
    # deterministic synthetic init (kaiming-like); BN: gamma=1, beta=0 (PyTorch defaults)
    fan = 20 * 5 * 5
    return {
        "w0": jax.random.normal(k0, (20, 20, 5, 5), jnp.float32) * (2.0 / fan) ** 0.5,
        "g0": jnp.ones((20,), jnp.float32),
        "b0": jnp.zeros((20,), jnp.float32),
        "w1": jax.random.normal(k1, (40, 20, 5, 5), jnp.float32) * (2.0 / fan) ** 0.5,
        "g1": jnp.ones((40,), jnp.float32),
        "b1": jnp.zeros((40,), jnp.float32),
    }


# TODO(synk): PyTorch BN running_mean/running_var momentum updates (unbiased var) are not
# modeled; only the training-mode forward output (batch-stat normalization) is produced.

if __name__ == "__main__":
    key = jax.random.PRNGKey(0)
    kx, kp = jax.random.split(key)
    # NOTE: the original script's x (1,20,6,6) makes conv_1 invalid (1x1 spatial < 5x5
    # kernel after the stride-2 conv); use a spatial size valid for both convs.
    x = jax.random.normal(kx, (2, 20, 16, 16), jnp.float32)
    params = init_params(kp)

    out = jax.jit(model_forward)(x, params)
    jax.block_until_ready(out)
    assert out.shape == (2, 40, 2, 2), out.shape

    ref = _reference_forward(x, params)
    np.testing.assert_allclose(np.asarray(out), np.asarray(ref), atol=2e-2, rtol=2e-2)
    print("KERNEL_OK")
</pallas_src>

<mosaic_0001>
module attributes {stable_mosaic.version = 11 : i64} {
  func.func @kernel(%arg0: memref<80x512xbf16, #tpu.memory_space<vmem>>, %arg1: memref<512x128xbf16, #tpu.memory_space<vmem>>, %arg2: memref<2x128xf32, #tpu.memory_space<vmem>>, %arg3: memref<25x20x128xbf16, #tpu.memory_space<vmem>>, %arg4: memref<2x128xf32, #tpu.memory_space<vmem>>, %arg5: memref<8x128xf32, #tpu.memory_space<vmem>>, %arg6: memref<80x128xf32, #tpu.memory_space<vmem>>, %arg7: memref<8x3200xbf16, #tpu.memory_space<vmem>>, %arg8: memref<3200x128xbf16, #tpu.memory_space<vmem>>) attributes {dimension_semantics = [], scalar_prefetch = 0 : i64, scratch_operands = 3 : i64, tpu.core_type = #tpu.core_type<tc>} {
    %cst = arith.constant 0.000000e+00 : bf16
    %0 = vector.broadcast %cst : bf16 to vector<3200x128xbf16>
    %c0 = arith.constant 0 : index
    %c0_0 = arith.constant 0 : index
    %1 = vector.load %arg8[%c0, %c0_0] : memref<3200x128xbf16, #tpu.memory_space<vmem>>, vector<3200x128xbf16>
    tpu.vector_store %arg8[%c0, %c0_0], %0 {strides = array<i32>} : memref<3200x128xbf16, #tpu.memory_space<vmem>>, vector<3200x128xbf16>,
    %c0_1 = arith.constant 0 : index
    %c0_2 = arith.constant 0 : index
    %c0_3 = arith.constant 0 : index
    %2 = vector.load %arg3[%c0_1, %c0_2, %c0_3] : memref<25x20x128xbf16, #tpu.memory_space<vmem>>, vector<1x20x128xbf16>
    %3 = vector.shape_cast %2 : vector<1x20x128xbf16> to vector<20x128xbf16>
    %c0_4 = arith.constant 0 : index
    %c0_5 = arith.constant 0 : index
    %4 = vector.load %arg8[%c0_4, %c0_5] : memref<3200x128xbf16, #tpu.memory_space<vmem>>, vector<20x128xbf16>
    tpu.vector_store %arg8[%c0_4, %c0_5], %3 {strides = array<i32>} : memref<3200x128xbf16, #tpu.memory_space<vmem>>, vector<20x128xbf16>,
    %c1 = arith.constant 1 : index
    %c0_6 = arith.constant 0 : index
    %c0_7 = arith.constant 0 : index
    %5 = vector.load %arg3[%c1, %c0_6, %c0_7] : memref<25x20x128xbf16, #tpu.memory_space<vmem>>, vector<1x20x128xbf16>
    %6 = vector.shape_cast %5 : vector<1x20x128xbf16> to vector<20x128xbf16>
    %c128 = arith.constant 128 : index
    %c0_8 = arith.constant 0 : index
    %7 = vector.load %arg8[%c128, %c0_8] : memref<3200x128xbf16, #tpu.memory_space<vmem>>, vector<20x128xbf16>
    tpu.vector_store %arg8[%c128, %c0_8], %6 {strides = array<i32>} : memref<3200x128xbf16, #tpu.memory_space<vmem>>, vector<20x128xbf16>,
    %c2 = arith.constant 2 : index
    %c0_9 = arith.constant 0 : index
    %c0_10 = arith.constant 0 : index
    %8 = vector.load %arg3[%c2, %c0_9, %c0_10] : memref<25x20x128xbf16, #tpu.memory_space<vmem>>, vector<1x20x128xbf16>
    %9 = vector.shape_cast %8 : vector<1x20x128xbf16> to vector<20x128xbf16>
    %c256 = arith.constant 256 : index
    %c0_11 = arith.constant 0 : index
    %10 = vector.load %arg8[%c256, %c0_11] : memref<3200x128xbf16, #tpu.memory_space<vmem>>, vector<20x128xbf16>
    tpu.vector_store %arg8[%c256, %c0_11], %9 {strides = array<i32>} : memref<3200x128xbf16, #tpu.memory_space<vmem>>, vector<20x128xbf16>,
    %c3 = arith.constant 3 : index
    %c0_12 = arith.constant 0 : index
    %c0_13 = arith.constant 0 : index
    %11 = vector.load %arg3[%c3, %c0_12, %c0_13] : memref<25x20x128xbf16, #tpu.memory_space<vmem>>, vector<1x20x128xbf16>
    %12 = vector.shape_cast %11 : vector<1x20x128xbf16> to vector<20x128xbf16>
    %c384 = arith.constant 384 : index
    %c0_14 = arith.constant 0 : index
    %13 = vector.load %arg8[%c384, %c0_14] : memref<3200x128xbf16, #tpu.memory_space<vmem>>, vector<20x128xbf16>
    tpu.vector_store %arg8[%c384, %c0_14], %12 {strides = array<i32>} : memref<3200x128xbf16, #tpu.memory_space<vmem>>, vector<20x128xbf16>,
    %c4 = arith.constant 4 : index
    %c0_15 = arith.constant 0 : index
    %c0_16 = arith.constant 0 : index
    %14 = vector.load %arg3[%c4, %c0_15, %c0_16] : memref<25x20x128xbf16, #tpu.memory_space<vmem>>, vector<1x20x128xbf16>
    %15 = vector.shape_cast %14 : vector<1x20x128xbf16> to vector<20x128xbf16>
    %c512 = arith.constant 512 : index
    %c0_17 = arith.constant 0 : index
    %16 = vector.load %arg8[%c512, %c0_17] : memref<3200x128xbf16, #tpu.memory_space<vmem>>, vector<20x128xbf16>
    tpu.vector_store %arg8[%c512, %c0_17], %15 {strides = array<i32>} : memref<3200x128xbf16, #tpu.memory_space<vmem>>, vector<20x128xbf16>,
    %c5 = arith.constant 5 : index
    %c0_18 = arith.constant 0 : index
    %c0_19 = arith.constant 0 : index
    %17 = vector.load %arg3[%c5, %c0_18, %c0_19] : memref<25x20x128xbf16, #tpu.memory_space<vmem>>, vector<1x20x128xbf16>
    %18 = vector.shape_cast %17 : vector<1x20x128xbf16> to vector<20x128xbf16>
    %c640 = arith.constant 640 : index
    %c0_20 = arith.constant 0 : index
    %19 = vector.load %arg8[%c640, %c0_20] : memref<3200x128xbf16, #tpu.memory_space<vmem>>, vector<20x128xbf16>
    tpu.vector_store %arg8[%c640, %c0_20], %18 {strides = array<i32>} : memref<3200x128xbf16, #tpu.memory_space<vmem>>, vector<20x128xbf16>,
    %c6 = arith.constant 6 : index
    %c0_21 = arith.constant 0 : index
    %c0_22 = arith.constant 0 : index
    %20 = vector.load %arg3[%c6, %c0_21, %c0_22] : memref<25x20x128xbf16, #tpu.memory_space<vmem>>, vector<1x20x128xbf16>
    %21 = vector.shape_cast %20 : vector<1x20x128xbf16> to vector<20x128xbf16>
    %c768 = arith.constant 768 : index
    %c0_23 = arith.constant 0 : index
    %22 = vector.load %arg8[%c768, %c0_23] : memref<3200x128xbf16, #tpu.memory_space<vmem>>, vector<20x128xbf16>
    tpu.vector_store %arg8[%c768, %c0_23], %21 {strides = array<i32>} : memref<3200x128xbf16, #tpu.memory_space<vmem>>, vector<20x128xbf16>,
    %c7 = arith.constant 7 : index
    %c0_24 = arith.constant 0 : index
    %c0_25 = arith.constant 0 : index
    %23 = vector.load %arg3[%c7, %c0_24, %c0_25] : memref<25x20x128xbf16, #tpu.memory_space<vmem>>, vector<1x20x128xbf16>
    %24 = vector.shape_cast %23 : vector<1x20x128xbf16> to vector<20x128xbf16>
    %c896 = arith.constant 896 : index
    %c0_26 = arith.constant 0 : index
    %25 = vector.load %arg8[%c896, %c0_26] : memref<3200x128xbf16, #tpu.memory_space<vmem>>, vector<20x128xbf16>
    tpu.vector_store %arg8[%c896, %c0_26], %24 {strides = array<i32>} : memref<3200x128xbf16, #tpu.memory_space<vmem>>, vector<20x128xbf16>,
    %c8 = arith.constant 8 : index
    %c0_27 = arith.constant 0 : index
    %c0_28 = arith.constant 0 : index
    %26 = vector.load %arg3[%c8, %c0_27, %c0_28] : memref<25x20x128xbf16, #tpu.memory_space<vmem>>, vector<1x20x128xbf16>
    %27 = vector.shape_cast %26 : vector<1x20x128xbf16> to vector<20x128xbf16>
    %c1024 = arith.constant 1024 : index
    %c0_29 = arith.constant 0 : index
    %28 = vector.load %arg8[%c1024, %c0_29] : memref<3200x128xbf16, #tpu.memory_space<vmem>>, vector<20x128xbf16>
    tpu.vector_store %arg8[%c1024, %c0_29], %27 {strides = array<i32>} : memref<3200x128xbf16, #tpu.memory_space<vmem>>, vector<20x128xbf16>,
    %c9 = arith.constant 9 : index
    %c0_30 = arith.constant 0 : index
    %c0_31 = arith.constant 0 : index
    %29 = vector.load %arg3[%c9, %c0_30, %c0_31] : memref<25x20x128xbf16, #tpu.memory_space<vmem>>, vector<1x20x128xbf16>
    %30 = vector.shape_cast %29 : vector<1x20x128xbf16> to vector<20x128xbf16>
    %c1152 = arith.constant 1152 : index
    %c0_32 = arith.constant 0 : index
    %31 = vector.load %arg8[%c1152, %c0_32] : memref<3200x128xbf16, #tpu.memory_space<vmem>>, vector<20x128xbf16>
    tpu.vector_store %arg8[%c1152, %c0_32], %30 {strides = array<i32>} : memref<3200x128xbf16, #tpu.memory_space<vmem>>, vector<20x128xbf16>,
    %c10 = arith.constant 10 : index
    %c0_33 = arith.constant 0 : index
    %c0_34 = arith.constant 0 : index
    %32 = vector.load %arg3[%c10, %c0_33, %c0_34] : memref<25x20x128xbf16, #tpu.memory_space<vmem>>, vector<1x20x128xbf16>
    %33 = vector.shape_cast %32 : vector<1x20x128xbf16> to vector<20x128xbf16>
    %c1280 = arith.constant 1280 : index
    %c0_35 = arith.constant 0 : index
    %34 = vector.load %arg8[%c1280, %c0_35] : memref<3200x128xbf16, #tpu.memory_space<vmem>>, vector<20x128xbf16>
    tpu.vector_store %arg8[%c1280, %c0_35], %33 {strides = array<i32>} : memref<3200x128xbf16, #tpu.memory_space<vmem>>, vector<20x128xbf16>,
    %c11 = arith.constant 11 : index
    %c0_36 = arith.constant 0 : index
    %c0_37 = arith.constant 0 : index
    %35 = vector.load %arg3[%c11, %c0_36, %c0_37] : memref<25x20x128xbf16, #tpu.memory_space<vmem>>, vector<1x20x128xbf16>
    %36 = vector.shape_cast %35 : vector<1x20x128xbf16> to vector<20x128xbf16>
    %c1408 = arith.constant 1408 : index
    %c0_38 = arith.constant 0 : index
    %37 = vector.load %arg8[%c1408, %c0_38] : memref<3200x128xbf16, #tpu.memory_space<vmem>>, vector<20x128xbf16>
    tpu.vector_store %arg8[%c1408, %c0_38], %36 {strides = array<i32>} : memref<3200x128xbf16, #tpu.memory_space<vmem>>, vector<20x128xbf16>,
    %c12 = arith.constant 12 : index
    %c0_39 = arith.constant 0 : index
    %c0_40 = arith.constant 0 : index
    %38 = vector.load %arg3[%c12, %c0_39, %c0_40] : memref<25x20x128xbf16, #tpu.memory_space<vmem>>, vector<1x20x128xbf16>
    %39 = vector.shape_cast %38 : vector<1x20x128xbf16> to vector<20x128xbf16>
    %c1536 = arith.constant 1536 : index
    %c0_41 = arith.constant 0 : index
    %40 = vector.load %arg8[%c1536, %c0_41] : memref<3200x128xbf16, #tpu.memory_space<vmem>>, vector<20x128xbf16>
    tpu.vector_store %arg8[%c1536, %c0_41], %39 {strides = array<i32>} : memref<3200x128xbf16, #tpu.memory_space<vmem>>, vector<20x128xbf16>,
    %c13 = arith.constant 13 : index
    %c0_42 = arith.constant 0 : index
    %c0_43 = arith.constant 0 : index
    %41 = vector.load %arg3[%c13, %c0_42, %c0_43] : memref<25x20x128xbf16, #tpu.memory_space<vmem>>, vector<1x20x128xbf16>
    %42 = vector.shape_cast %41 : vector<1x20x128xbf16> to vector<20x128xbf16>
    %c1664 = arith.constant 1664 : index
    %c0_44 = arith.constant 0 : index
    %43 = vector.load %arg8[%c1664, %c0_44] : memref<3200x128xbf16, #tpu.memory_space<vmem>>, vector<20x128xbf16>
    tpu.vector_store %arg8[%c1664, %c0_44], %42 {strides = array<i32>} : memref<3200x128xbf16, #tpu.memory_space<vmem>>, vector<20x128xbf16>,
    %c14 = arith.constant 14 : index
    %c0_45 = arith.constant 0 : index
    %c0_46 = arith.constant 0 : index
    %44 = vector.load %arg3[%c14, %c0_45, %c0_46] : memref<25x20x128xbf16, #tpu.memory_space<vmem>>, vector<1x20x128xbf16>
    %45 = vector.shape_cast %44 : vector<1x20x128xbf16> to vector<20x128xbf16>
    %c1792 = arith.constant 1792 : index
    %c0_47 = arith.constant 0 : index
    %46 = vector.load %arg8[%c1792, %c0_47] : memref<3200x128xbf16, #tpu.memory_space<vmem>>, vector<20x128xbf16>
    tpu.vector_store %arg8[%c1792, %c0_47], %45 {strides = array<i32>} : memref<3200x128xbf16, #tpu.memory_space<vmem>>, vector<20x128xbf16>,
    %c15 = arith.constant 15 : index
    %c0_48 = arith.constant 0 : index
    %c0_49 = arith.constant 0 : index
    %47 = vector.load %arg3[%c15, %c0_48, %c0_49] : memref<25x20x128xbf16, #tpu.memory_space<vmem>>, vector<1x20x128xbf16>
    %48 = vector.shape_cast %47 : vector<1x20x128xbf16> to vector<20x128xbf16>
    %c1920 = arith.constant 1920 : index
    %c0_50 = arith.constant 0 : index
    %49 = vector.load %arg8[%c1920, %c0_50] : memref<3200x128xbf16, #tpu.memory_space<vmem>>, vector<20x128xbf16>
    tpu.vector_store %arg8[%c1920, %c0_50], %48 {strides = array<i32>} : memref<3200x128xbf16, #tpu.memory_space<vmem>>, vector<20x128xbf16>,
    %c16 = arith.constant 16 : index
    %c0_51 = arith.constant 0 : index
    %c0_52 = arith.constant 0 : index
    %50 = vector.load %arg3[%c16, %c0_51, %c0_52] : memref<25x20x128xbf16, #tpu.memory_space<vmem>>, vector<1x20x128xbf16>
    %51 = vector.shape_cast %50 : vector<1x20x128xbf16> to vector<20x128xbf16>
    %c2048 = arith.constant 2048 : index
    %c0_53 = arith.constant 0 : index
    %52 = vector.load %arg8[%c2048, %c0_53] : memref<3200x128xbf16, #tpu.memory_space<vmem>>, vector<20x128xbf16>
    tpu.vector_store %arg8[%c2048, %c0_53], %51 {strides = array<i32>} : memref<3200x128xbf16, #tpu.memory_space<vmem>>, vector<20x128xbf16>,
    %c17 = arith.constant 17 : index
    %c0_54 = arith.constant 0 : index
    %c0_55 = arith.constant 0 : index
    %53 = vector.load %arg3[%c17, %c0_54, %c0_55] : memref<25x20x128xbf16, #tpu.memory_space<vmem>>, vector<1x20x128xbf16>
    %54 = vector.shape_cast %53 : vector<1x20x128xbf16> to vector<20x128xbf16>
    %c2176 = arith.constant 2176 : index
    %c0_56 = arith.constant 0 : index
    %55 = vector.load %arg8[%c2176, %c0_56] : memref<3200x128xbf16, #tpu.memory_space<vmem>>, vector<20x128xbf16>
    tpu.vector_store %arg8[%c2176, %c0_56], %54 {strides = array<i32>} : memref<3200x128xbf16, #tpu.memory_space<vmem>>, vector<20x128xbf16>,
    %c18 = arith.constant 18 : index
    %c0_57 = arith.constant 0 : index
    %c0_58 = arith.constant 0 : index
    %56 = vector.load %arg3[%c18, %c0_57, %c0_58] : memref<25x20x128xbf16, #tpu.memory_space<vmem>>, vector<1x20x128xbf16>
    %57 = vector.shape_cast %56 : vector<1x20x128xbf16> to vector<20x128xbf16>
    %c2304 = arith.constant 2304 : index
    %c0_59 = arith.constant 0 : index
    %58 = vector.load %arg8[%c2304, %c0_59] : memref<3200x128xbf16, #tpu.memory_space<vmem>>, vector<20x128xbf16>
    tpu.vector_store %arg8[%c2304, %c0_59], %57 {strides = array<i32>} : memref<3200x128xbf16, #tpu.memory_space<vmem>>, vector<20x128xbf16>,
    %c19 = arith.constant 19 : index
    %c0_60 = arith.constant 0 : index
    %c0_61 = arith.constant 0 : index
    %59 = vector.load %arg3[%c19, %c0_60, %c0_61] : memref<25x20x128xbf16, #tpu.memory_space<vmem>>, vector<1x20x128xbf16>
    %60 = vector.shape_cast %59 : vector<1x20x128xbf16> to vector<20x128xbf16>
    %c2432 = arith.constant 2432 : index
    %c0_62 = arith.constant 0 : index
    %61 = vector.load %arg8[%c2432, %c0_62] : memref<3200x128xbf16, #tpu.memory_space<vmem>>, vector<20x128xbf16>
    tpu.vector_store %arg8[%c2432, %c0_62], %60 {strides = array<i32>} : memref<3200x128xbf16, #tpu.memory_space<vmem>>, vector<20x128xbf16>,
    %c20 = arith.constant 20 : index
    %c0_63 = arith.constant 0 : index
    %c0_64 = arith.constant 0 : index
    %62 = vector.load %arg3[%c20, %c0_63, %c0_64] : memref<25x20x128xbf16, #tpu.memory_space<vmem>>, vector<1x20x128xbf16>
    %63 = vector.shape_cast %62 : vector<1x20x128xbf16> to vector<20x128xbf16>
    %c2560 = arith.constant 2560 : index
    %c0_65 = arith.constant 0 : index
    %64 = vector.load %arg8[%c2560, %c0_65] : memref<3200x128xbf16, #tpu.memory_space<vmem>>, vector<20x128xbf16>
    tpu.vector_store %arg8[%c2560, %c0_65], %63 {strides = array<i32>} : memref<3200x128xbf16, #tpu.memory_space<vmem>>, vector<20x128xbf16>,
    %c21 = arith.constant 21 : index
    %c0_66 = arith.constant 0 : index
    %c0_67 = arith.constant 0 : index
    %65 = vector.load %arg3[%c21, %c0_66, %c0_67] : memref<25x20x128xbf16, #tpu.memory_space<vmem>>, vector<1x20x128xbf16>
    %66 = vector.shape_cast %65 : vector<1x20x128xbf16> to vector<20x128xbf16>
    %c2688 = arith.constant 2688 : index
    %c0_68 = arith.constant 0 : index
    %67 = vector.load %arg8[%c2688, %c0_68] : memref<3200x128xbf16, #tpu.memory_space<vmem>>, vector<20x128xbf16>
    tpu.vector_store %arg8[%c2688, %c0_68], %66 {strides = array<i32>} : memref<3200x128xbf16, #tpu.memory_space<vmem>>, vector<20x128xbf16>,
    %c22 = arith.constant 22 : index
    %c0_69 = arith.constant 0 : index
    %c0_70 = arith.constant 0 : index
    %68 = vector.load %arg3[%c22, %c0_69, %c0_70] : memref<25x20x128xbf16, #tpu.memory_space<vmem>>, vector<1x20x128xbf16>
    %69 = vector.shape_cast %68 : vector<1x20x128xbf16> to vector<20x128xbf16>
    %c2816 = arith.constant 2816 : index
    %c0_71 = arith.constant 0 : index
    %70 = vector.load %arg8[%c2816, %c0_71] : memref<3200x128xbf16, #tpu.memory_space<vmem>>, vector<20x128xbf16>
    tpu.vector_store %arg8[%c2816, %c0_71], %69 {strides = array<i32>} : memref<3200x128xbf16, #tpu.memory_space<vmem>>, vector<20x128xbf16>,
    %c23 = arith.constant 23 : index
    %c0_72 = arith.constant 0 : index
    %c0_73 = arith.constant 0 : index
    %71 = vector.load %arg3[%c23, %c0_72, %c0_73] : memref<25x20x128xbf16, #tpu.memory_space<vmem>>, vector<1x20x128xbf16>
    %72 = vector.shape_cast %71 : vector<1x20x128xbf16> to vector<20x128xbf16>
    %c2944 = arith.constant 2944 : index
    %c0_74 = arith.constant 0 : index
    %73 = vector.load %arg8[%c2944, %c0_74] : memref<3200x128xbf16, #tpu.memory_space<vmem>>, vector<20x128xbf16>
    tpu.vector_store %arg8[%c2944, %c0_74], %72 {strides = array<i32>} : memref<3200x128xbf16, #tpu.memory_space<vmem>>, vector<20x128xbf16>,
    %c24 = arith.constant 24 : index
    %c0_75 = arith.constant 0 : index
    %c0_76 = arith.constant 0 : index
    %74 = vector.load %arg3[%c24, %c0_75, %c0_76] : memref<25x20x128xbf16, #tpu.memory_space<vmem>>, vector<1x20x128xbf16>
    %75 = vector.shape_cast %74 : vector<1x20x128xbf16> to vector<20x128xbf16>
    %c3072 = arith.constant 3072 : index
    %c0_77 = arith.constant 0 : index
    %76 = vector.load %arg8[%c3072, %c0_77] : memref<3200x128xbf16, #tpu.memory_space<vmem>>, vector<20x128xbf16>
    tpu.vector_store %arg8[%c3072, %c0_77], %75 {strides = array<i32>} : memref<3200x128xbf16, #tpu.memory_space<vmem>>, vector<20x128xbf16>,
    %c0_78 = arith.constant 0 : index
    %c0_79 = arith.constant 0 : index
    %77 = vector.load %arg0[%c0_78, %c0_79] : memref<80x512xbf16, #tpu.memory_space<vmem>>, vector<80x512xbf16>
    %c0_80 = arith.constant 0 : index
    %c0_81 = arith.constant 0 : index
    %78 = vector.load %arg1[%c0_80, %c0_81] : memref<512x128xbf16, #tpu.memory_space<vmem>>, vector<512x128xbf16>
    %cst_82 = arith.constant dense<0.000000e+00> : vector<80x128xf32>
    %79 = tpu.matmul %77, %78, %cst_82 {dimension_numbers = #tpu.dot_dimension_numbers<[1], [0], [0], [1], [0, 0, 1, 1], [], []>} : vector<80x512xbf16>, vector<512x128xbf16>, vector<80x128xf32> -> vector<80x128xf32>
    %cst_83 = arith.constant dense<0.000000e+00> : vector<128xf32>
    %80 = vector.multi_reduction <add>, %79, %cst_83 [0] : vector<80x128xf32> to vector<128xf32>
    %81 = vector.shape_cast %80 : vector<128xf32> to vector<1x128xf32>
    %cst_84 = arith.constant 0.013888889 : f32
    %82 = vector.broadcast %cst_84 : f32 to vector<1x128xf32>
    %83 = arith.mulf %81, %82 : vector<1x128xf32>
    %84 = vector.broadcast %83 : vector<1x128xf32> to vector<80x128xf32>
    %85 = arith.subf %79, %84 : vector<80x128xf32>
    %86 = arith.mulf %85, %85 : vector<80x128xf32>
    %cst_85 = arith.constant dense<0.000000e+00> : vector<128xf32>
    %87 = vector.multi_reduction <add>, %86, %cst_85 [0] : vector<80x128xf32> to vector<128xf32>
    %88 = vector.shape_cast %87 : vector<128xf32> to vector<1x128xf32>
    %cst_86 = arith.constant 8.000000e+00 : f32
    %89 = vector.broadcast %cst_86 : f32 to vector<1x128xf32>
    %90 = arith.mulf %89, %83 : vector<1x128xf32>
    %91 = arith.mulf %90, %83 : vector<1x128xf32>
    %92 = arith.subf %88, %91 : vector<1x128xf32>
    %cst_87 = arith.constant 0.013888889 : f32
    %93 = vector.broadcast %cst_87 : f32 to vector<1x128xf32>
    %94 = arith.mulf %92, %93 : vector<1x128xf32>
    %c0_88 = arith.constant 0 : index
    %c0_89 = arith.constant 0 : index
    %95 = vector.load %arg2[%c0_88, %c0_89] : memref<2x128xf32, #tpu.memory_space<vmem>>, vector<2x128xf32>
    %96 = vector.extract_strided_slice %95 {offsets = [0, 0], sizes = [1, 128], strides = [1, 1]} : vector<2x128xf32> to vector<1x128xf32>
    %cst_90 = arith.constant 9.99999974E-6 : f32
    %97 = vector.broadcast %cst_90 : f32 to vector<1x128xf32>
    %98 = arith.addf %94, %97 : vector<1x128xf32>
    %99 = math.rsqrt %98 : vector<1x128xf32>
    %100 = arith.mulf %96, %99 : vector<1x128xf32>
    %101 = vector.extract_strided_slice %95 {offsets = [1, 0], sizes = [1, 128], strides = [1, 1]} : vector<2x128xf32> to vector<1x128xf32>
    %102 = arith.mulf %83, %100 : vector<1x128xf32>
    %103 = arith.subf %101, %102 : vector<1x128xf32>
    %104 = vector.broadcast %100 : vector<1x128xf32> to vector<80x128xf32>
    %105 = arith.mulf %79, %104 : vector<80x128xf32>
    %106 = vector.broadcast %103 : vector<1x128xf32> to vector<80x128xf32>
    %107 = arith.addf %105, %106 : vector<80x128xf32>
    %c0_91 = arith.constant 0 : index
    %c0_92 = arith.constant 0 : index
    %108 = vector.load %arg6[%c0_91, %c0_92] : memref<80x128xf32, #tpu.memory_space<vmem>>, vector<80x128xf32>
    tpu.vector_store %arg6[%c0_91, %c0_92], %107 {strides = array<i32>} : memref<80x128xf32, #tpu.memory_space<vmem>>, vector<80x128xf32>,
    %c0_93 = arith.constant 0 : index
    %c0_94 = arith.constant 0 : index
    %109 = vector.load %arg6[%c0_93, %c0_94] : memref<80x128xf32, #tpu.memory_space<vmem>>, vector<2x128xf32>
    %110 = arith.truncf %109 : vector<2x128xf32> to vector<2x128xbf16>
    %c0_95 = arith.constant 0 : index
    %c0_96 = arith.constant 0 : index
    %111 = vector.load %arg7[%c0_95, %c0_96] : memref<8x3200xbf16, #tpu.memory_space<vmem>>, vector<2x128xbf16>
    tpu.vector_store %arg7[%c0_95, %c0_96], %110 {strides = array<i32>} : memref<8x3200xbf16, #tpu.memory_space<vmem>>, vector<2x128xbf16>,
    %c1_97 = arith.constant 1 : index
    %c0_98 = arith.constant 0 : index
    %112 = vector.load %arg6[%c1_97, %c0_98] : memref<80x128xf32, #tpu.memory_space<vmem>>, vector<2x128xf32>
    %113 = arith.truncf %112 : vector<2x128xf32> to vector<2x128xbf16>
    %c0_99 = arith.constant 0 : index
    %c128_100 = arith.constant 128 : index
    %114 = vector.load %arg7[%c0_99, %c128_100] : memref<8x3200xbf16, #tpu.memory_space<vmem>>, vector<2x128xbf16>
    tpu.vector_store %arg7[%c0_99, %c128_100], %113 {strides = array<i32>} : memref<8x3200xbf16, #tpu.memory_space<vmem>>, vector<2x128xbf16>,
    %c2_101 = arith.constant 2 : index
    %c0_102 = arith.constant 0 : index
    %115 = vector.load %arg6[%c2_101, %c0_102] : memref<80x128xf32, #tpu.memory_space<vmem>>, vector<2x128xf32>
    %116 = arith.truncf %115 : vector<2x128xf32> to vector<2x128xbf16>
    %c0_103 = arith.constant 0 : index
    %c256_104 = arith.constant 256 : index
    %117 = vector.load %arg7[%c0_103, %c256_104] : memref<8x3200xbf16, #tpu.memory_space<vmem>>, vector<2x128xbf16>
    tpu.vector_store %arg7[%c0_103, %c256_104], %116 {strides = array<i32>} : memref<8x3200xbf16, #tpu.memory_space<vmem>>, vector<2x128xbf16>,
    %c3_105 = arith.constant 3 : index
    %c0_106 = arith.constant 0 : index
    %118 = vector.load %arg6[%c3_105, %c0_106] : memref<80x128xf32, #tpu.memory_space<vmem>>, vector<2x128xf32>
    %119 = arith.truncf %118 : vector<2x128xf32> to vector<2x128xbf16>
    %c0_107 = arith.constant 0 : index
    %c384_108 = arith.constant 384 : index
    %120 = vector.load %arg7[%c0_107, %c384_108] : memref<8x3200xbf16, #tpu.memory_space<vmem>>, vector<2x128xbf16>
    tpu.vector_store %arg7[%c0_107, %c384_108], %119 {strides = array<i32>} : memref<8x3200xbf16, #tpu.memory_space<vmem>>, vector<2x128xbf16>,
    %c4_109 = arith.constant 4 : index
    %c0_110 = arith.constant 0 : index
    %121 = vector.load %arg6[%c4_109, %c0_110] : memref<80x128xf32, #tpu.memory_space<vmem>>, vector<2x128xf32>
    %122 = arith.truncf %121 : vector<2x128xf32> to vector<2x128xbf16>
    %c0_111 = arith.constant 0 : index
    %c512_112 = arith.constant 512 : index
    %123 = vector.load %arg7[%c0_111, %c512_112] : memref<8x3200xbf16, #tpu.memory_space<vmem>>, vector<2x128xbf16>
    tpu.vector_store %arg7[%c0_111, %c512_112], %122 {strides = array<i32>} : memref<8x3200xbf16, #tpu.memory_space<vmem>>, vector<2x128xbf16>,
    %c6_113 = arith.constant 6 : index
    %c0_114 = arith.constant 0 : index
    %124 = vector.load %arg6[%c6_113, %c0_114] : memref<80x128xf32, #tpu.memory_space<vmem>>, vector<2x128xf32>
    %125 = arith.truncf %124 : vector<2x128xf32> to vector<2x128xbf16>
    %c0_115 = arith.constant 0 : index
    %c640_116 = arith.constant 640 : index
    %126 = vector.load %arg7[%c0_115, %c640_116] : memref<8x3200xbf16, #tpu.memory_space<vmem>>, vector<2x128xbf16>
    tpu.vector_store %arg7[%c0_115, %c640_116], %125 {strides = array<i32>} : memref<8x3200xbf16, #tpu.memory_space<vmem>>, vector<2x128xbf16>,
    %c7_117 = arith.constant 7 : index
    %c0_118 = arith.constant 0 : index
    %127 = vector.load %arg6[%c7_117, %c0_118] : memref<80x128xf32, #tpu.memory_space<vmem>>, vector<2x128xf32>
    %128 = arith.truncf %127 : vector<2x128xf32> to vector<2x128xbf16>
    %c0_119 = arith.constant 0 : index
    %c768_120 = arith.constant 768 : index
    %129 = vector.load %arg7[%c0_119, %c768_120] : memref<8x3200xbf16, #tpu.memory_space<vmem>>, vector<2x128xbf16>
    tpu.vector_store %arg7[%c0_119, %c768_120], %128 {strides = array<i32>} : memref<8x3200xbf16, #tpu.memory_space<vmem>>, vector<2x128xbf16>,
    %c8_121 = arith.constant 8 : index
    %c0_122 = arith.constant 0 : index
    %130 = vector.load %arg6[%c8_121, %c0_122] : memref<80x128xf32, #tpu.memory_space<vmem>>, vector<2x128xf32>
    %131 = arith.truncf %130 : vector<2x128xf32> to vector<2x128xbf16>
    %c0_123 = arith.constant 0 : index
    %c896_124 = arith.constant 896 : index
    %132 = vector.load %arg7[%c0_123, %c896_124] : memref<8x3200xbf16, #tpu.memory_space<vmem>>, vector<2x128xbf16>
    tpu.vector_store %arg7[%c0_123, %c896_124], %131 {strides = array<i32>} : memref<8x3200xbf16, #tpu.memory_space<vmem>>, vector<2x128xbf16>,
    %c9_125 = arith.constant 9 : index
    %c0_126 = arith.constant 0 : index
    %133 = vector.load %arg6[%c9_125, %c0_126] : memref<80x128xf32, #tpu.memory_space<vmem>>, vector<2x128xf32>
    %134 = arith.truncf %133 : vector<2x128xf32> to vector<2x128xbf16>
    %c0_127 = arith.constant 0 : index
    %c1024_128 = arith.constant 1024 : index
    %135 = vector.load %arg7[%c0_127, %c1024_128] : memref<8x3200xbf16, #tpu.memory_space<vmem>>, vector<2x128xbf16>
    tpu.vector_store %arg7[%c0_127, %c1024_128], %134 {strides = array<i32>} : memref<8x3200xbf16, #tpu.memory_space<vmem>>, vector<2x128xbf16>,
    %c10_129 = arith.constant 10 : index
    %c0_130 = arith.constant 0 : index
    %136 = vector.load %arg6[%c10_129, %c0_130] : memref<80x128xf32, #tpu.memory_space<vmem>>, vector<2x128xf32>
    %137 = arith.truncf %136 : vector<2x128xf32> to vector<2x128xbf16>
    %c0_131 = arith.constant 0 : index
    %c1152_132 = arith.constant 1152 : index
    %138 = vector.load %arg7[%c0_131, %c1152_132] : memref<8x3200xbf16, #tpu.memory_space<vmem>>, vector<2x128xbf16>
    tpu.vector_store %arg7[%c0_131, %c1152_132], %137 {strides = array<i32>} : memref<8x3200xbf16, #tpu.memory_space<vmem>>, vector<2x128xbf16>,
    %c12_133 = arith.constant 12 : index
    %c0_134 = arith.constant 0 : index
    %139 = vector.load %arg6[%c12_133, %c0_134] : memref<80x128xf32, #tpu.memory_space<vmem>>, vector<2x128xf32>
    %140 = arith.truncf %139 : vector<2x128xf32> to vector<2x128xbf16>
    %c0_135 = arith.constant 0 : index
    %c1280_136 = arith.constant 1280 : index
    %141 = vector.load %arg7[%c0_135, %c1280_136] : memref<8x3200xbf16, #tpu.memory_space<vmem>>, vector<2x128xbf16>
    tpu.vector_store %arg7[%c0_135, %c1280_136], %140 {strides = array<i32>} : memref<8x3200xbf16, #tpu.memory_space<vmem>>, vector<2x128xbf16>,
    %c13_137 = arith.constant 13 : index
    %c0_138 = arith.constant 0 : index
    %142 = vector.load %arg6[%c13_137, %c0_138] : memref<80x128xf32, #tpu.memory_space<vmem>>, vector<2x128xf32>
    %143 = arith.truncf %142 : vector<2x128xf32> to vector<2x128xbf16>
    %c0_139 = arith.constant 0 : index
    %c1408_140 = arith.constant 1408 : index
    %144 = vector.load %arg7[%c0_139, %c1408_140] : memref<8x3200xbf16, #tpu.memory_space<vmem>>, vector<2x128xbf16>
    tpu.vector_store %arg7[%c0_139, %c1408_140], %143 {strides = array<i32>} : memref<8x3200xbf16, #tpu.memory_space<vmem>>, vector<2x128xbf16>,
    %c14_141 = arith.constant 14 : index
    %c0_142 = arith.constant 0 : index
    %145 = vector.load %arg6[%c14_141, %c0_142] : memref<80x128xf32, #tpu.memory_space<vmem>>, vector<2x128xf32>
    %146 = arith.truncf %145 : vector<2x128xf32> to vector<2x128xbf16>
    %c0_143 = arith.constant 0 : index
    %c1536_144 = arith.constant 1536 : index
    %147 = vector.load %arg7[%c0_143, %c1536_144] : memref<8x3200xbf16, #tpu.memory_space<vmem>>, vector<2x128xbf16>
    tpu.vector_store %arg7[%c0_143, %c1536_144], %146 {strides = array<i32>} : memref<8x3200xbf16, #tpu.memory_space<vmem>>, vector<2x128xbf16>,
    %c15_145 = arith.constant 15 : index
    %c0_146 = arith.constant 0 : index
    %148 = vector.load %arg6[%c15_145, %c0_146] : memref<80x128xf32, #tpu.memory_space<vmem>>, vector<2x128xf32>
    %149 = arith.truncf %148 : vector<2x128xf32> to vector<2x128xbf16>
    %c0_147 = arith.constant 0 : index
    %c1664_148 = arith.constant 1664 : index
    %150 = vector.load %arg7[%c0_147, %c1664_148] : memref<8x3200xbf16, #tpu.memory_space<vmem>>, vector<2x128xbf16>
    tpu.vector_store %arg7[%c0_147, %c1664_148], %149 {strides = array<i32>} : memref<8x3200xbf16, #tpu.memory_space<vmem>>, vector<2x128xbf16>,
    %c16_149 = arith.constant 16 : index
    %c0_150 = arith.constant 0 : index
    %151 = vector.load %arg6[%c16_149, %c0_150] : memref<80x128xf32, #tpu.memory_space<vmem>>, vector<2x128xf32>
    %152 = arith.truncf %151 : vector<2x128xf32> to vector<2x128xbf16>
    %c0_151 = arith.constant 0 : index
    %c1792_152 = arith.constant 1792 : index
    %153 = vector.load %arg7[%c0_151, %c1792_152] : memref<8x3200xbf16, #tpu.memory_space<vmem>>, vector<2x128xbf16>
    tpu.vector_store %arg7[%c0_151, %c1792_152], %152 {strides = array<i32>} : memref<8x3200xbf16, #tpu.memory_space<vmem>>, vector<2x128xbf16>,
    %c18_153 = arith.constant 18 : index
    %c0_154 = arith.constant 0 : index
    %154 = vector.load %arg6[%c18_153, %c0_154] : memref<80x128xf32, #tpu.memory_space<vmem>>, vector<2x128xf32>
    %155 = arith.truncf %154 : vector<2x128xf32> to vector<2x128xbf16>
    %c0_155 = arith.constant 0 : index
    %c1920_156 = arith.constant 1920 : index
    %156 = vector.load %arg7[%c0_155, %c1920_156] : memref<8x3200xbf16, #tpu.memory_space<vmem>>, vector<2x128xbf16>
    tpu.vector_store %arg7[%c0_155, %c1920_156], %155 {strides = array<i32>} : memref<8x3200xbf16, #tpu.memory_space<vmem>>, vector<2x128xbf16>,
    %c19_157 = arith.constant 19 : index
    %c0_158 = arith.constant 0 : index
    %157 = vector.load %arg6[%c19_157, %c0_158] : memref<80x128xf32, #tpu.memory_space<vmem>>, vector<2x128xf32>
    %158 = arith.truncf %157 : vector<2x128xf32> to vector<2x128xbf16>
    %c0_159 = arith.constant 0 : index
    %c2048_160 = arith.constant 2048 : index
    %159 = vector.load %arg7[%c0_159, %c2048_160] : memref<8x3200xbf16, #tpu.memory_space<vmem>>, vector<2x128xbf16>
    tpu.vector_store %arg7[%c0_159, %c2048_160], %158 {strides = array<i32>} : memref<8x3200xbf16, #tpu.memory_space<vmem>>, vector<2x128xbf16>,
    %c20_161 = arith.constant 20 : index
    %c0_162 = arith.constant 0 : index
    %160 = vector.load %arg6[%c20_161, %c0_162] : memref<80x128xf32, #tpu.memory_space<vmem>>, vector<2x128xf32>
    %161 = arith.truncf %160 : vector<2x128xf32> to vector<2x128xbf16>
    %c0_163 = arith.constant 0 : index
    %c2176_164 = arith.constant 2176 : index
    %162 = vector.load %arg7[%c0_163, %c2176_164] : memref<8x3200xbf16, #tpu.memory_space<vmem>>, vector<2x128xbf16>
    tpu.vector_store %arg7[%c0_163, %c2176_164], %161 {strides = array<i32>} : memref<8x3200xbf16, #tpu.memory_space<vmem>>, vector<2x128xbf16>,
    %c21_165 = arith.constant 21 : index
    %c0_166 = arith.constant 0 : index
    %163 = vector.load %arg6[%c21_165, %c0_166] : memref<80x128xf32, #tpu.memory_space<vmem>>, vector<2x128xf32>
    %164 = arith.truncf %163 : vector<2x128xf32> to vector<2x128xbf16>
    %c0_167 = arith.constant 0 : index
    %c2304_168 = arith.constant 2304 : index
    %165 = vector.load %arg7[%c0_167, %c2304_168] : memref<8x3200xbf16, #tpu.memory_space<vmem>>, vector<2x128xbf16>
    tpu.vector_store %arg7[%c0_167, %c2304_168], %164 {strides = array<i32>} : memref<8x3200xbf16, #tpu.memory_space<vmem>>, vector<2x128xbf16>,
    %c22_169 = arith.constant 22 : index
    %c0_170 = arith.constant 0 : index
    %166 = vector.load %arg6[%c22_169, %c0_170] : memref<80x128xf32, #tpu.memory_space<vmem>>, vector<2x128xf32>
    %167 = arith.truncf %166 : vector<2x128xf32> to vector<2x128xbf16>
    %c0_171 = arith.constant 0 : index
    %c2432_172 = arith.constant 2432 : index
    %168 = vector.load %arg7[%c0_171, %c2432_172] : memref<8x3200xbf16, #tpu.memory_space<vmem>>, vector<2x128xbf16>
    tpu.vector_store %arg7[%c0_171, %c2432_172], %167 {strides = array<i32>} : memref<8x3200xbf16, #tpu.memory_space<vmem>>, vector<2x128xbf16>,
    %c24_173 = arith.constant 24 : index
    %c0_174 = arith.constant 0 : index
    %169 = vector.load %arg6[%c24_173, %c0_174] : memref<80x128xf32, #tpu.memory_space<vmem>>, vector<2x128xf32>
    %170 = arith.truncf %169 : vector<2x128xf32> to vector<2x128xbf16>
    %c0_175 = arith.constant 0 : index
    %c2560_176 = arith.constant 2560 : index
    %171 = vector.load %arg7[%c0_175, %c2560_176] : memref<8x3200xbf16, #tpu.memory_space<vmem>>, vector<2x128xbf16>
    tpu.vector_store %arg7[%c0_175, %c2560_176], %170 {strides = array<i32>} : memref<8x3200xbf16, #tpu.memory_space<vmem>>, vector<2x128xbf16>,
    %c25 = arith.constant 25 : index
    %c0_177 = arith.constant 0 : index
    %172 = vector.load %arg6[%c25, %c0_177] : memref<80x128xf32, #tpu.memory_space<vmem>>, vector<2x128xf32>
    %173 = arith.truncf %172 : vector<2x128xf32> to vector<2x128xbf16>
    %c0_178 = arith.constant 0 : index
    %c2688_179 = arith.constant 2688 : index
    %174 = vector.load %arg7[%c0_178, %c2688_179] : memref<8x3200xbf16, #tpu.memory_space<vmem>>, vector<2x128xbf16>
    tpu.vector_store %arg7[%c0_178, %c2688_179], %173 {strides = array<i32>} : memref<8x3200xbf16, #tpu.memory_space<vmem>>, vector<2x128xbf16>,
    %c26 = arith.constant 26 : index
    %c0_180 = arith.constant 0 : index
    %175 = vector.load %arg6[%c26, %c0_180] : memref<80x128xf32, #tpu.memory_space<vmem>>, vector<2x128xf32>
    %176 = arith.truncf %175 : vector<2x128xf32> to vector<2x128xbf16>
    %c0_181 = arith.constant 0 : index
    %c2816_182 = arith.constant 2816 : index
    %177 = vector.load %arg7[%c0_181, %c2816_182] : memref<8x3200xbf16, #tpu.memory_space<vmem>>, vector<2x128xbf16>
    tpu.vector_store %arg7[%c0_181, %c2816_182], %176 {strides = array<i32>} : memref<8x3200xbf16, #tpu.memory_space<vmem>>, vector<2x128xbf16>,
    %c27 = arith.constant 27 : index
    %c0_183 = arith.constant 0 : index
    %178 = vector.load %arg6[%c27, %c0_183] : memref<80x128xf32, #tpu.memory_space<vmem>>, vector<2x128xf32>
    %179 = arith.truncf %178 : vector<2x128xf32> to vector<2x128xbf16>
    %c0_184 = arith.constant 0 : index
    %c2944_185 = arith.constant 2944 : index
    %180 = vector.load %arg7[%c0_184, %c2944_185] : memref<8x3200xbf16, #tpu.memory_space<vmem>>, vector<2x128xbf16>
    tpu.vector_store %arg7[%c0_184, %c2944_185], %179 {strides = array<i32>} : memref<8x3200xbf16, #tpu.memory_space<vmem>>, vector<2x128xbf16>,
    %c28 = arith.constant 28 : index
    %c0_186 = arith.constant 0 : index
    %181 = vector.load %arg6[%c28, %c0_186] : memref<80x128xf32, #tpu.memory_space<vmem>>, vector<2x128xf32>
    %182 = arith.truncf %181 : vector<2x128xf32> to vector<2x128xbf16>
    %c0_187 = arith.constant 0 : index
    %c3072_188 = arith.constant 3072 : index
    %183 = vector.load %arg7[%c0_187, %c3072_188] : memref<8x3200xbf16, #tpu.memory_space<vmem>>, vector<2x128xbf16>
    tpu.vector_store %arg7[%c0_187, %c3072_188], %182 {strides = array<i32>} : memref<8x3200xbf16, #tpu.memory_space<vmem>>, vector<2x128xbf16>,
    %c6_189 = arith.constant 6 : index
    %c0_190 = arith.constant 0 : index
    %184 = vector.load %arg6[%c6_189, %c0_190] : memref<80x128xf32, #tpu.memory_space<vmem>>, vector<2x128xf32>
    %185 = arith.truncf %184 : vector<2x128xf32> to vector<2x128xbf16>
    %c2_191 = arith.constant 2 : index
    %c0_192 = arith.constant 0 : index
    %186 = vector.load %arg7[%c2_191, %c0_192] : memref<8x3200xbf16, #tpu.memory_space<vmem>>, vector<2x128xbf16>
    tpu.vector_store %arg7[%c2_191, %c0_192], %185 {strides = array<i32>} : memref<8x3200xbf16, #tpu.memory_space<vmem>>, vector<2x128xbf16>,
    %c7_193 = arith.constant 7 : index
    %c0_194 = arith.constant 0 : index
    %187 = vector.load %arg6[%c7_193, %c0_194] : memref<80x128xf32, #tpu.memory_space<vmem>>, vector<2x128xf32>
    %188 = arith.truncf %187 : vector<2x128xf32> to vector<2x128xbf16>
    %c2_195 = arith.constant 2 : index
    %c128_196 = arith.constant 128 : index
    %189 = vector.load %arg7[%c2_195, %c128_196] : memref<8x3200xbf16, #tpu.memory_space<vmem>>, vector<2x128xbf16>
    tpu.vector_store %arg7[%c2_195, %c128_196], %188 {strides = array<i32>} : memref<8x3200xbf16, #tpu.memory_space<vmem>>, vector<2x128xbf16>,
    %c8_197 = arith.constant 8 : index
    %c0_198 = arith.constant 0 : index
    %190 = vector.load %arg6[%c8_197, %c0_198] : memref<80x128xf32, #tpu.memory_space<vmem>>, vector<2x128xf32>
    %191 = arith.truncf %190 : vector<2x128xf32> to vector<2x128xbf16>
    %c2_199 = arith.constant 2 : index
    %c256_200 = arith.constant 256 : index
    %192 = vector.load %arg7[%c2_199, %c256_200] : memref<8x3200xbf16, #tpu.memory_space<vmem>>, vector<2x128xbf16>
    tpu.vector_store %arg7[%c2_199, %c256_200], %191 {strides = array<i32>} : memref<8x3200xbf16, #tpu.memory_space<vmem>>, vector<2x128xbf16>,
    %c9_201 = arith.constant 9 : index
    %c0_202 = arith.constant 0 : index
    %193 = vector.load %arg6[%c9_201, %c0_202] : memref<80x128xf32, #tpu.memory_space<vmem>>, vector<2x128xf32>
    %194 = arith.truncf %193 : vector<2x128xf32> to vector<2x128xbf16>
    %c2_203 = arith.constant 2 : index
    %c384_204 = arith.constant 384 : index
    %195 = vector.load %arg7[%c2_203, %c384_204] : memref<8x3200xbf16, #tpu.memory_space<vmem>>, vector<2x128xbf16>
    tpu.vector_store %arg7[%c2_203, %c384_204], %194 {strides = array<i32>} : memref<8x3200xbf16, #tpu.memory_space<vmem>>, vector<2x128xbf16>,
    %c10_205 = arith.constant 10 : index
    %c0_206 = arith.constant 0 : index
    %196 = vector.load %arg6[%c10_205, %c0_206] : memref<80x128xf32, #tpu.memory_space<vmem>>, vector<2x128xf32>
    %197 = arith.truncf %196 : vector<2x128xf32> to vector<2x128xbf16>
    %c2_207 = arith.constant 2 : index
    %c512_208 = arith.constant 512 : index
    %198 = vector.load %arg7[%c2_207, %c512_208] : memref<8x3200xbf16, #tpu.memory_space<vmem>>, vector<2x128xbf16>
    tpu.vector_store %arg7[%c2_207, %c512_208], %197 {strides = array<i32>} : memref<8x3200xbf16, #tpu.memory_space<vmem>>, vector<2x128xbf16>,
    %c12_209 = arith.constant 12 : index
    %c0_210 = arith.constant 0 : index
    %199 = vector.load %arg6[%c12_209, %c0_210] : memref<80x128xf32, #tpu.memory_space<vmem>>, vector<2x128xf32>
    %200 = arith.truncf %199 : vector<2x128xf32> to vector<2x128xbf16>
    %c2_211 = arith.constant 2 : index
    %c640_212 = arith.constant 640 : index
    %201 = vector.load %arg7[%c2_211, %c640_212] : memref<8x3200xbf16, #tpu.memory_space<vmem>>, vector<2x128xbf16>
    tpu.vector_store %arg7[%c2_211, %c640_212], %200 {strides = array<i32>} : memref<8x3200xbf16, #tpu.memory_space<vmem>>, vector<2x128xbf16>,
    %c13_213 = arith.constant 13 : index
    %c0_214 = arith.constant 0 : index
    %202 = vector.load %arg6[%c13_213, %c0_214] : memref<80x128xf32, #tpu.memory_space<vmem>>, vector<2x128xf32>
    %203 = arith.truncf %202 : vector<2x128xf32> to vector<2x128xbf16>
    %c2_215 = arith.constant 2 : index
    %c768_216 = arith.constant 768 : index
    %204 = vector.load %arg7[%c2_215, %c768_216] : memref<8x3200xbf16, #tpu.memory_space<vmem>>, vector<2x128xbf16>
    tpu.vector_store %arg7[%c2_215, %c768_216], %203 {strides = array<i32>} : memref<8x3200xbf16, #tpu.memory_space<vmem>>, vector<2x128xbf16>,
    %c14_217 = arith.constant 14 : index
    %c0_218 = arith.constant 0 : index
    %205 = vector.load %arg6[%c14_217, %c0_218] : memref<80x128xf32, #tpu.memory_space<vmem>>, vector<2x128xf32>
    %206 = arith.truncf %205 : vector<2x128xf32> to vector<2x128xbf16>
    %c2_219 = arith.constant 2 : index
    %c896_220 = arith.constant 896 : index
    %207 = vector.load %arg7[%c2_219, %c896_220] : memref<8x3200xbf16, #tpu.memory_space<vmem>>, vector<2x128xbf16>
    tpu.vector_store %arg7[%c2_219, %c896_220], %206 {strides = array<i32>} : memref<8x3200xbf16, #tpu.memory_space<vmem>>, vector<2x128xbf16>,
    %c15_221 = arith.constant 15 : index
    %c0_222 = arith.constant 0 : index
    %208 = vector.load %arg6[%c15_221, %c0_222] : memref<80x128xf32, #tpu.memory_space<vmem>>, vector<2x128xf32>
    %209 = arith.truncf %208 : vector<2x128xf32> to vector<2x128xbf16>
    %c2_223 = arith.constant 2 : index
    %c1024_224 = arith.constant 1024 : index
    %210 = vector.load %arg7[%c2_223, %c1024_224] : memref<8x3200xbf16, #tpu.memory_space<vmem>>, vector<2x128xbf16>
    tpu.vector_store %arg7[%c2_223, %c1024_224], %209 {strides = array<i32>} : memref<8x3200xbf16, #tpu.memory_space<vmem>>, vector<2x128xbf16>,
    %c16_225 = arith.constant 16 : index
    %c0_226 = arith.constant 0 : index
    %211 = vector.load %arg6[%c16_225, %c0_226] : memref<80x128xf32, #tpu.memory_space<vmem>>, vector<2x128xf32>
    %212 = arith.truncf %211 : vector<2x128xf32> to vector<2x128xbf16>
    %c2_227 = arith.constant 2 : index
    %c1152_228 = arith.constant 1152 : index
    %213 = vector.load %arg7[%c2_227, %c1152_228] : memref<8x3200xbf16, #tpu.memory_space<vmem>>, vector<2x128xbf16>
    tpu.vector_store %arg7[%c2_227, %c1152_228], %212 {strides = array<i32>} : memref<8x3200xbf16, #tpu.memory_space<vmem>>, vector<2x128xbf16>,
    %c18_229 = arith.constant 18 : index
    %c0_230 = arith.constant 0 : index
    %214 = vector.load %arg6[%c18_229, %c0_230] : memref<80x128xf32, #tpu.memory_space<vmem>>, vector<2x128xf32>
    %215 = arith.truncf %214 : vector<2x128xf32> to vector<2x128xbf16>
    %c2_231 = arith.constant 2 : index
    %c1280_232 = arith.constant 1280 : index
    %216 = vector.load %arg7[%c2_231, %c1280_232] : memref<8x3200xbf16, #tpu.memory_space<vmem>>, vector<2x128xbf16>
    tpu.vector_store %arg7[%c2_231, %c1280_232], %215 {strides = array<i32>} : memref<8x3200xbf16, #tpu.memory_space<vmem>>, vector<2x128xbf16>,
    %c19_233 = arith.constant 19 : index
    %c0_234 = arith.constant 0 : index
    %217 = vector.load %arg6[%c19_233, %c0_234] : memref<80x128xf32, #tpu.memory_space<vmem>>, vector<2x128xf32>
    %218 = arith.truncf %217 : vector<2x128xf32> to vector<2x128xbf16>
    %c2_235 = arith.constant 2 : index
    %c1408_236 = arith.constant 1408 : index
    %219 = vector.load %arg7[%c2_235, %c1408_236] : memref<8x3200xbf16, #tpu.memory_space<vmem>>, vector<2x128xbf16>
    tpu.vector_store %arg7[%c2_235, %c1408_236], %218 {strides = array<i32>} : memref<8x3200xbf16, #tpu.memory_space<vmem>>, vector<2x128xbf16>,
    %c20_237 = arith.constant 20 : index
    %c0_238 = arith.constant 0 : index
    %220 = vector.load %arg6[%c20_237, %c0_238] : memref<80x128xf32, #tpu.memory_space<vmem>>, vector<2x128xf32>
    %221 = arith.truncf %220 : vector<2x128xf32> to vector<2x128xbf16>
    %c2_239 = arith.constant 2 : index
    %c1536_240 = arith.constant 1536 : index
    %222 = vector.load %arg7[%c2_239, %c1536_240] : memref<8x3200xbf16, #tpu.memory_space<vmem>>, vector<2x128xbf16>
    tpu.vector_store %arg7[%c2_239, %c1536_240], %221 {strides = array<i32>} : memref<8x3200xbf16, #tpu.memory_space<vmem>>, vector<2x128xbf16>,
    %c21_241 = arith.constant 21 : index
    %c0_242 = arith.constant 0 : index
    %223 = vector.load %arg6[%c21_241, %c0_242] : memref<80x128xf32, #tpu.memory_space<vmem>>, vector<2x128xf32>
    %224 = arith.truncf %223 : vector<2x128xf32> to vector<2x128xbf16>
    %c2_243 = arith.constant 2 : index
    %c1664_244 = arith.constant 1664 : index
    %225 = vector.load %arg7[%c2_243, %c1664_244] : memref<8x3200xbf16, #tpu.memory_space<vmem>>, vector<2x128xbf16>
    tpu.vector_store %arg7[%c2_243, %c1664_244], %224 {strides = array<i32>} : memref<8x3200xbf16, #tpu.memory_space<vmem>>, vector<2x128xbf16>,
    %c22_245 = arith.constant 22 : index
    %c0_246 = arith.constant 0 : index
    %226 = vector.load %arg6[%c22_245, %c0_246] : memref<80x128xf32, #tpu.memory_space<vmem>>, vector<2x128xf32>
    %227 = arith.truncf %226 : vector<2x128xf32> to vector<2x128xbf16>
    %c2_247 = arith.constant 2 : index
    %c1792_248 = arith.constant 1792 : index
    %228 = vector.load %arg7[%c2_247, %c1792_248] : memref<8x3200xbf16, #tpu.memory_space<vmem>>, vector<2x128xbf16>
    tpu.vector_store %arg7[%c2_247, %c1792_248], %227 {strides = array<i32>} : memref<8x3200xbf16, #tpu.memory_space<vmem>>, vector<2x128xbf16>,
    %c24_249 = arith.constant 24 : index
    %c0_250 = arith.constant 0 : index
    %229 = vector.load %arg6[%c24_249, %c0_250] : memref<80x128xf32, #tpu.memory_space<vmem>>, vector<2x128xf32>
    %230 = arith.truncf %229 : vector<2x128xf32> to vector<2x128xbf16>
    %c2_251 = arith.constant 2 : index
    %c1920_252 = arith.constant 1920 : index
    %231 = vector.load %arg7[%c2_251, %c1920_252] : memref<8x3200xbf16, #tpu.memory_space<vmem>>, vector<2x128xbf16>
    tpu.vector_store %arg7[%c2_251, %c1920_252], %230 {strides = array<i32>} : memref<8x3200xbf16, #tpu.memory_space<vmem>>, vector<2x128xbf16>,
    %c25_253 = arith.constant 25 : index
    %c0_254 = arith.constant 0 : index
    %232 = vector.load %arg6[%c25_253, %c0_254] : memref<80x128xf32, #tpu.memory_space<vmem>>, vector<2x128xf32>
    %233 = arith.truncf %232 : vector<2x128xf32> to vector<2x128xbf16>
    %c2_255 = arith.constant 2 : index
    %c2048_256 = arith.constant 2048 : index
    %234 = vector.load %arg7[%c2_255, %c2048_256] : memref<8x3200xbf16, #tpu.memory_space<vmem>>, vector<2x128xbf16>
    tpu.vector_store %arg7[%c2_255, %c2048_256], %233 {strides = array<i32>} : memref<8x3200xbf16, #tpu.memory_space<vmem>>, vector<2x128xbf16>,
    %c26_257 = arith.constant 26 : index
    %c0_258 = arith.constant 0 : index
    %235 = vector.load %arg6[%c26_257, %c0_258] : memref<80x128xf32, #tpu.memory_space<vmem>>, vector<2x128xf32>
    %236 = arith.truncf %235 : vector<2x128xf32> to vector<2x128xbf16>
    %c2_259 = arith.constant 2 : index
    %c2176_260 = arith.constant 2176 : index
    %237 = vector.load %arg7[%c2_259, %c2176_260] : memref<8x3200xbf16, #tpu.memory_space<vmem>>, vector<2x128xbf16>
    tpu.vector_store %arg7[%c2_259, %c2176_260], %236 {strides = array<i32>} : memref<8x3200xbf16, #tpu.memory_space<vmem>>, vector<2x128xbf16>,
    %c27_261 = arith.constant 27 : index
    %c0_262 = arith.constant 0 : index
    %238 = vector.load %arg6[%c27_261, %c0_262] : memref<80x128xf32, #tpu.memory_space<vmem>>, vector<2x128xf32>
    %239 = arith.truncf %238 : vector<2x128xf32> to vector<2x128xbf16>
    %c2_263 = arith.constant 2 : index
    %c2304_264 = arith.constant 2304 : index
    %240 = vector.load %arg7[%c2_263, %c2304_264] : memref<8x3200xbf16, #tpu.memory_space<vmem>>, vector<2x128xbf16>
    tpu.vector_store %arg7[%c2_263, %c2304_264], %239 {strides = array<i32>} : memref<8x3200xbf16, #tpu.memory_space<vmem>>, vector<2x128xbf16>,
    %c28_265 = arith.constant 28 : index
    %c0_266 = arith.constant 0 : index
    %241 = vector.load %arg6[%c28_265, %c0_266] : memref<80x128xf32, #tpu.memory_space<vmem>>, vector<2x128xf32>
    %242 = arith.truncf %241 : vector<2x128xf32> to vector<2x128xbf16>
    %c2_267 = arith.constant 2 : index
    %c2432_268 = arith.constant 2432 : index
    %243 = vector.load %arg7[%c2_267, %c2432_268] : memref<8x3200xbf16, #tpu.memory_space<vmem>>, vector<2x128xbf16>
    tpu.vector_store %arg7[%c2_267, %c2432_268], %242 {strides = array<i32>} : memref<8x3200xbf16, #tpu.memory_space<vmem>>, vector<2x128xbf16>,
    %c30 = arith.constant 30 : index
    %c0_269 = arith.constant 0 : index
    %244 = vector.load %arg6[%c30, %c0_269] : memref<80x128xf32, #tpu.memory_space<vmem>>, vector<2x128xf32>
    %245 = arith.truncf %244 : vector<2x128xf32> to vector<2x128xbf16>
    %c2_270 = arith.constant 2 : index
    %c2560_271 = arith.constant 2560 : index
    %246 = vector.load %arg7[%c2_270, %c2560_271] : memref<8x3200xbf16, #tpu.memory_space<vmem>>, vector<2x128xbf16>
    tpu.vector_store %arg7[%c2_270, %c2560_271], %245 {strides = array<i32>} : memref<8x3200xbf16, #tpu.memory_space<vmem>>, vector<2x128xbf16>,
    %c31 = arith.constant 31 : index
    %c0_272 = arith.constant 0 : index
    %247 = vector.load %arg6[%c31, %c0_272] : memref<80x128xf32, #tpu.memory_space<vmem>>, vector<2x128xf32>
    %248 = arith.truncf %247 : vector<2x128xf32> to vector<2x128xbf16>
    %c2_273 = arith.constant 2 : index
    %c2688_274 = arith.constant 2688 : index
    %249 = vector.load %arg7[%c2_273, %c2688_274] : memref<8x3200xbf16, #tpu.memory_space<vmem>>, vector<2x128xbf16>
    tpu.vector_store %arg7[%c2_273, %c2688_274], %248 {strides = array<i32>} : memref<8x3200xbf16, #tpu.memory_space<vmem>>, vector<2x128xbf16>,
    %c32 = arith.constant 32 : index
    %c0_275 = arith.constant 0 : index
    %250 = vector.load %arg6[%c32, %c0_275] : memref<80x128xf32, #tpu.memory_space<vmem>>, vector<2x128xf32>
    %251 = arith.truncf %250 : vector<2x128xf32> to vector<2x128xbf16>
    %c2_276 = arith.constant 2 : index
    %c2816_277 = arith.constant 2816 : index
    %252 = vector.load %arg7[%c2_276, %c2816_277] : memref<8x3200xbf16, #tpu.memory_space<vmem>>, vector<2x128xbf16>
    tpu.vector_store %arg7[%c2_276, %c2816_277], %251 {strides = array<i32>} : memref<8x3200xbf16, #tpu.memory_space<vmem>>, vector<2x128xbf16>,
    %c33 = arith.constant 33 : index
    %c0_278 = arith.constant 0 : index
    %253 = vector.load %arg6[%c33, %c0_278] : memref<80x128xf32, #tpu.memory_space<vmem>>, vector<2x128xf32>
    %254 = arith.truncf %253 : vector<2x128xf32> to vector<2x128xbf16>
    %c2_279 = arith.constant 2 : index
    %c2944_280 = arith.constant 2944 : index
    %255 = vector.load %arg7[%c2_279, %c2944_280] : memref<8x3200xbf16, #tpu.memory_space<vmem>>, vector<2x128xbf16>
    tpu.vector_store %arg7[%c2_279, %c2944_280], %254 {strides = array<i32>} : memref<8x3200xbf16, #tpu.memory_space<vmem>>, vector<2x128xbf16>,
    %c34 = arith.constant 34 : index
    %c0_281 = arith.constant 0 : index
    %256 = vector.load %arg6[%c34, %c0_281] : memref<80x128xf32, #tpu.memory_space<vmem>>, vector<2x128xf32>
    %257 = arith.truncf %256 : vector<2x128xf32> to vector<2x128xbf16>
    %c2_282 = arith.constant 2 : index
    %c3072_283 = arith.constant 3072 : index
    %258 = vector.load %arg7[%c2_282, %c3072_283] : memref<8x3200xbf16, #tpu.memory_space<vmem>>, vector<2x128xbf16>
    tpu.vector_store %arg7[%c2_282, %c3072_283], %257 {strides = array<i32>} : memref<8x3200xbf16, #tpu.memory_space<vmem>>, vector<2x128xbf16>,
    %c36 = arith.constant 36 : index
    %c0_284 = arith.constant 0 : index
    %259 = vector.load %arg6[%c36, %c0_284] : memref<80x128xf32, #tpu.memory_space<vmem>>, vector<2x128xf32>
    %260 = arith.truncf %259 : vector<2x128xf32> to vector<2x128xbf16>
    %c4_285 = arith.constant 4 : index
    %c0_286 = arith.constant 0 : index
    %261 = vector.load %arg7[%c4_285, %c0_286] : memref<8x3200xbf16, #tpu.memory_space<vmem>>, vector<2x128xbf16>
    tpu.vector_store %arg7[%c4_285, %c0_286], %260 {strides = array<i32>} : memref<8x3200xbf16, #tpu.memory_space<vmem>>, vector<2x128xbf16>,
    %c37 = arith.constant 37 : index
    %c0_287 = arith.constant 0 : index
    %262 = vector.load %arg6[%c37, %c0_287] : memref<80x128xf32, #tpu.memory_space<vmem>>, vector<2x128xf32>
    %263 = arith.truncf %262 : vector<2x128xf32> to vector<2x128xbf16>
    %c4_288 = arith.constant 4 : index
    %c128_289 = arith.constant 128 : index
    %264 = vector.load %arg7[%c4_288, %c128_289] : memref<8x3200xbf16, #tpu.memory_space<vmem>>, vector<2x128xbf16>
    tpu.vector_store %arg7[%c4_288, %c128_289], %263 {strides = array<i32>} : memref<8x3200xbf16, #tpu.memory_space<vmem>>, vector<2x128xbf16>,
    %c38 = arith.constant 38 : index
    %c0_290 = arith.constant 0 : index
    %265 = vector.load %arg6[%c38, %c0_290] : memref<80x128xf32, #tpu.memory_space<vmem>>, vector<2x128xf32>
    %266 = arith.truncf %265 : vector<2x128xf32> to vector<2x128xbf16>
    %c4_291 = arith.constant 4 : index
    %c256_292 = arith.constant 256 : index
    %267 = vector.load %arg7[%c4_291, %c256_292] : memref<8x3200xbf16, #tpu.memory_space<vmem>>, vector<2x128xbf16>
    tpu.vector_store %arg7[%c4_291, %c256_292], %266 {strides = array<i32>} : memref<8x3200xbf16, #tpu.memory_space<vmem>>, vector<2x128xbf16>,
    %c39 = arith.constant 39 : index
    %c0_293 = arith.constant 0 : index
    %268 = vector.load %arg6[%c39, %c0_293] : memref<80x128xf32, #tpu.memory_space<vmem>>, vector<2x128xf32>
    %269 = arith.truncf %268 : vector<2x128xf32> to vector<2x128xbf16>
    %c4_294 = arith.constant 4 : index
    %c384_295 = arith.constant 384 : index
    %270 = vector.load %arg7[%c4_294, %c384_295] : memref<8x3200xbf16, #tpu.memory_space<vmem>>, vector<2x128xbf16>
    tpu.vector_store %arg7[%c4_294, %c384_295], %269 {strides = array<i32>} : memref<8x3200xbf16, #tpu.memory_space<vmem>>, vector<2x128xbf16>,
    %c40 = arith.constant 40 : index
    %c0_296 = arith.constant 0 : index
    %271 = vector.load %arg6[%c40, %c0_296] : memref<80x128xf32, #tpu.memory_space<vmem>>, vector<2x128xf32>
    %272 = arith.truncf %271 : vector<2x128xf32> to vector<2x128xbf16>
    %c4_297 = arith.constant 4 : index
    %c512_298 = arith.constant 512 : index
    %273 = vector.load %arg7[%c4_297, %c512_298] : memref<8x3200xbf16, #tpu.memory_space<vmem>>, vector<2x128xbf16>
    tpu.vector_store %arg7[%c4_297, %c512_298], %272 {strides = array<i32>} : memref<8x3200xbf16, #tpu.memory_space<vmem>>, vector<2x128xbf16>,
    %c42 = arith.constant 42 : index
    %c0_299 = arith.constant 0 : index
    %274 = vector.load %arg6[%c42, %c0_299] : memref<80x128xf32, #tpu.memory_space<vmem>>, vector<2x128xf32>
    %275 = arith.truncf %274 : vector<2x128xf32> to vector<2x128xbf16>
    %c4_300 = arith.constant 4 : index
    %c640_301 = arith.constant 640 : index
    %276 = vector.load %arg7[%c4_300, %c640_301] : memref<8x3200xbf16, #tpu.memory_space<vmem>>, vector<2x128xbf16>
    tpu.vector_store %arg7[%c4_300, %c640_301], %275 {strides = array<i32>} : memref<8x3200xbf16, #tpu.memory_space<vmem>>, vector<2x128xbf16>,
    %c43 = arith.constant 43 : index
    %c0_302 = arith.constant 0 : index
    %277 = vector.load %arg6[%c43, %c0_302] : memref<80x128xf32, #tpu.memory_space<vmem>>, vector<2x128xf32>
    %278 = arith.truncf %277 : vector<2x128xf32> to vector<2x128xbf16>
    %c4_303 = arith.constant 4 : index
    %c768_304 = arith.constant 768 : index
    %279 = vector.load %arg7[%c4_303, %c768_304] : memref<8x3200xbf16, #tpu.memory_space<vmem>>, vector<2x128xbf16>
    tpu.vector_store %arg7[%c4_303, %c768_304], %278 {strides = array<i32>} : memref<8x3200xbf16, #tpu.memory_space<vmem>>, vector<2x128xbf16>,
    %c44 = arith.constant 44 : index
    %c0_305 = arith.constant 0 : index
    %280 = vector.load %arg6[%c44, %c0_305] : memref<80x128xf32, #tpu.memory_space<vmem>>, vector<2x128xf32>
    %281 = arith.truncf %280 : vector<2x128xf32> to vector<2x128xbf16>
    %c4_306 = arith.constant 4 : index
    %c896_307 = arith.constant 896 : index
    %282 = vector.load %arg7[%c4_306, %c896_307] : memref<8x3200xbf16, #tpu.memory_space<vmem>>, vector<2x128xbf16>
    tpu.vector_store %arg7[%c4_306, %c896_307], %281 {strides = array<i32>} : memref<8x3200xbf16, #tpu.memory_space<vmem>>, vector<2x128xbf16>,
    %c45 = arith.constant 45 : index
    %c0_308 = arith.constant 0 : index
    %283 = vector.load %arg6[%c45, %c0_308] : memref<80x128xf32, #tpu.memory_space<vmem>>, vector<2x128xf32>
    %284 = arith.truncf %283 : vector<2x128xf32> to vector<2x128xbf16>
    %c4_309 = arith.constant 4 : index
    %c1024_310 = arith.constant 1024 : index
    %285 = vector.load %arg7[%c4_309, %c1024_310] : memref<8x3200xbf16, #tpu.memory_space<vmem>>, vector<2x128xbf16>
    tpu.vector_store %arg7[%c4_309, %c1024_310], %284 {strides = array<i32>} : memref<8x3200xbf16, #tpu.memory_space<vmem>>, vector<2x128xbf16>,
    %c46 = arith.constant 46 : index
    %c0_311 = arith.constant 0 : index
    %286 = vector.load %arg6[%c46, %c0_311] : memref<80x128xf32, #tpu.memory_space<vmem>>, vector<2x128xf32>
    %287 = arith.truncf %286 : vector<2x128xf32> to vector<2x128xbf16>
    %c4_312 = arith.constant 4 : index
    %c1152_313 = arith.constant 1152 : index
    %288 = vector.load %arg7[%c4_312, %c1152_313] : memref<8x3200xbf16, #tpu.memory_space<vmem>>, vector<2x128xbf16>
    tpu.vector_store %arg7[%c4_312, %c1152_313], %287 {strides = array<i32>} : memref<8x3200xbf16, #tpu.memory_space<vmem>>, vector<2x128xbf16>,
    %c48 = arith.constant 48 : index
    %c0_314 = arith.constant 0 : index
    %289 = vector.load %arg6[%c48, %c0_314] : memref<80x128xf32, #tpu.memory_space<vmem>>, vector<2x128xf32>
    %290 = arith.truncf %289 : vector<2x128xf32> to vector<2x128xbf16>
    %c4_315 = arith.constant 4 : index
    %c1280_316 = arith.constant 1280 : index
    %291 = vector.load %arg7[%c4_315, %c1280_316] : memref<8x3200xbf16, #tpu.memory_space<vmem>>, vector<2x128xbf16>
    tpu.vector_store %arg7[%c4_315, %c1280_316], %290 {strides = array<i32>} : memref<8x3200xbf16, #tpu.memory_space<vmem>>, vector<2x128xbf16>,
    %c49 = arith.constant 49 : index
    %c0_317 = arith.constant 0 : index
    %292 = vector.load %arg6[%c49, %c0_317] : memref<80x128xf32, #tpu.memory_space<vmem>>, vector<2x128xf32>
    %293 = arith.truncf %292 : vector<2x128xf32> to vector<2x128xbf16>
    %c4_318 = arith.constant 4 : index
    %c1408_319 = arith.constant 1408 : index
    %294 = vector.load %arg7[%c4_318, %c1408_319] : memref<8x3200xbf16, #tpu.memory_space<vmem>>, vector<2x128xbf16>
    tpu.vector_store %arg7[%c4_318, %c1408_319], %293 {strides = array<i32>} : memref<8x3200xbf16, #tpu.memory_space<vmem>>, vector<2x128xbf16>,
    %c50 = arith.constant 50 : index
    %c0_320 = arith.constant 0 : index
    %295 = vector.load %arg6[%c50, %c0_320] : memref<80x128xf32, #tpu.memory_space<vmem>>, vector<2x128xf32>
    %296 = arith.truncf %295 : vector<2x128xf32> to vector<2x128xbf16>
    %c4_321 = arith.constant 4 : index
    %c1536_322 = arith.constant 1536 : index
    %297 = vector.load %arg7[%c4_321, %c1536_322] : memref<8x3200xbf16, #tpu.memory_space<vmem>>, vector<2x128xbf16>
    tpu.vector_store %arg7[%c4_321, %c1536_322], %296 {strides = array<i32>} : memref<8x3200xbf16, #tpu.memory_space<vmem>>, vector<2x128xbf16>,
    %c51 = arith.constant 51 : index
    %c0_323 = arith.constant 0 : index
    %298 = vector.load %arg6[%c51, %c0_323] : memref<80x128xf32, #tpu.memory_space<vmem>>, vector<2x128xf32>
    %299 = arith.truncf %298 : vector<2x128xf32> to vector<2x128xbf16>
    %c4_324 = arith.constant 4 : index
    %c1664_325 = arith.constant 1664 : index
    %300 = vector.load %arg7[%c4_324, %c1664_325] : memref<8x3200xbf16, #tpu.memory_space<vmem>>, vector<2x128xbf16>
    tpu.vector_store %arg7[%c4_324, %c1664_325], %299 {strides = array<i32>} : memref<8x3200xbf16, #tpu.memory_space<vmem>>, vector<2x128xbf16>,
    %c52 = arith.constant 52 : index
    %c0_326 = arith.constant 0 : index
    %301 = vector.load %arg6[%c52, %c0_326] : memref<80x128xf32, #tpu.memory_space<vmem>>, vector<2x128xf32>
    %302 = arith.truncf %301 : vector<2x128xf32> to vector<2x128xbf16>
    %c4_327 = arith.constant 4 : index
    %c1792_328 = arith.constant 1792 : index
    %303 = vector.load %arg7[%c4_327, %c1792_328] : memref<8x3200xbf16, #tpu.memory_space<vmem>>, vector<2x128xbf16>
    tpu.vector_store %arg7[%c4_327, %c1792_328], %302 {strides = array<i32>} : memref<8x3200xbf16, #tpu.memory_space<vmem>>, vector<2x128xbf16>,
    %c54 = arith.constant 54 : index
    %c0_329 = arith.constant 0 : index
    %304 = vector.load %arg6[%c54, %c0_329] : memref<80x128xf32, #tpu.memory_space<vmem>>, vector<2x128xf32>
    %305 = arith.truncf %304 : vector<2x128xf32> to vector<2x128xbf16>
    %c4_330 = arith.constant 4 : index
    %c1920_331 = arith.constant 1920 : index
    %306 = vector.load %arg7[%c4_330, %c1920_331] : memref<8x3200xbf16, #tpu.memory_space<vmem>>, vector<2x128xbf16>
    tpu.vector_store %arg7[%c4_330, %c1920_331], %305 {strides = array<i32>} : memref<8x3200xbf16, #tpu.memory_space<vmem>>, vector<2x128xbf16>,
    %c55 = arith.constant 55 : index
    %c0_332 = arith.constant 0 : index
    %307 = vector.load %arg6[%c55, %c0_332] : memref<80x128xf32, #tpu.memory_space<vmem>>, vector<2x128xf32>
    %308 = arith.truncf %307 : vector<2x128xf32> to vector<2x128xbf16>
    %c4_333 = arith.constant 4 : index
    %c2048_334 = arith.constant 2048 : index
    %309 = vector.load %arg7[%c4_333, %c2048_334] : memref<8x3200xbf16, #tpu.memory_space<vmem>>, vector<2x128xbf16>
    tpu.vector_store %arg7[%c4_333, %c2048_334], %308 {strides = array<i32>} : memref<8x3200xbf16, #tpu.memory_space<vmem>>, vector<2x128xbf16>,
    %c56 = arith.constant 56 : index
    %c0_335 = arith.constant 0 : index
    %310 = vector.load %arg6[%c56, %c0_335] : memref<80x128xf32, #tpu.memory_space<vmem>>, vector<2x128xf32>
    %311 = arith.truncf %310 : vector<2x128xf32> to vector<2x128xbf16>
    %c4_336 = arith.constant 4 : index
    %c2176_337 = arith.constant 2176 : index
    %312 = vector.load %arg7[%c4_336, %c2176_337] : memref<8x3200xbf16, #tpu.memory_space<vmem>>, vector<2x128xbf16>
    tpu.vector_store %arg7[%c4_336, %c2176_337], %311 {strides = array<i32>} : memref<8x3200xbf16, #tpu.memory_space<vmem>>, vector<2x128xbf16>,
    %c57 = arith.constant 57 : index
    %c0_338 = arith.constant 0 : index
    %313 = vector.load %arg6[%c57, %c0_338] : memref<80x128xf32, #tpu.memory_space<vmem>>, vector<2x128xf32>
    %314 = arith.truncf %313 : vector<2x128xf32> to vector<2x128xbf16>
    %c4_339 = arith.constant 4 : index
    %c2304_340 = arith.constant 2304 : index
    %315 = vector.load %arg7[%c4_339, %c2304_340] : memref<8x3200xbf16, #tpu.memory_space<vmem>>, vector<2x128xbf16>
    tpu.vector_store %arg7[%c4_339, %c2304_340], %314 {strides = array<i32>} : memref<8x3200xbf16, #tpu.memory_space<vmem>>, vector<2x128xbf16>,
    %c58 = arith.constant 58 : index
    %c0_341 = arith.constant 0 : index
    %316 = vector.load %arg6[%c58, %c0_341] : memref<80x128xf32, #tpu.memory_space<vmem>>, vector<2x128xf32>
    %317 = arith.truncf %316 : vector<2x128xf32> to vector<2x128xbf16>
    %c4_342 = arith.constant 4 : index
    %c2432_343 = arith.constant 2432 : index
    %318 = vector.load %arg7[%c4_342, %c2432_343] : memref<8x3200xbf16, #tpu.memory_space<vmem>>, vector<2x128xbf16>
    tpu.vector_store %arg7[%c4_342, %c2432_343], %317 {strides = array<i32>} : memref<8x3200xbf16, #tpu.memory_space<vmem>>, vector<2x128xbf16>,
    %c60 = arith.constant 60 : index
    %c0_344 = arith.constant 0 : index
    %319 = vector.load %arg6[%c60, %c0_344] : memref<80x128xf32, #tpu.memory_space<vmem>>, vector<2x128xf32>
    %320 = arith.truncf %319 : vector<2x128xf32> to vector<2x128xbf16>
    %c4_345 = arith.constant 4 : index
    %c2560_346 = arith.constant 2560 : index
    %321 = vector.load %arg7[%c4_345, %c2560_346] : memref<8x3200xbf16, #tpu.memory_space<vmem>>, vector<2x128xbf16>
    tpu.vector_store %arg7[%c4_345, %c2560_346], %320 {strides = array<i32>} : memref<8x3200xbf16, #tpu.memory_space<vmem>>, vector<2x128xbf16>,
    %c61 = arith.constant 61 : index
    %c0_347 = arith.constant 0 : index
    %322 = vector.load %arg6[%c61, %c0_347] : memref<80x128xf32, #tpu.memory_space<vmem>>, vector<2x128xf32>
    %323 = arith.truncf %322 : vector<2x128xf32> to vector<2x128xbf16>
    %c4_348 = arith.constant 4 : index
    %c2688_349 = arith.constant 2688 : index
    %324 = vector.load %arg7[%c4_348, %c2688_349] : memref<8x3200xbf16, #tpu.memory_space<vmem>>, vector<2x128xbf16>
    tpu.vector_store %arg7[%c4_348, %c2688_349], %323 {strides = array<i32>} : memref<8x3200xbf16, #tpu.memory_space<vmem>>, vector<2x128xbf16>,
    %c62 = arith.constant 62 : index
    %c0_350 = arith.constant 0 : index
    %325 = vector.load %arg6[%c62, %c0_350] : memref<80x128xf32, #tpu.memory_space<vmem>>, vector<2x128xf32>
    %326 = arith.truncf %325 : vector<2x128xf32> to vector<2x128xbf16>
    %c4_351 = arith.constant 4 : index
    %c2816_352 = arith.constant 2816 : index
    %327 = vector.load %arg7[%c4_351, %c2816_352] : memref<8x3200xbf16, #tpu.memory_space<vmem>>, vector<2x128xbf16>
    tpu.vector_store %arg7[%c4_351, %c2816_352], %326 {strides = array<i32>} : memref<8x3200xbf16, #tpu.memory_space<vmem>>, vector<2x128xbf16>,
    %c63 = arith.constant 63 : index
    %c0_353 = arith.constant 0 : index
    %328 = vector.load %arg6[%c63, %c0_353] : memref<80x128xf32, #tpu.memory_space<vmem>>, vector<2x128xf32>
    %329 = arith.truncf %328 : vector<2x128xf32> to vector<2x128xbf16>
    %c4_354 = arith.constant 4 : index
    %c2944_355 = arith.constant 2944 : index
    %330 = vector.load %arg7[%c4_354, %c2944_355] : memref<8x3200xbf16, #tpu.memory_space<vmem>>, vector<2x128xbf16>
    tpu.vector_store %arg7[%c4_354, %c2944_355], %329 {strides = array<i32>} : memref<8x3200xbf16, #tpu.memory_space<vmem>>, vector<2x128xbf16>,
    %c64 = arith.constant 64 : index
    %c0_356 = arith.constant 0 : index
    %331 = vector.load %arg6[%c64, %c0_356] : memref<80x128xf32, #tpu.memory_space<vmem>>, vector<2x128xf32>
    %332 = arith.truncf %331 : vector<2x128xf32> to vector<2x128xbf16>
    %c4_357 = arith.constant 4 : index
    %c3072_358 = arith.constant 3072 : index
    %333 = vector.load %arg7[%c4_357, %c3072_358] : memref<8x3200xbf16, #tpu.memory_space<vmem>>, vector<2x128xbf16>
    tpu.vector_store %arg7[%c4_357, %c3072_358], %332 {strides = array<i32>} : memref<8x3200xbf16, #tpu.memory_space<vmem>>, vector<2x128xbf16>,
    %c42_359 = arith.constant 42 : index
    %c0_360 = arith.constant 0 : index
    %334 = vector.load %arg6[%c42_359, %c0_360] : memref<80x128xf32, #tpu.memory_space<vmem>>, vector<2x128xf32>
    %335 = arith.truncf %334 : vector<2x128xf32> to vector<2x128xbf16>
    %c6_361 = arith.constant 6 : index
    %c0_362 = arith.constant 0 : index
    %336 = vector.load %arg7[%c6_361, %c0_362] : memref<8x3200xbf16, #tpu.memory_space<vmem>>, vector<2x128xbf16>
    tpu.vector_store %arg7[%c6_361, %c0_362], %335 {strides = array<i32>} : memref<8x3200xbf16, #tpu.memory_space<vmem>>, vector<2x128xbf16>,
    %c43_363 = arith.constant 43 : index
    %c0_364 = arith.constant 0 : index
    %337 = vector.load %arg6[%c43_363, %c0_364] : memref<80x128xf32, #tpu.memory_space<vmem>>, vector<2x128xf32>
    %338 = arith.truncf %337 : vector<2x128xf32> to vector<2x128xbf16>
    %c6_365 = arith.constant 6 : index
    %c128_366 = arith.constant 128 : index
    %339 = vector.load %arg7[%c6_365, %c128_366] : memref<8x3200xbf16, #tpu.memory_space<vmem>>, vector<2x128xbf16>
    tpu.vector_store %arg7[%c6_365, %c128_366], %338 {strides = array<i32>} : memref<8x3200xbf16, #tpu.memory_space<vmem>>, vector<2x128xbf16>,
    %c44_367 = arith.constant 44 : index
    %c0_368 = arith.constant 0 : index
    %340 = vector.load %arg6[%c44_367, %c0_368] : memref<80x128xf32, #tpu.memory_space<vmem>>, vector<2x128xf32>
    %341 = arith.truncf %340 : vector<2x128xf32> to vector<2x128xbf16>
    %c6_369 = arith.constant 6 : index
    %c256_370 = arith.constant 256 : index
    %342 = vector.load %arg7[%c6_369, %c256_370] : memref<8x3200xbf16, #tpu.memory_space<vmem>>, vector<2x128xbf16>
    tpu.vector_store %arg7[%c6_369, %c256_370], %341 {strides = array<i32>} : memref<8x3200xbf16, #tpu.memory_space<vmem>>, vector<2x128xbf16>,
    %c45_371 = arith.constant 45 : index
    %c0_372 = arith.constant 0 : index
    %343 = vector.load %arg6[%c45_371, %c0_372] : memref<80x128xf32, #tpu.memory_space<vmem>>, vector<2x128xf32>
    %344 = arith.truncf %343 : vector<2x128xf32> to vector<2x128xbf16>
    %c6_373 = arith.constant 6 : index
    %c384_374 = arith.constant 384 : index
    %345 = vector.load %arg7[%c6_373, %c384_374] : memref<8x3200xbf16, #tpu.memory_space<vmem>>, vector<2x128xbf16>
    tpu.vector_store %arg7[%c6_373, %c384_374], %344 {strides = array<i32>} : memref<8x3200xbf16, #tpu.memory_space<vmem>>, vector<2x128xbf16>,
    %c46_375 = arith.constant 46 : index
    %c0_376 = arith.constant 0 : index
    %346 = vector.load %arg6[%c46_375, %c0_376] : memref<80x128xf32, #tpu.memory_space<vmem>>, vector<2x128xf32>
    %347 = arith.truncf %346 : vector<2x128xf32> to vector<2x128xbf16>
    %c6_377 = arith.constant 6 : index
    %c512_378 = arith.constant 512 : index
    %348 = vector.load %arg7[%c6_377, %c512_378] : memref<8x3200xbf16, #tpu.memory_space<vmem>>, vector<2x128xbf16>
    tpu.vector_store %arg7[%c6_377, %c512_378], %347 {strides = array<i32>} : memref<8x3200xbf16, #tpu.memory_space<vmem>>, vector<2x128xbf16>,
    %c48_379 = arith.constant 48 : index
    %c0_380 = arith.constant 0 : index
    %349 = vector.load %arg6[%c48_379, %c0_380] : memref<80x128xf32, #tpu.memory_space<vmem>>, vector<2x128xf32>
    %350 = arith.truncf %349 : vector<2x128xf32> to vector<2x128xbf16>
    %c6_381 = arith.constant 6 : index
    %c640_382 = arith.constant 640 : index
    %351 = vector.load %arg7[%c6_381, %c640_382] : memref<8x3200xbf16, #tpu.memory_space<vmem>>, vector<2x128xbf16>
    tpu.vector_store %arg7[%c6_381, %c640_382], %350 {strides = array<i32>} : memref<8x3200xbf16, #tpu.memory_space<vmem>>, vector<2x128xbf16>,
    %c49_383 = arith.constant 49 : index
    %c0_384 = arith.constant 0 : index
    %352 = vector.load %arg6[%c49_383, %c0_384] : memref<80x128xf32, #tpu.memory_space<vmem>>, vector<2x128xf32>
    %353 = arith.truncf %352 : vector<2x128xf32> to vector<2x128xbf16>
    %c6_385 = arith.constant 6 : index
    %c768_386 = arith.constant 768 : index
    %354 = vector.load %arg7[%c6_385, %c768_386] : memref<8x3200xbf16, #tpu.memory_space<vmem>>, vector<2x128xbf16>
    tpu.vector_store %arg7[%c6_385, %c768_386], %353 {strides = array<i32>} : memref<8x3200xbf16, #tpu.memory_space<vmem>>, vector<2x128xbf16>,
    %c50_387 = arith.constant 50 : index
    %c0_388 = arith.constant 0 : index
    %355 = vector.load %arg6[%c50_387, %c0_388] : memref<80x128xf32, #tpu.memory_space<vmem>>, vector<2x128xf32>
    %356 = arith.truncf %355 : vector<2x128xf32> to vector<2x128xbf16>
    %c6_389 = arith.constant 6 : index
    %c896_390 = arith.constant 896 : index
    %357 = vector.load %arg7[%c6_389, %c896_390] : memref<8x3200xbf16, #tpu.memory_space<vmem>>, vector<2x128xbf16>
    tpu.vector_store %arg7[%c6_389, %c896_390], %356 {strides = array<i32>} : memref<8x3200xbf16, #tpu.memory_space<vmem>>, vector<2x128xbf16>,
    %c51_391 = arith.constant 51 : index
    %c0_392 = arith.constant 0 : index
    %358 = vector.load %arg6[%c51_391, %c0_392] : memref<80x128xf32, #tpu.memory_space<vmem>>, vector<2x128xf32>
    %359 = arith.truncf %358 : vector<2x128xf32> to vector<2x128xbf16>
    %c6_393 = arith.constant 6 : index
    %c1024_394 = arith.constant 1024 : index
    %360 = vector.load %arg7[%c6_393, %c1024_394] : memref<8x3200xbf16, #tpu.memory_space<vmem>>, vector<2x128xbf16>
    tpu.vector_store %arg7[%c6_393, %c1024_394], %359 {strides = array<i32>} : memref<8x3200xbf16, #tpu.memory_space<vmem>>, vector<2x128xbf16>,
    %c52_395 = arith.constant 52 : index
    %c0_396 = arith.constant 0 : index
    %361 = vector.load %arg6[%c52_395, %c0_396] : memref<80x128xf32, #tpu.memory_space<vmem>>, vector<2x128xf32>
    %362 = arith.truncf %361 : vector<2x128xf32> to vector<2x128xbf16>
    %c6_397 = arith.constant 6 : index
    %c1152_398 = arith.constant 1152 : index
    %363 = vector.load %arg7[%c6_397, %c1152_398] : memref<8x3200xbf16, #tpu.memory_space<vmem>>, vector<2x128xbf16>
    tpu.vector_store %arg7[%c6_397, %c1152_398], %362 {strides = array<i32>} : memref<8x3200xbf16, #tpu.memory_space<vmem>>, vector<2x128xbf16>,
    %c54_399 = arith.constant 54 : index
    %c0_400 = arith.constant 0 : index
    %364 = vector.load %arg6[%c54_399, %c0_400] : memref<80x128xf32, #tpu.memory_space<vmem>>, vector<2x128xf32>
    %365 = arith.truncf %364 : vector<2x128xf32> to vector<2x128xbf16>
    %c6_401 = arith.constant 6 : index
    %c1280_402 = arith.constant 1280 : index
    %366 = vector.load %arg7[%c6_401, %c1280_402] : memref<8x3200xbf16, #tpu.memory_space<vmem>>, vector<2x128xbf16>
    tpu.vector_store %arg7[%c6_401, %c1280_402], %365 {strides = array<i32>} : memref<8x3200xbf16, #tpu.memory_space<vmem>>, vector<2x128xbf16>,
    %c55_403 = arith.constant 55 : index
    %c0_404 = arith.constant 0 : index
    %367 = vector.load %arg6[%c55_403, %c0_404] : memref<80x128xf32, #tpu.memory_space<vmem>>, vector<2x128xf32>
    %368 = arith.truncf %367 : vector<2x128xf32> to vector<2x128xbf16>
    %c6_405 = arith.constant 6 : index
    %c1408_406 = arith.constant 1408 : index
    %369 = vector.load %arg7[%c6_405, %c1408_406] : memref<8x3200xbf16, #tpu.memory_space<vmem>>, vector<2x128xbf16>
    tpu.vector_store %arg7[%c6_405, %c1408_406], %368 {strides = array<i32>} : memref<8x3200xbf16, #tpu.memory_space<vmem>>, vector<2x128xbf16>,
    %c56_407 = arith.constant 56 : index
    %c0_408 = arith.constant 0 : index
    %370 = vector.load %arg6[%c56_407, %c0_408] : memref<80x128xf32, #tpu.memory_space<vmem>>, vector<2x128xf32>
    %371 = arith.truncf %370 : vector<2x128xf32> to vector<2x128xbf16>
    %c6_409 = arith.constant 6 : index
    %c1536_410 = arith.constant 1536 : index
    %372 = vector.load %arg7[%c6_409, %c1536_410] : memref<8x3200xbf16, #tpu.memory_space<vmem>>, vector<2x128xbf16>
    tpu.vector_store %arg7[%c6_409, %c1536_410], %371 {strides = array<i32>} : memref<8x3200xbf16, #tpu.memory_space<vmem>>, vector<2x128xbf16>,
    %c57_411 = arith.constant 57 : index
    %c0_412 = arith.constant 0 : index
    %373 = vector.load %arg6[%c57_411, %c0_412] : memref<80x128xf32, #tpu.memory_space<vmem>>, vector<2x128xf32>
    %374 = arith.truncf %373 : vector<2x128xf32> to vector<2x128xbf16>
    %c6_413 = arith.constant 6 : index
    %c1664_414 = arith.constant 1664 : index
    %375 = vector.load %arg7[%c6_413, %c1664_414] : memref<8x3200xbf16, #tpu.memory_space<vmem>>, vector<2x128xbf16>
    tpu.vector_store %arg7[%c6_413, %c1664_414], %374 {strides = array<i32>} : memref<8x3200xbf16, #tpu.memory_space<vmem>>, vector<2x128xbf16>,
    %c58_415 = arith.constant 58 : index
    %c0_416 = arith.constant 0 : index
    %376 = vector.load %arg6[%c58_415, %c0_416] : memref<80x128xf32, #tpu.memory_space<vmem>>, vector<2x128xf32>
    %377 = arith.truncf %376 : vector<2x128xf32> to vector<2x128xbf16>
    %c6_417 = arith.constant 6 : index
    %c1792_418 = arith.constant 1792 : index
    %378 = vector.load %arg7[%c6_417, %c1792_418] : memref<8x3200xbf16, #tpu.memory_space<vmem>>, vector<2x128xbf16>
    tpu.vector_store %arg7[%c6_417, %c1792_418], %377 {strides = array<i32>} : memref<8x3200xbf16, #tpu.memory_space<vmem>>, vector<2x128xbf16>,
    %c60_419 = arith.constant 60 : index
    %c0_420 = arith.constant 0 : index
    %379 = vector.load %arg6[%c60_419, %c0_420] : memref<80x128xf32, #tpu.memory_space<vmem>>, vector<2x128xf32>
    %380 = arith.truncf %379 : vector<2x128xf32> to vector<2x128xbf16>
    %c6_421 = arith.constant 6 : index
    %c1920_422 = arith.constant 1920 : index
    %381 = vector.load %arg7[%c6_421, %c1920_422] : memref<8x3200xbf16, #tpu.memory_space<vmem>>, vector<2x128xbf16>
    tpu.vector_store %arg7[%c6_421, %c1920_422], %380 {strides = array<i32>} : memref<8x3200xbf16, #tpu.memory_space<vmem>>, vector<2x128xbf16>,
    %c61_423 = arith.constant 61 : index
    %c0_424 = arith.constant 0 : index
    %382 = vector.load %arg6[%c61_423, %c0_424] : memref<80x128xf32, #tpu.memory_space<vmem>>, vector<2x128xf32>
    %383 = arith.truncf %382 : vector<2x128xf32> to vector<2x128xbf16>
    %c6_425 = arith.constant 6 : index
    %c2048_426 = arith.constant 2048 : index
    %384 = vector.load %arg7[%c6_425, %c2048_426] : memref<8x3200xbf16, #tpu.memory_space<vmem>>, vector<2x128xbf16>
    tpu.vector_store %arg7[%c6_425, %c2048_426], %383 {strides = array<i32>} : memref<8x3200xbf16, #tpu.memory_space<vmem>>, vector<2x128xbf16>,
    %c62_427 = arith.constant 62 : index
    %c0_428 = arith.constant 0 : index
    %385 = vector.load %arg6[%c62_427, %c0_428] : memref<80x128xf32, #tpu.memory_space<vmem>>, vector<2x128xf32>
    %386 = arith.truncf %385 : vector<2x128xf32> to vector<2x128xbf16>
    %c6_429 = arith.constant 6 : index
    %c2176_430 = arith.constant 2176 : index
    %387 = vector.load %arg7[%c6_429, %c2176_430] : memref<8x3200xbf16, #tpu.memory_space<vmem>>, vector<2x128xbf16>
    tpu.vector_store %arg7[%c6_429, %c2176_430], %386 {strides = array<i32>} : memref<8x3200xbf16, #tpu.memory_space<vmem>>, vector<2x128xbf16>,
    %c63_431 = arith.constant 63 : index
    %c0_432 = arith.constant 0 : index
    %388 = vector.load %arg6[%c63_431, %c0_432] : memref<80x128xf32, #tpu.memory_space<vmem>>, vector<2x128xf32>
    %389 = arith.truncf %388 : vector<2x128xf32> to vector<2x128xbf16>
    %c6_433 = arith.constant 6 : index
    %c2304_434 = arith.constant 2304 : index
    %390 = vector.load %arg7[%c6_433, %c2304_434] : memref<8x3200xbf16, #tpu.memory_space<vmem>>, vector<2x128xbf16>
    tpu.vector_store %arg7[%c6_433, %c2304_434], %389 {strides = array<i32>} : memref<8x3200xbf16, #tpu.memory_space<vmem>>, vector<2x128xbf16>,
    %c64_435 = arith.constant 64 : index
    %c0_436 = arith.constant 0 : index
    %391 = vector.load %arg6[%c64_435, %c0_436] : memref<80x128xf32, #tpu.memory_space<vmem>>, vector<2x128xf32>
    %392 = arith.truncf %391 : vector<2x128xf32> to vector<2x128xbf16>
    %c6_437 = arith.constant 6 : index
    %c2432_438 = arith.constant 2432 : index
    %393 = vector.load %arg7[%c6_437, %c2432_438] : memref<8x3200xbf16, #tpu.memory_space<vmem>>, vector<2x128xbf16>
    tpu.vector_store %arg7[%c6_437, %c2432_438], %392 {strides = array<i32>} : memref<8x3200xbf16, #tpu.memory_space<vmem>>, vector<2x128xbf16>,
    %c66 = arith.constant 66 : index
    %c0_439 = arith.constant 0 : index
    %394 = vector.load %arg6[%c66, %c0_439] : memref<80x128xf32, #tpu.memory_space<vmem>>, vector<2x128xf32>
    %395 = arith.truncf %394 : vector<2x128xf32> to vector<2x128xbf16>
    %c6_440 = arith.constant 6 : index
    %c2560_441 = arith.constant 2560 : index
    %396 = vector.load %arg7[%c6_440, %c2560_441] : memref<8x3200xbf16, #tpu.memory_space<vmem>>, vector<2x128xbf16>
    tpu.vector_store %arg7[%c6_440, %c2560_441], %395 {strides = array<i32>} : memref<8x3200xbf16, #tpu.memory_space<vmem>>, vector<2x128xbf16>,
    %c67 = arith.constant 67 : index
    %c0_442 = arith.constant 0 : index
    %397 = vector.load %arg6[%c67, %c0_442] : memref<80x128xf32, #tpu.memory_space<vmem>>, vector<2x128xf32>
    %398 = arith.truncf %397 : vector<2x128xf32> to vector<2x128xbf16>
    %c6_443 = arith.constant 6 : index
    %c2688_444 = arith.constant 2688 : index
    %399 = vector.load %arg7[%c6_443, %c2688_444] : memref<8x3200xbf16, #tpu.memory_space<vmem>>, vector<2x128xbf16>
    tpu.vector_store %arg7[%c6_443, %c2688_444], %398 {strides = array<i32>} : memref<8x3200xbf16, #tpu.memory_space<vmem>>, vector<2x128xbf16>,
    %c68 = arith.constant 68 : index
    %c0_445 = arith.constant 0 : index
    %400 = vector.load %arg6[%c68, %c0_445] : memref<80x128xf32, #tpu.memory_space<vmem>>, vector<2x128xf32>
    %401 = arith.truncf %400 : vector<2x128xf32> to vector<2x128xbf16>
    %c6_446 = arith.constant 6 : index
    %c2816_447 = arith.constant 2816 : index
    %402 = vector.load %arg7[%c6_446, %c2816_447] : memref<8x3200xbf16, #tpu.memory_space<vmem>>, vector<2x128xbf16>
    tpu.vector_store %arg7[%c6_446, %c2816_447], %401 {strides = array<i32>} : memref<8x3200xbf16, #tpu.memory_space<vmem>>, vector<2x128xbf16>,
    %c69 = arith.constant 69 : index
    %c0_448 = arith.constant 0 : index
    %403 = vector.load %arg6[%c69, %c0_448] : memref<80x128xf32, #tpu.memory_space<vmem>>, vector<2x128xf32>
    %404 = arith.truncf %403 : vector<2x128xf32> to vector<2x128xbf16>
    %c6_449 = arith.constant 6 : index
    %c2944_450 = arith.constant 2944 : index
    %405 = vector.load %arg7[%c6_449, %c2944_450] : memref<8x3200xbf16, #tpu.memory_space<vmem>>, vector<2x128xbf16>
    tpu.vector_store %arg7[%c6_449, %c2944_450], %404 {strides = array<i32>} : memref<8x3200xbf16, #tpu.memory_space<vmem>>, vector<2x128xbf16>,
    %c70 = arith.constant 70 : index
    %c0_451 = arith.constant 0 : index
    %406 = vector.load %arg6[%c70, %c0_451] : memref<80x128xf32, #tpu.memory_space<vmem>>, vector<2x128xf32>
    %407 = arith.truncf %406 : vector<2x128xf32> to vector<2x128xbf16>
    %c6_452 = arith.constant 6 : index
    %c3072_453 = arith.constant 3072 : index
    %408 = vector.load %arg7[%c6_452, %c3072_453] : memref<8x3200xbf16, #tpu.memory_space<vmem>>, vector<2x128xbf16>
    tpu.vector_store %arg7[%c6_452, %c3072_453], %407 {strides = array<i32>} : memref<8x3200xbf16, #tpu.memory_space<vmem>>, vector<2x128xbf16>,
    %c0_454 = arith.constant 0 : index
    %c0_455 = arith.constant 0 : index
    %409 = vector.load %arg7[%c0_454, %c0_455] : memref<8x3200xbf16, #tpu.memory_space<vmem>>, vector<8x3200xbf16>
    %c0_456 = arith.constant 0 : index
    %c0_457 = arith.constant 0 : index
    %410 = vector.load %arg8[%c0_456, %c0_457] : memref<3200x128xbf16, #tpu.memory_space<vmem>>, vector<3200x128xbf16>
    %cst_458 = arith.constant dense<0.000000e+00> : vector<8x128xf32>
    %411 = tpu.matmul %409, %410, %cst_458 {dimension_numbers = #tpu.dot_dimension_numbers<[1], [0], [0], [1], [0, 0, 1, 1], [], []>} : vector<8x3200xbf16>, vector<3200x128xbf16>, vector<8x128xf32> -> vector<8x128xf32>
    %cst_459 = arith.constant dense<0.000000e+00> : vector<128xf32>
    %412 = vector.multi_reduction <add>, %411, %cst_459 [0] : vector<8x128xf32> to vector<128xf32>
    %413 = vector.shape_cast %412 : vector<128xf32> to vector<1x128xf32>
    %cst_460 = arith.constant 1.250000e-01 : f32
    %414 = vector.broadcast %cst_460 : f32 to vector<1x128xf32>
    %415 = arith.mulf %413, %414 : vector<1x128xf32>
    %416 = vector.broadcast %415 : vector<1x128xf32> to vector<8x128xf32>
    %417 = arith.subf %411, %416 : vector<8x128xf32>
    %418 = arith.mulf %417, %417 : vector<8x128xf32>
    %cst_461 = arith.constant dense<0.000000e+00> : vector<128xf32>
    %419 = vector.multi_reduction <add>, %418, %cst_461 [0] : vector<8x128xf32> to vector<128xf32>
    %420 = vector.shape_cast %419 : vector<128xf32> to vector<1x128xf32>
    %cst_462 = arith.constant 1.250000e-01 : f32
    %421 = vector.broadcast %cst_462 : f32 to vector<1x128xf32>
    %422 = arith.mulf %420, %421 : vector<1x128xf32>
    %c0_463 = arith.constant 0 : index
    %c0_464 = arith.constant 0 : index
    %423 = vector.load %arg4[%c0_463, %c0_464] : memref<2x128xf32, #tpu.memory_space<vmem>>, vector<2x128xf32>
    %424 = vector.extract_strided_slice %423 {offsets = [0, 0], sizes = [1, 128], strides = [1, 1]} : vector<2x128xf32> to vector<1x128xf32>
    %cst_465 = arith.constant 9.99999974E-6 : f32
    %425 = vector.broadcast %cst_465 : f32 to vector<1x128xf32>
    %426 = arith.addf %422, %425 : vector<1x128xf32>
    %427 = math.rsqrt %426 : vector<1x128xf32>
    %428 = arith.mulf %424, %427 : vector<1x128xf32>
    %429 = vector.broadcast %428 : vector<1x128xf32> to vector<8x128xf32>
    %430 = arith.mulf %417, %429 : vector<8x128xf32>
    %431 = vector.extract_strided_slice %423 {offsets = [1, 0], sizes = [1, 128], strides = [1, 1]} : vector<2x128xf32> to vector<1x128xf32>
    %432 = vector.broadcast %431 : vector<1x128xf32> to vector<8x128xf32>
    %433 = arith.addf %430, %432 : vector<8x128xf32>
    %c0_466 = arith.constant 0 : index
    %c0_467 = arith.constant 0 : index
    %434 = vector.load %arg5[%c0_466, %c0_467] : memref<8x128xf32, #tpu.memory_space<vmem>>, vector<8x128xf32>
    tpu.vector_store %arg5[%c0_466, %c0_467], %433 {strides = array<i32>} : memref<8x128xf32, #tpu.memory_space<vmem>>, vector<8x128xf32>,
    return
  }
}

</mosaic_0001>

<llo_original>
// kernel: model_forward.1
$region0: #{model_forward.1}
  #allocation0 [shape = 'u32[]', space=smem, size = 0x4, offset = 0x4, fixed_abs, tag = 'smem constant byte address 0x4 - core index']
  #allocation1 [shape = 'u32[144,128]{1,0:T(1,128)}', space=vmem, size = 0x12000, scoped, tag = 'internal scratch']
  #allocation2 [shape = 'f32[80,128]{1,0:T(8,128)}', space=vmem, size = 0xa000, scoped, tag = 'scratch operand']
  #allocation3 [shape = 'bf16[8,3200]{1,0:T(8,128)(2,1)}', space=vmem, size = 0xc800, scoped, tag = 'scratch operand']
  #allocation4 [shape = 'bf16[3200,128]{1,0:T(16,128)(2,1)}', space=vmem, size = 0xc8000, scoped, tag = 'scratch operand']
  %s0 = inlined_call_operand.vmem [shape: bf16[80,512], index: 0, kind: input, shape index: {}]
  %s1 = inlined_call_operand.vmem [shape: bf16[512,128], index: 1, kind: input, shape index: {}]
  %s2 = inlined_call_operand.vmem [shape: f32[2,128], index: 2, kind: input, shape index: {}]
  %s3 = inlined_call_operand.vmem [shape: bf16[25,20,128], index: 3, kind: input, shape index: {}]
  %s4 = inlined_call_operand.vmem [shape: f32[2,128], index: 4, kind: input, shape index: {}]
  %s5 = inlined_call_operand.hbm [shape: f32[8,128], index: 5, kind: output, shape index: {}]
  %s6 = sld [smem:[#allocation0]]
  $region30: #{model_forward.1} parent=0
    _
  %s8 = ssub.s32 1, %s6
  %s9 = scalar_select 0, %s8, %s6
  $region1: #{model_forward.1} parent=0
    #allocation5 [shape = 'u8[4096]{0}', space=vmem, size = 0x1000, scoped, tag = 'output window, operand 0, single buffered']
    #allocation6 [shape = 's32[1]{0}', space=sflag, size = 0x4, scoped, tag = 'scoped memory for model_forward.1']
    %10 = vsyncpa [#allocation6], 0
    // Predicated region
    $region2: #{model_forward.1} parent=1 // pred_check
      _
    $region3: #{model_forward.1} parent=1 // pred_check_branch
      %12 = sbr.rel (0) target = $region5
    $region4: #{model_forward.1} parent=1 // pred_region
      _
    $region5: #{model_forward.1} parent=1 // pred_fallthru
      _
    // Predicated region
    $region6: #{model_forward.1} parent=1 // pred_check
      _
    $region7: #{model_forward.1} parent=1 // pred_check_branch
      %14 = sbr.rel (0) target = $region9
    $region8: #{model_forward.1} parent=1 // pred_region
      _
    $region9: #{model_forward.1} parent=1 // pred_fallthru
      _
    // Predicated region
    $region10: #{model_forward.1} parent=1 // pred_check
      _
    $region11: #{model_forward.1} parent=1 // pred_check_branch
      %16 = sbr.rel (0) target = $region13
    $region12: #{model_forward.1} parent=1 // pred_region
      _
    $region13: #{model_forward.1} parent=1 // pred_fallthru
      _
    // Predicated region
    $region14: #{model_forward.1} parent=1 // pred_check
      _
    $region15: #{model_forward.1} parent=1 // pred_check_branch
      %18 = sbr.rel (0) target = $region17
    $region16: #{model_forward.1} parent=1 // pred_region
      _
    $region17: #{model_forward.1} parent=1 // pred_fallthru
      _
    // Predicated region
    $region18: #{model_forward.1} parent=1 // pred_check
      _
    $region19: #{model_forward.1} parent=1 // pred_check_branch
      %20 = sbr.rel (0) target = $region21
    $region20: #{model_forward.1} parent=1 // pred_region
      _
    $region21: #{model_forward.1} parent=1 // pred_fallthru
      _
    %22 = vst [vmem:[#allocation4] sm:$0xff] 0
    %23 = vst [vmem:[#allocation4 + $0x8] sm:$0xff] 0
    %24 = vst [vmem:[#allocation4 + $0x10] sm:$0xff] 0
    %25 = vst [vmem:[#allocation4 + $0x18] sm:$0xff] 0
    %26 = vst [vmem:[#allocation4 + $0x20] sm:$0xff] 0
    %27 = vst [vmem:[#allocation4 + $0x28] sm:$0xff] 0
    %28 = vst [vmem:[#allocation4 + $0x30] sm:$0xff] 0
    %29 = vst [vmem:[#allocation4 + $0x38] sm:$0xff] 0
    %30 = vst [vmem:[#allocation4 + $0x40] sm:$0xff] 0
    %31 = vst [vmem:[#allocation4 + $0x48] sm:$0xff] 0
    %32 = vst [vmem:[#allocation4 + $0x50] sm:$0xff] 0
    %33 = vst [vmem:[#allocation4 + $0x58] sm:$0xff] 0
    %34 = vst [vmem:[#allocation4 + $0x60] sm:$0xff] 0
    %35 = vst [vmem:[#allocation4 + $0x68] sm:$0xff] 0
    %36 = vst [vmem:[#allocation4 + $0x70] sm:$0xff] 0
    %37 = vst [vmem:[#allocation4 + $0x78] sm:$0xff] 0
    %38 = vst [vmem:[#allocation4 + $0x80] sm:$0xff] 0
    %39 = vst [vmem:[#allocation4 + $0x88] sm:$0xff] 0
    %40 = vst [vmem:[#allocation4 + $0x90] sm:$0xff] 0
    %41 = vst [vmem:[#allocation4 + $0x98] sm:$0xff] 0
    %42 = vst [vmem:[#allocation4 + $0xa0] sm:$0xff] 0
    %43 = vst [vmem:[#allocation4 + $0xa8] sm:$0xff] 0
    %44 = vst [vmem:[#allocation4 + $0xb0] sm:$0xff] 0
    %45 = vst [vmem:[#allocation4 + $0xb8] sm:$0xff] 0
    %46 = vst [vmem:[#allocation4 + $0xc0] sm:$0xff] 0
    %47 = vst [vmem:[#allocation4 + $0xc8] sm:$0xff] 0
    %48 = vst [vmem:[#allocation4 + $0xd0] sm:$0xff] 0
    %49 = vst [vmem:[#allocation4 + $0xd8] sm:$0xff] 0
    %50 = vst [vmem:[#allocation4 + $0xe0] sm:$0xff] 0
    %51 = vst [vmem:[#allocation4 + $0xe8] sm:$0xff] 0
    %52 = vst [vmem:[#allocation4 + $0xf0] sm:$0xff] 0
    %53 = vst [vmem:[#allocation4 + $0xf8] sm:$0xff] 0
    %54 = vst [vmem:[#allocation4 + $0x100] sm:$0xff] 0
    %55 = vst [vmem:[#allocation4 + $0x108] sm:$0xff] 0
    %56 = vst [vmem:[#allocation4 + $0x110] sm:$0xff] 0
    %57 = vst [vmem:[#allocation4 + $0x118] sm:$0xff] 0
    %58 = vst [vmem:[#allocation4 + $0x120] sm:$0xff] 0
    %59 = vst [vmem:[#allocation4 + $0x128] sm:$0xff] 0
    %60 = vst [vmem:[#allocation4 + $0x130] sm:$0xff] 0
    %61 = vst [vmem:[#allocation4 + $0x138] sm:$0xff] 0
    %62 = vst [vmem:[#allocation4 + $0x140] sm:$0xff] 0
    %63 = vst [vmem:[#allocation4 + $0x148] sm:$0xff] 0
    %64 = vst [vmem:[#allocation4 + $0x150] sm:$0xff] 0
    %65 = vst [vmem:[#allocation4 + $0x158] sm:$0xff] 0
    %66 = vst [vmem:[#allocation4 + $0x160] sm:$0xff] 0
    %67 = vst [vmem:[#allocation4 + $0x168] sm:$0xff] 0
    %68 = vst [vmem:[#allocation4 + $0x170] sm:$0xff] 0
    %69 = vst [vmem:[#allocation4 + $0x178] sm:$0xff] 0
    %70 = vst [vmem:[#allocation4 + $0x180] sm:$0xff] 0
    %71 = vst [vmem:[#allocation4 + $0x188] sm:$0xff] 0
    %72 = vst [vmem:[#allocation4 + $0x190] sm:$0xff] 0
    %73 = vst [vmem:[#allocation4 + $0x198] sm:$0xff] 0
    %74 = vst [vmem:[#allocation4 + $0x1a0] sm:$0xff] 0
    %75 = vst [vmem:[#allocation4 + $0x1a8] sm:$0xff] 0
    %76 = vst [vmem:[#allocation4 + $0x1b0] sm:$0xff] 0
    %77 = vst [vmem:[#allocation4 + $0x1b8] sm:$0xff] 0
    %78 = vst [vmem:[#allocation4 + $0x1c0] sm:$0xff] 0
    %79 = vst [vmem:[#allocation4 + $0x1c8] sm:$0xff] 0
    %80 = vst [vmem:[#allocation4 + $0x1d0] sm:$0xff] 0
    %81 = vst [vmem:[#allocation4 + $0x1d8] sm:$0xff] 0
    %82 = vst [vmem:[#allocation4 + $0x1e0] sm:$0xff] 0
    %83 = vst [vmem:[#allocation4 + $0x1e8] sm:$0xff] 0
    %84 = vst [vmem:[#allocation4 + $0x1f0] sm:$0xff] 0
    %85 = vst [vmem:[#allocation4 + $0x1f8] sm:$0xff] 0
    %86 = vst [vmem:[#allocation4 + $0x200] sm:$0xff] 0
    %87 = vst [vmem:[#allocation4 + $0x208] sm:$0xff] 0
    %88 = vst [vmem:[#allocation4 + $0x210] sm:$0xff] 0
    %89 = vst [vmem:[#allocation4 + $0x218] sm:$0xff] 0
    %90 = vst [vmem:[#allocation4 + $0x220] sm:$0xff] 0
    %91 = vst [vmem:[#allocation4 + $0x228] sm:$0xff] 0
    %92 = vst [vmem:[#allocation4 + $0x230] sm:$0xff] 0
    %93 = vst [vmem:[#allocation4 + $0x238] sm:$0xff] 0
    %94 = vst [vmem:[#allocation4 + $0x240] sm:$0xff] 0
    %95 = vst [vmem:[#allocation4 + $0x248] sm:$0xff] 0
    %96 = vst [vmem:[#allocation4 + $0x250] sm:$0xff] 0
    %97 = vst [vmem:[#allocation4 + $0x258] sm:$0xff] 0
    %98 = vst [vmem:[#allocation4 + $0x260] sm:$0xff] 0
    %99 = vst [vmem:[#allocation4 + $0x268] sm:$0xff] 0
    %100 = vst [vmem:[#allocation4 + $0x270] sm:$0xff] 0
    %101 = vst [vmem:[#allocation4 + $0x278] sm:$0xff] 0
    %102 = vst [vmem:[#allocation4 + $0x280] sm:$0xff] 0
    %103 = vst [vmem:[#allocation4 + $0x288] sm:$0xff] 0
    %104 = vst [vmem:[#allocation4 + $0x290] sm:$0xff] 0
    %105 = vst [vmem:[#allocation4 + $0x298] sm:$0xff] 0
    %106 = vst [vmem:[#allocation4 + $0x2a0] sm:$0xff] 0
    %107 = vst [vmem:[#allocation4 + $0x2a8] sm:$0xff] 0
    %108 = vst [vmem:[#allocation4 + $0x2b0] sm:$0xff] 0
    %109 = vst [vmem:[#allocation4 + $0x2b8] sm:$0xff] 0
    %110 = vst [vmem:[#allocation4 + $0x2c0] sm:$0xff] 0
    %111 = vst [vmem:[#allocation4 + $0x2c8] sm:$0xff] 0
    %112 = vst [vmem:[#allocation4 + $0x2d0] sm:$0xff] 0
    %113 = vst [vmem:[#allocation4 + $0x2d8] sm:$0xff] 0
    %114 = vst [vmem:[#allocation4 + $0x2e0] sm:$0xff] 0
    %115 = vst [vmem:[#allocation4 + $0x2e8] sm:$0xff] 0
    %116 = vst [vmem:[#allocation4 + $0x2f0] sm:$0xff] 0
    %117 = vst [vmem:[#allocation4 + $0x2f8] sm:$0xff] 0
    %118 = vst [vmem:[#allocation4 + $0x300] sm:$0xff] 0
    %119 = vst [vmem:[#allocation4 + $0x308] sm:$0xff] 0
    %120 = vst [vmem:[#allocation4 + $0x310] sm:$0xff] 0
    %121 = vst [vmem:[#allocation4 + $0x318] sm:$0xff] 0
    %122 = vst [vmem:[#allocation4 + $0x320] sm:$0xff] 0
    %123 = vst [vmem:[#allocation4 + $0x328] sm:$0xff] 0
    %124 = vst [vmem:[#allocation4 + $0x330] sm:$0xff] 0
    %125 = vst [vmem:[#allocation4 + $0x338] sm:$0xff] 0
    %126 = vst [vmem:[#allocation4 + $0x340] sm:$0xff] 0
    %127 = vst [vmem:[#allocation4 + $0x348] sm:$0xff] 0
    %128 = vst [vmem:[#allocation4 + $0x350] sm:$0xff] 0
    %129 = vst [vmem:[#allocation4 + $0x358] sm:$0xff] 0
    %130 = vst [vmem:[#allocation4 + $0x360] sm:$0xff] 0
    %131 = vst [vmem:[#allocation4 + $0x368] sm:$0xff] 0
    %132 = vst [vmem:[#allocation4 + $0x370] sm:$0xff] 0
    %133 = vst [vmem:[#allocation4 + $0x378] sm:$0xff] 0
    %134 = vst [vmem:[#allocation4 + $0x380] sm:$0xff] 0
    %135 = vst [vmem:[#allocation4 + $0x388] sm:$0xff] 0
    %136 = vst [vmem:[#allocation4 + $0x390] sm:$0xff] 0
    %137 = vst [vmem:[#allocation4 + $0x398] sm:$0xff] 0
    %138 = vst [vmem:[#allocation4 + $0x3a0] sm:$0xff] 0
    %139 = vst [vmem:[#allocation4 + $0x3a8] sm:$0xff] 0
    %140 = vst [vmem:[#allocation4 + $0x3b0] sm:$0xff] 0
    %141 = vst [vmem:[#allocation4 + $0x3b8] sm:$0xff] 0
    %142 = vst [vmem:[#allocation4 + $0x3c0] sm:$0xff] 0
    %143 = vst [vmem:[#allocation4 + $0x3c8] sm:$0xff] 0
    %144 = vst [vmem:[#allocation4 + $0x3d0] sm:$0xff] 0
    %145 = vst [vmem:[#allocation4 + $0x3d8] sm:$0xff] 0
    %146 = vst [vmem:[#allocation4 + $0x3e0] sm:$0xff] 0
    %147 = vst [vmem:[#allocation4 + $0x3e8] sm:$0xff] 0
    %148 = vst [vmem:[#allocation4 + $0x3f0] sm:$0xff] 0
    %149 = vst [vmem:[#allocation4 + $0x3f8] sm:$0xff] 0
    %150 = vst [vmem:[#allocation4 + $0x400] sm:$0xff] 0
    %151 = vst [vmem:[#allocation4 + $0x408] sm:$0xff] 0
    %152 = vst [vmem:[#allocation4 + $0x410] sm:$0xff] 0
    %153 = vst [vmem:[#allocation4 + $0x418] sm:$0xff] 0
    %154 = vst [vmem:[#allocation4 + $0x420] sm:$0xff] 0
    %155 = vst [vmem:[#allocation4 + $0x428] sm:$0xff] 0
    %156 = vst [vmem:[#allocation4 + $0x430] sm:$0xff] 0
    %157 = vst [vmem:[#allocation4 + $0x438] sm:$0xff] 0
    %158 = vst [vmem:[#allocation4 + $0x440] sm:$0xff] 0
    %159 = vst [vmem:[#allocation4 + $0x448] sm:$0xff] 0
    %160 = vst [vmem:[#allocation4 + $0x450] sm:$0xff] 0
    %161 = vst [vmem:[#allocation4 + $0x458] sm:$0xff] 0
    %162 = vst [vmem:[#allocation4 + $0x460] sm:$0xff] 0
    %163 = vst [vmem:[#allocation4 + $0x468] sm:$0xff] 0
    %164 = vst [vmem:[#allocation4 + $0x470] sm:$0xff] 0
    %165 = vst [vmem:[#allocation4 + $0x478] sm:$0xff] 0
    %166 = vst [vmem:[#allocation4 + $0x480] sm:$0xff] 0
    %167 = vst [vmem:[#allocation4 + $0x488] sm:$0xff] 0
    %168 = vst [vmem:[#allocation4 + $0x490] sm:$0xff] 0
    %169 = vst [vmem:[#allocation4 + $0x498] sm:$0xff] 0
    %170 = vst [vmem:[#allocation4 + $0x4a0] sm:$0xff] 0
    %171 = vst [vmem:[#allocation4 + $0x4a8] sm:$0xff] 0
    %172 = vst [vmem:[#allocation4 + $0x4b0] sm:$0xff] 0
    %173 = vst [vmem:[#allocation4 + $0x4b8] sm:$0xff] 0
    %174 = vst [vmem:[#allocation4 + $0x4c0] sm:$0xff] 0
    %175 = vst [vmem:[#allocation4 + $0x4c8] sm:$0xff] 0
    %176 = vst [vmem:[#allocation4 + $0x4d0] sm:$0xff] 0
    %177 = vst [vmem:[#allocation4 + $0x4d8] sm:$0xff] 0
    %178 = vst [vmem:[#allocation4 + $0x4e0] sm:$0xff] 0
    %179 = vst [vmem:[#allocation4 + $0x4e8] sm:$0xff] 0
    %180 = vst [vmem:[#allocation4 + $0x4f0] sm:$0xff] 0
    %181 = vst [vmem:[#allocation4 + $0x4f8] sm:$0xff] 0
    %182 = vst [vmem:[#allocation4 + $0x500] sm:$0xff] 0
    %183 = vst [vmem:[#allocation4 + $0x508] sm:$0xff] 0
    %184 = vst [vmem:[#allocation4 + $0x510] sm:$0xff] 0
    %185 = vst [vmem:[#allocation4 + $0x518] sm:$0xff] 0
    %186 = vst [vmem:[#allocation4 + $0x520] sm:$0xff] 0
    %187 = vst [vmem:[#allocation4 + $0x528] sm:$0xff] 0
    %188 = vst [vmem:[#allocation4 + $0x530] sm:$0xff] 0
    %189 = vst [vmem:[#allocation4 + $0x538] sm:$0xff] 0
    %190 = vst [vmem:[#allocation4 + $0x540] sm:$0xff] 0
    %191 = vst [vmem:[#allocation4 + $0x548] sm:$0xff] 0
    %192 = vst [vmem:[#allocation4 + $0x550] sm:$0xff] 0
    %193 = vst [vmem:[#allocation4 + $0x558] sm:$0xff] 0
    %194 = vst [vmem:[#allocation4 + $0x560] sm:$0xff] 0
    %195 = vst [vmem:[#allocation4 + $0x568] sm:$0xff] 0
    %196 = vst [vmem:[#allocation4 + $0x570] sm:$0xff] 0
    %197 = vst [vmem:[#allocation4 + $0x578] sm:$0xff] 0
    %198 = vst [vmem:[#allocation4 + $0x580] sm:$0xff] 0
    %199 = vst [vmem:[#allocation4 + $0x588] sm:$0xff] 0
    %200 = vst [vmem:[#allocation4 + $0x590] sm:$0xff] 0
    %201 = vst [vmem:[#allocation4 + $0x598] sm:$0xff] 0
    %202 = vst [vmem:[#allocation4 + $0x5a0] sm:$0xff] 0
    %203 = vst [vmem:[#allocation4 + $0x5a8] sm:$0xff] 0
    %204 = vst [vmem:[#allocation4 + $0x5b0] sm:$0xff] 0
    %205 = vst [vmem:[#allocation4 + $0x5b8] sm:$0xff] 0
    %206 = vst [vmem:[#allocation4 + $0x5c0] sm:$0xff] 0
    %207 = vst [vmem:[#allocation4 + $0x5c8] sm:$0xff] 0
    %208 = vst [vmem:[#allocation4 + $0x5d0] sm:$0xff] 0
    %209 = vst [vmem:[#allocation4 + $0x5d8] sm:$0xff] 0
    %210 = vst [vmem:[#allocation4 + $0x5e0] sm:$0xff] 0
    %211 = vst [vmem:[#allocation4 + $0x5e8] sm:$0xff] 0
    %212 = vst [vmem:[#allocation4 + $0x5f0] sm:$0xff] 0
    %213 = vst [vmem:[#allocation4 + $0x5f8] sm:$0xff] 0
    %214 = vst [vmem:[#allocation4 + $0x600] sm:$0xff] 0
    %215 = vst [vmem:[#allocation4 + $0x608] sm:$0xff] 0
    %216 = vst [vmem:[#allocation4 + $0x610] sm:$0xff] 0
    %217 = vst [vmem:[#allocation4 + $0x618] sm:$0xff] 0
    %218 = vst [vmem:[#allocation4 + $0x620] sm:$0xff] 0
    %219 = vst [vmem:[#allocation4 + $0x628] sm:$0xff] 0
    %220 = vst [vmem:[#allocation4 + $0x630] sm:$0xff] 0
    %221 = vst [vmem:[#allocation4 + $0x638] sm:$0xff] 0
    %v222 = vld [vmem:[%s3] sm:$0xf]
    %v223 = vld [vmem:[%s3 + $0x4] sm:$0xf]
    %v224 = vld [vmem:[%s3 + $0x8] sm:$0x3]
    %v228 = vunpack.c.l.b16 %v222
    %v229 = vunpack.c.l.b16 %v223
    %v230 = vunpack.c.l.b16 %v224
    %v231 = vpack.c.b16 %v229, %v228
    %v232 = vpack.c.b16 %v230, %v230
    %235 = vst [vmem:[#allocation4] sm:$0xff] %v231
    %236 = vst [vmem:[#allocation4 + $0x8] sm:$0x3] %v232
    %s237 = scalar_lea.vmem %s3, 12
    %v238 = vld [vmem:[%s237] sm:$0xf]
    %v239 = vld [vmem:[%s237 + $0x4] sm:$0xf]
    %v240 = vld [vmem:[%s237 + $0x8] sm:$0x3]
    %v244 = vunpack.c.l.b16 %v238
    %v245 = vunpack.c.l.b16 %v239
    %v246 = vunpack.c.l.b16 %v240
    %v247 = vpack.c.b16 %v245, %v244
    %v248 = vpack.c.b16 %v246, %v246
    %251 = vst [vmem:[#allocation4 + $0x40] sm:$0xff] %v247
    %252 = vst [vmem:[#allocation4 + $0x48] sm:$0x3] %v248
    %s253 = scalar_lea.vmem %s3, 24
    %v254 = vld [vmem:[%s253] sm:$0xf]
    %v255 = vld [vmem:[%s253 + $0x4] sm:$0xf]
    %v256 = vld [vmem:[%s253 + $0x8] sm:$0x3]
    %v260 = vunpack.c.l.b16 %v254
    %v261 = vunpack.c.l.b16 %v255
    %v262 = vunpack.c.l.b16 %v256
    %v263 = vpack.c.b16 %v261, %v260
    %v264 = vpack.c.b16 %v262, %v262
    %267 = vst [vmem:[#allocation4 + $0x80] sm:$0xff] %v263
    %268 = vst [vmem:[#allocation4 + $0x88] sm:$0x3] %v264
    %s269 = scalar_lea.vmem %s3, 36
    %v270 = vld [vmem:[%s269] sm:$0xf]
    %v271 = vld [vmem:[%s269 + $0x4] sm:$0xf]
    %v272 = vld [vmem:[%s269 + $0x8] sm:$0x3]
    %v276 = vunpack.c.l.b16 %v270
    %v277 = vunpack.c.l.b16 %v271
    %v278 = vunpack.c.l.b16 %v272
    %v279 = vpack.c.b16 %v277, %v276
    %v280 = vpack.c.b16 %v278, %v278
    %283 = vst [vmem:[#allocation4 + $0xc0] sm:$0xff] %v279
    %284 = vst [vmem:[#allocation4 + $0xc8] sm:$0x3] %v280
    %s285 = scalar_lea.vmem %s3, 48
    %v286 = vld [vmem:[%s285] sm:$0xf]
    %v287 = vld [vmem:[%s285 + $0x4] sm:$0xf]
    %v288 = vld [vmem:[%s285 + $0x8] sm:$0x3]
    %v292 = vunpack.c.l.b16 %v286
    %v293 = vunpack.c.l.b16 %v287
    %v294 = vunpack.c.l.b16 %v288
    %v295 = vpack.c.b16 %v293, %v292
    %v296 = vpack.c.b16 %v294, %v294
    %299 = vst [vmem:[#allocation4 + $0x100] sm:$0xff] %v295
    %300 = vst [vmem:[#allocation4 + $0x108] sm:$0x3] %v296
    %s301 = scalar_lea.vmem %s3, 60
    %v302 = vld [vmem:[%s301] sm:$0xf]
    %v303 = vld [vmem:[%s301 + $0x4] sm:$0xf]
    %v304 = vld [vmem:[%s301 + $0x8] sm:$0x3]
    %v308 = vunpack.c.l.b16 %v302
    %v309 = vunpack.c.l.b16 %v303
    %v310 = vunpack.c.l.b16 %v304
    %v311 = vpack.c.b16 %v309, %v308
    %v312 = vpack.c.b16 %v310, %v310
    %315 = vst [vmem:[#allocation4 + $0x140] sm:$0xff] %v311
    %316 = vst [vmem:[#allocation4 + $0x148] sm:$0x3] %v312
    %s317 = scalar_lea.vmem %s3, 72
    %v318 = vld [vmem:[%s317] sm:$0xf]
    %v319 = vld [vmem:[%s317 + $0x4] sm:$0xf]
    %v320 = vld [vmem:[%s317 + $0x8] sm:$0x3]
    %v324 = vunpack.c.l.b16 %v318
    %v325 = vunpack.c.l.b16 %v319
    %v326 = vunpack.c.l.b16 %v320
    %v327 = vpack.c.b16 %v325, %v324
    %v328 = vpack.c.b16 %v326, %v326
    %331 = vst [vmem:[#allocation4 + $0x180] sm:$0xff] %v327
    %332 = vst [vmem:[#allocation4 + $0x188] sm:$0x3] %v328
    %s333 = scalar_lea.vmem %s3, 84
    %v334 = vld [vmem:[%s333] sm:$0xf]
    %v335 = vld [vmem:[%s333 + $0x4] sm:$0xf]
    %v336 = vld [vmem:[%s333 + $0x8] sm:$0x3]
    %v340 = vunpack.c.l.b16 %v334
    %v341 = vunpack.c.l.b16 %v335
    %v342 = vunpack.c.l.b16 %v336
    %v343 = vpack.c.b16 %v341, %v340
    %v344 = vpack.c.b16 %v342, %v342
    %347 = vst [vmem:[#allocation4 + $0x1c0] sm:$0xff] %v343
    %348 = vst [vmem:[#allocation4 + $0x1c8] sm:$0x3] %v344
    %s349 = scalar_lea.vmem %s3, 96
    %v350 = vld [vmem:[%s349] sm:$0xf]
    %v351 = vld [vmem:[%s349 + $0x4] sm:$0xf]
    %v352 = vld [vmem:[%s349 + $0x8] sm:$0x3]
    %v356 = vunpack.c.l.b16 %v350
    %v357 = vunpack.c.l.b16 %v351
    %v358 = vunpack.c.l.b16 %v352
    %v359 = vpack.c.b16 %v357, %v356
    %v360 = vpack.c.b16 %v358, %v358
    %363 = vst [vmem:[#allocation4 + $0x200] sm:$0xff] %v359
    %364 = vst [vmem:[#allocation4 + $0x208] sm:$0x3] %v360
    %s365 = scalar_lea.vmem %s3, 108
    %v366 = vld [vmem:[%s365] sm:$0xf]
    %v367 = vld [vmem:[%s365 + $0x4] sm:$0xf]
    %v368 = vld [vmem:[%s365 + $0x8] sm:$0x3]
    %v372 = vunpack.c.l.b16 %v366
    %v373 = vunpack.c.l.b16 %v367
    %v374 = vunpack.c.l.b16 %v368
    %v375 = vpack.c.b16 %v373, %v372
    %v376 = vpack.c.b16 %v374, %v374
    %379 = vst [vmem:[#allocation4 + $0x240] sm:$0xff] %v375
    %380 = vst [vmem:[#allocation4 + $0x248] sm:$0x3] %v376
    %s381 = scalar_lea.vmem %s3, 120
    %v382 = vld [vmem:[%s381] sm:$0xf]
    %v383 = vld [vmem:[%s381 + $0x4] sm:$0xf]
    %v384 = vld [vmem:[%s381 + $0x8] sm:$0x3]
    %v388 = vunpack.c.l.b16 %v382
    %v389 = vunpack.c.l.b16 %v383
    %v390 = vunpack.c.l.b16 %v384
    %v391 = vpack.c.b16 %v389, %v388
    %v392 = vpack.c.b16 %v390, %v390
    %395 = vst [vmem:[#allocation4 + $0x280] sm:$0xff] %v391
    %396 = vst [vmem:[#allocation4 + $0x288] sm:$0x3] %v392
    %s397 = scalar_lea.vmem %s3, 132
    %v398 = vld [vmem:[%s397] sm:$0xf]
    %v399 = vld [vmem:[%s397 + $0x4] sm:$0xf]
    %v400 = vld [vmem:[%s397 + $0x8] sm:$0x3]
    %v404 = vunpack.c.l.b16 %v398
    %v405 = vunpack.c.l.b16 %v399
    %v406 = vunpack.c.l.b16 %v400
    %v407 = vpack.c.b16 %v405, %v404
    %v408 = vpack.c.b16 %v406, %v406
    %411 = vst [vmem:[#allocation4 + $0x2c0] sm:$0xff] %v407
    %412 = vst [vmem:[#allocation4 + $0x2c8] sm:$0x3] %v408
    %s413 = scalar_lea.vmem %s3, 144
    %v414 = vld [vmem:[%s413] sm:$0xf]
    %v415 = vld [vmem:[%s413 + $0x4] sm:$0xf]
    %v416 = vld [vmem:[%s413 + $0x8] sm:$0x3]
    %v420 = vunpack.c.l.b16 %v414
    %v421 = vunpack.c.l.b16 %v415
    %v422 = vunpack.c.l.b16 %v416
    %v423 = vpack.c.b16 %v421, %v420
    %v424 = vpack.c.b16 %v422, %v422
    %427 = vst [vmem:[#allocation4 + $0x300] sm:$0xff] %v423
    %428 = vst [vmem:[#allocation4 + $0x308] sm:$0x3] %v424
    %s429 = scalar_lea.vmem %s3, 156
    %v430 = vld [vmem:[%s429] sm:$0xf]
    %v431 = vld [vmem:[%s429 + $0x4] sm:$0xf]
    %v432 = vld [vmem:[%s429 + $0x8] sm:$0x3]
    %v436 = vunpack.c.l.b16 %v430
    %v437 = vunpack.c.l.b16 %v431
    %v438 = vunpack.c.l.b16 %v432
    %v439 = vpack.c.b16 %v437, %v436
    %v440 = vpack.c.b16 %v438, %v438
    %443 = vst [vmem:[#allocation4 + $0x340] sm:$0xff] %v439
    %444 = vst [vmem:[#allocation4 + $0x348] sm:$0x3] %v440
    %s445 = scalar_lea.vmem %s3, 168
    %v446 = vld [vmem:[%s445] sm:$0xf]
    %v447 = vld [vmem:[%s445 + $0x4] sm:$0xf]
    %v448 = vld [vmem:[%s445 + $0x8] sm:$0x3]
    %v452 = vunpack.c.l.b16 %v446
    %v453 = vunpack.c.l.b16 %v447
    %v454 = vunpack.c.l.b16 %v448
    %v455 = vpack.c.b16 %v453, %v452
    %v456 = vpack.c.b16 %v454, %v454
    %459 = vst [vmem:[#allocation4 + $0x380] sm:$0xff] %v455
    %460 = vst [vmem:[#allocation4 + $0x388] sm:$0x3] %v456
    %s461 = scalar_lea.vmem %s3, 180
    %v462 = vld [vmem:[%s461] sm:$0xf]
    %v463 = vld [vmem:[%s461 + $0x4] sm:$0xf]
    %v464 = vld [vmem:[%s461 + $0x8] sm:$0x3]
    %v468 = vunpack.c.l.b16 %v462
    %v469 = vunpack.c.l.b16 %v463
    %v470 = vunpack.c.l.b16 %v464
    %v471 = vpack.c.b16 %v469, %v468
    %v472 = vpack.c.b16 %v470, %v470
    %475 = vst [vmem:[#allocation4 + $0x3c0] sm:$0xff] %v471
    %476 = vst [vmem:[#allocation4 + $0x3c8] sm:$0x3] %v472
    %s477 = scalar_lea.vmem %s3, 192
    %v478 = vld [vmem:[%s477] sm:$0xf]
    %v479 = vld [vmem:[%s477 + $0x4] sm:$0xf]
    %v480 = vld [vmem:[%s477 + $0x8] sm:$0x3]
    %v484 = vunpack.c.l.b16 %v478
    %v485 = vunpack.c.l.b16 %v479
    %v486 = vunpack.c.l.b16 %v480
    %v487 = vpack.c.b16 %v485, %v484
    %v488 = vpack.c.b16 %v486, %v486
    %491 = vst [vmem:[#allocation4 + $0x400] sm:$0xff] %v487
    %492 = vst [vmem:[#allocation4 + $0x408] sm:$0x3] %v488
    %s493 = scalar_lea.vmem %s3, 204
    %v494 = vld [vmem:[%s493] sm:$0xf]
    %v495 = vld [vmem:[%s493 + $0x4] sm:$0xf]
    %v496 = vld [vmem:[%s493 + $0x8] sm:$0x3]
    %v500 = vunpack.c.l.b16 %v494
    %v501 = vunpack.c.l.b16 %v495
    %v502 = vunpack.c.l.b16 %v496
    %v503 = vpack.c.b16 %v501, %v500
    %v504 = vpack.c.b16 %v502, %v502
    %507 = vst [vmem:[#allocation4 + $0x440] sm:$0xff] %v503
    %508 = vst [vmem:[#allocation4 + $0x448] sm:$0x3] %v504
    %s509 = scalar_lea.vmem %s3, 216
    %v510 = vld [vmem:[%s509] sm:$0xf]
    %v511 = vld [vmem:[%s509 + $0x4] sm:$0xf]
    %v512 = vld [vmem:[%s509 + $0x8] sm:$0x3]
    %v516 = vunpack.c.l.b16 %v510
    %v517 = vunpack.c.l.b16 %v511
    %v518 = vunpack.c.l.b16 %v512
    %v519 = vpack.c.b16 %v517, %v516
    %v520 = vpack.c.b16 %v518, %v518
    %523 = vst [vmem:[#allocation4 + $0x480] sm:$0xff] %v519
    %524 = vst [vmem:[#allocation4 + $0x488] sm:$0x3] %v520
    %s525 = scalar_lea.vmem %s3, 228
    %v526 = vld [vmem:[%s525] sm:$0xf]
    %v527 = vld [vmem:[%s525 + $0x4] sm:$0xf]
    %v528 = vld [vmem:[%s525 + $0x8] sm:$0x3]
    %v532 = vunpack.c.l.b16 %v526
    %v533 = vunpack.c.l.b16 %v527
    %v534 = vunpack.c.l.b16 %v528
    %v535 = vpack.c.b16 %v533, %v532
    %v536 = vpack.c.b16 %v534, %v534
    %539 = vst [vmem:[#allocation4 + $0x4c0] sm:$0xff] %v535
    %540 = vst [vmem:[#allocation4 + $0x4c8] sm:$0x3] %v536
    %s541 = scalar_lea.vmem %s3, 240
    %v542 = vld [vmem:[%s541] sm:$0xf]
    %v543 = vld [vmem:[%s541 + $0x4] sm:$0xf]
    %v544 = vld [vmem:[%s541 + $0x8] sm:$0x3]
    %v548 = vunpack.c.l.b16 %v542
    %v549 = vunpack.c.l.b16 %v543
    %v550 = vunpack.c.l.b16 %v544
    %v551 = vpack.c.b16 %v549, %v548
    %v552 = vpack.c.b16 %v550, %v550
    %555 = vst [vmem:[#allocation4 + $0x500] sm:$0xff] %v551
    %556 = vst [vmem:[#allocation4 + $0x508] sm:$0x3] %v552
    %s557 = scalar_lea.vmem %s3, 252
    %v558 = vld [vmem:[%s557] sm:$0xf]
    %v559 = vld [vmem:[%s557 + $0x4] sm:$0xf]
    %v560 = vld [vmem:[%s557 + $0x8] sm:$0x3]
    %v564 = vunpack.c.l.b16 %v558
    %v565 = vunpack.c.l.b16 %v559
    %v566 = vunpack.c.l.b16 %v560
    %v567 = vpack.c.b16 %v565, %v564
    %v568 = vpack.c.b16 %v566, %v566
    %571 = vst [vmem:[#allocation4 + $0x540] sm:$0xff] %v567
    %572 = vst [vmem:[#allocation4 + $0x548] sm:$0x3] %v568
    %s573 = scalar_lea.vmem %s3, 264
    %v574 = vld [vmem:[%s573] sm:$0xf]
    %v575 = vld [vmem:[%s573 + $0x4] sm:$0xf]
    %v576 = vld [vmem:[%s573 + $0x8] sm:$0x3]
    %v580 = vunpack.c.l.b16 %v574
    %v581 = vunpack.c.l.b16 %v575
    %v582 = vunpack.c.l.b16 %v576
    %v583 = vpack.c.b16 %v581, %v580
    %v584 = vpack.c.b16 %v582, %v582
    %587 = vst [vmem:[#allocation4 + $0x580] sm:$0xff] %v583
    %588 = vst [vmem:[#allocation4 + $0x588] sm:$0x3] %v584
    %s589 = scalar_lea.vmem %s3, 276
    %v590 = vld [vmem:[%s589] sm:$0xf]
    %v591 = vld [vmem:[%s589 + $0x4] sm:$0xf]
    %v592 = vld [vmem:[%s589 + $0x8] sm:$0x3]
    %v596 = vunpack.c.l.b16 %v590
    %v597 = vunpack.c.l.b16 %v591
    %v598 = vunpack.c.l.b16 %v592
    %v599 = vpack.c.b16 %v597, %v596
    %v600 = vpack.c.b16 %v598, %v598
    %603 = vst [vmem:[#allocation4 + $0x5c0] sm:$0xff] %v599
    %604 = vst [vmem:[#allocation4 + $0x5c8] sm:$0x3] %v600
    %s605 = scalar_lea.vmem %s3, 288
    %v606 = vld [vmem:[%s605] sm:$0xf]
    %v607 = vld [vmem:[%s605 + $0x4] sm:$0xf]
    %v608 = vld [vmem:[%s605 + $0x8] sm:$0x3]
    %v612 = vunpack.c.l.b16 %v606
    %v613 = vunpack.c.l.b16 %v607
    %v614 = vunpack.c.l.b16 %v608
    %v615 = vpack.c.b16 %v613, %v612
    %v616 = vpack.c.b16 %v614, %v614
    %619 = vst [vmem:[#allocation4 + $0x600] sm:$0xff] %v615
    %620 = vst [vmem:[#allocation4 + $0x608] sm:$0x3] %v616
    %v621 = vld [vmem:[%s0] sm:$0xff]
    %v622 = vld [vmem:[%s0 + $0x8] sm:$0xff]
    %v623 = vld [vmem:[%s0 + $0x10] sm:$0xff]
    %v624 = vld [vmem:[%s0 + $0x18] sm:$0xff]
    %v625 = vld [vmem:[%s0 + $0x20] sm:$0xff]
    %v626 = vld [vmem:[%s0 + $0x28] sm:$0xff]
    %v627 = vld [vmem:[%s0 + $0x30] sm:$0xff]
    %v628 = vld [vmem:[%s0 + $0x38] sm:$0xff]
    %v629 = vld [vmem:[%s0 + $0x40] sm:$0xff]
    %v630 = vld [vmem:[%s0 + $0x48] sm:$0xff]
    %v631 = vld [vmem:[%s0 + $0x50] sm:$0xff]
    %v632 = vld [vmem:[%s0 + $0x58] sm:$0xff]
    %v633 = vld [vmem:[%s0 + $0x60] sm:$0xff]
    %v634 = vld [vmem:[%s0 + $0x68] sm:$0xff]
    %v635 = vld [vmem:[%s0 + $0x70] sm:$0xff]
    %v636 = vld [vmem:[%s0 + $0x78] sm:$0xff]
    %v637 = vld [vmem:[%s0 + $0x80] sm:$0xff]
    %v638 = vld [vmem:[%s0 + $0x88] sm:$0xff]
    %v639 = vld [vmem:[%s0 + $0x90] sm:$0xff]
    %v640 = vld [vmem:[%s0 + $0x98] sm:$0xff]
    %v641 = vld [vmem:[%s1] sm:$0xf]
    %v642 = vld [vmem:[%s1 + $0x4] sm:$0xf]
    %v643 = vld [vmem:[%s1 + $0x8] sm:$0xf]
    %v644 = vld [vmem:[%s1 + $0xc] sm:$0xf]
    %v645 = vld [vmem:[%s1 + $0x10] sm:$0xf]
    %v646 = vld [vmem:[%s1 + $0x14] sm:$0xf]
    %v647 = vld [vmem:[%s1 + $0x18] sm:$0xf]
    %v648 = vld [vmem:[%s1 + $0x1c] sm:$0xf]
    %v649 = vld [vmem:[%s1 + $0x20] sm:$0xf]
    %v650 = vld [vmem:[%s1 + $0x24] sm:$0xf]
    %v651 = vld [vmem:[%s1 + $0x28] sm:$0xf]
    %v652 = vld [vmem:[%s1 + $0x2c] sm:$0xf]
    %v653 = vld [vmem:[%s1 + $0x30] sm:$0xf]
    %v654 = vld [vmem:[%s1 + $0x34] sm:$0xf]
    %v655 = vld [vmem:[%s1 + $0x38] sm:$0xf]
    %v656 = vld [vmem:[%s1 + $0x3c] sm:$0xf]
    %v657 = vld [vmem:[%s1 + $0x40] sm:$0xf]
    %v658 = vld [vmem:[%s1 + $0x44] sm:$0xf]
    %v659 = vld [vmem:[%s1 + $0x48] sm:$0xf]
    %v660 = vld [vmem:[%s1 + $0x4c] sm:$0xf]
    %v661 = vld [vmem:[%s1 + $0x50] sm:$0xf]
    %v662 = vld [vmem:[%s1 + $0x54] sm:$0xf]
    %v663 = vld [vmem:[%s1 + $0x58] sm:$0xf]
    %v664 = vld [vmem:[%s1 + $0x5c] sm:$0xf]
    %v665 = vld [vmem:[%s1 + $0x60] sm:$0xf]
    %v666 = vld [vmem:[%s1 + $0x64] sm:$0xf]
    %v667 = vld [vmem:[%s1 + $0x68] sm:$0xf]
    %v668 = vld [vmem:[%s1 + $0x6c] sm:$0xf]
    %v669 = vld [vmem:[%s1 + $0x70] sm:$0xf]
    %v670 = vld [vmem:[%s1 + $0x74] sm:$0xf]
    %v671 = vld [vmem:[%s1 + $0x78] sm:$0xf]
    %v672 = vld [vmem:[%s1 + $0x7c] sm:$0xf]
    %v673 = vld [vmem:[%s1 + $0x80] sm:$0xf]
    %v674 = vld [vmem:[%s1 + $0x84] sm:$0xf]
    %v675 = vld [vmem:[%s1 + $0x88] sm:$0xf]
    %v676 = vld [vmem:[%s1 + $0x8c] sm:$0xf]
    %v677 = vld [vmem:[%s1 + $0x90] sm:$0xf]
    %v678 = vld [vmem:[%s1 + $0x94] sm:$0xf]
    %v679 = vld [vmem:[%s1 + $0x98] sm:$0xf]
    %v680 = vld [vmem:[%s1 + $0x9c] sm:$0xf]
    %v681 = vld [vmem:[%s1 + $0xa0] sm:$0xf]
    %v682 = vld [vmem:[%s1 + $0xa4] sm:$0xf]
    %v683 = vld [vmem:[%s1 + $0xa8] sm:$0xf]
    %v684 = vld [vmem:[%s1 + $0xac] sm:$0xf]
    %v685 = vld [vmem:[%s1 + $0xb0] sm:$0xf]
    %v686 = vld [vmem:[%s1 + $0xb4] sm:$0xf]
    %v687 = vld [vmem:[%s1 + $0xb8] sm:$0xf]
    %v688 = vld [vmem:[%s1 + $0xbc] sm:$0xf]
    %v689 = vld [vmem:[%s1 + $0xc0] sm:$0xf]
    %v690 = vld [vmem:[%s1 + $0xc4] sm:$0xf]
    %v691 = vld [vmem:[%s1 + $0xc8] sm:$0xf]
    %v692 = vld [vmem:[%s1 + $0xcc] sm:$0xf]
    %v693 = vld [vmem:[%s1 + $0xd0] sm:$0xf]
    %v694 = vld [vmem:[%s1 + $0xd4] sm:$0xf]
    %v695 = vld [vmem:[%s1 + $0xd8] sm:$0xf]
    %v696 = vld [vmem:[%s1 + $0xdc] sm:$0xf]
    %v697 = vld [vmem:[%s1 + $0xe0] sm:$0xf]
    %v698 = vld [vmem:[%s1 + $0xe4] sm:$0xf]
    %v699 = vld [vmem:[%s1 + $0xe8] sm:$0xf]
    %v700 = vld [vmem:[%s1 + $0xec] sm:$0xf]
    %v701 = vld [vmem:[%s1 + $0xf0] sm:$0xf]
    %v702 = vld [vmem:[%s1 + $0xf4] sm:$0xf]
    %v703 = vld [vmem:[%s1 + $0xf8] sm:$0xf]
    %v704 = vld [vmem:[%s1 + $0xfc] sm:$0xf]
    %v725 = vunpack.c.l.b16 %v621
    %v726 = vunpack.c.h.b16 %v621
    %v727 = vunpack.c.l.b16 %v622
    %v728 = vunpack.c.h.b16 %v622
    %v729 = vunpack.c.l.b16 %v623
    %v730 = vunpack.c.h.b16 %v623
    %v731 = vunpack.c.l.b16 %v624
    %v732 = vunpack.c.h.b16 %v624
    %v733 = vunpack.c.l.b16 %v625
    %v734 = vunpack.c.h.b16 %v625
    %v735 = vunpack.c.l.b16 %v626
    %v736 = vunpack.c.h.b16 %v626
    %v737 = vunpack.c.l.b16 %v627
    %v738 = vunpack.c.h.b16 %v627
    %v739 = vunpack.c.l.b16 %v628
    %v740 = vunpack.c.h.b16 %v628
    %v741 = vunpack.c.l.b16 %v629
    %v742 = vunpack.c.h.b16 %v629
    %v743 = vunpack.c.l.b16 %v630
    %v744 = vunpack.c.h.b16 %v630
    %v745 = vunpack.c.l.b16 %v631
    %v746 = vunpack.c.h.b16 %v631
    %v747 = vunpack.c.l.b16 %v632
    %v748 = vunpack.c.h.b16 %v632
    %v749 = vunpack.c.l.b16 %v633
    %v750 = vunpack.c.h.b16 %v633
    %v751 = vunpack.c.l.b16 %v634
    %v752 = vunpack.c.h.b16 %v634
    %v753 = vunpack.c.l.b16 %v635
    %v754 = vunpack.c.h.b16 %v635
    %v755 = vunpack.c.l.b16 %v636
    %v756 = vunpack.c.h.b16 %v636
    %v757 = vunpack.c.l.b16 %v637
    %v758 = vunpack.c.h.b16 %v637
    %v759 = vunpack.c.l.b16 %v638
    %v760 = vunpack.c.h.b16 %v638
    %v761 = vunpack.c.l.b16 %v639
    %v762 = vunpack.c.h.b16 %v639
    %v763 = vunpack.c.l.b16 %v640
    %v764 = vunpack.c.h.b16 %v640
    %v765 = vpack.c.b16 %v729, %v725
    %v766 = vpack.c.b16 %v730, %v726
    %v767 = vpack.c.b16 %v731, %v727
    %v768 = vpack.c.b16 %v732, %v728
    %v769 = vpack.c.b16 %v737, %v733
    %v770 = vpack.c.b16 %v738, %v734
    %v771 = vpack.c.b16 %v739, %v735
    %v772 = vpack.c.b16 %v740, %v736
    %v773 = vpack.c.b16 %v745, %v741
    %v774 = vpack.c.b16 %v746, %v742
    %v775 = vpack.c.b16 %v747, %v743
    %v776 = vpack.c.b16 %v748, %v744
    %v777 = vpack.c.b16 %v753, %v749
    %v778 = vpack.c.b16 %v754, %v750
    %v779 = vpack.c.b16 %v755, %v751
    %v780 = vpack.c.b16 %v756, %v752
    %v781 = vpack.c.b16 %v761, %v757
    %v782 = vpack.c.b16 %v762, %v758
    %v783 = vpack.c.b16 %v763, %v759
    %v784 = vpack.c.b16 %v764, %v760
    %v869 = vunpack.c.l.b16 %v641
    %v870 = vunpack.c.l.b16 %v642
    %v871 = vunpack.c.l.b16 %v643
    %v872 = vunpack.c.l.b16 %v644
    %v873 = vunpack.c.l.b16 %v645
    %v874 = vunpack.c.l.b16 %v646
    %v875 = vunpack.c.l.b16 %v647
    %v876 = vunpack.c.l.b16 %v648
    %v877 = vunpack.c.l.b16 %v649
    %v878 = vunpack.c.l.b16 %v650
    %v879 = vunpack.c.l.b16 %v651
    %v880 = vunpack.c.l.b16 %v652
    %v881 = vunpack.c.l.b16 %v653
    %v882 = vunpack.c.l.b16 %v654
    %v883 = vunpack.c.l.b16 %v655
    %v884 = vunpack.c.l.b16 %v656
    %v885 = vunpack.c.l.b16 %v657
    %v886 = vunpack.c.l.b16 %v658
    %v887 = vunpack.c.l.b16 %v659
    %v888 = vunpack.c.l.b16 %v660
    %v889 = vunpack.c.l.b16 %v661
    %v890 = vunpack.c.l.b16 %v662
    %v891 = vunpack.c.l.b16 %v663
    %v892 = vunpack.c.l.b16 %v664
    %v893 = vunpack.c.l.b16 %v665
    %v894 = vunpack.c.l.b16 %v666
    %v895 = vunpack.c.l.b16 %v667
    %v896 = vunpack.c.l.b16 %v668
    %v897 = vunpack.c.l.b16 %v669
    %v898 = vunpack.c.l.b16 %v670
    %v899 = vunpack.c.l.b16 %v671
    %v900 = vunpack.c.l.b16 %v672
    %v901 = vunpack.c.l.b16 %v673
    %v902 = vunpack.c.l.b16 %v674
    %v903 = vunpack.c.l.b16 %v675
    %v904 = vunpack.c.l.b16 %v676
    %v905 = vunpack.c.l.b16 %v677
    %v906 = vunpack.c.l.b16 %v678
    %v907 = vunpack.c.l.b16 %v679
    %v908 = vunpack.c.l.b16 %v680
    %v909 = vunpack.c.l.b16 %v681
    %v910 = vunpack.c.l.b16 %v682
    %v911 = vunpack.c.l.b16 %v683
    %v912 = vunpack.c.l.b16 %v684
    %v913 = vunpack.c.l.b16 %v685
    %v914 = vunpack.c.l.b16 %v686
    %v915 = vunpack.c.l.b16 %v687
    %v916 = vunpack.c.l.b16 %v688
    %v917 = vunpack.c.l.b16 %v689
    %v918 = vunpack.c.l.b16 %v690
    %v919 = vunpack.c.l.b16 %v691
    %v920 = vunpack.c.l.b16 %v692
    %v921 = vunpack.c.l.b16 %v693
    %v922 = vunpack.c.l.b16 %v694
    %v923 = vunpack.c.l.b16 %v695
    %v924 = vunpack.c.l.b16 %v696
    %v925 = vunpack.c.l.b16 %v697
    %v926 = vunpack.c.l.b16 %v698
    %v927 = vunpack.c.l.b16 %v699
    %v928 = vunpack.c.l.b16 %v700
    %v929 = vunpack.c.l.b16 %v701
    %v930 = vunpack.c.l.b16 %v702
    %v931 = vunpack.c.l.b16 %v703
    %v932 = vunpack.c.l.b16 %v704
    %v933 = vpack.c.b16 %v870, %v869
    %v934 = vpack.c.b16 %v872, %v871
    %v935 = vpack.c.b16 %v874, %v873
    %v936 = vpack.c.b16 %v876, %v875
    %v937 = vpack.c.b16 %v878, %v877
    %v938 = vpack.c.b16 %v880, %v879
    %v939 = vpack.c.b16 %v882, %v881
    %v940 = vpack.c.b16 %v884, %v883
    %v941 = vpack.c.b16 %v886, %v885
    %v942 = vpack.c.b16 %v888, %v887
    %v943 = vpack.c.b16 %v890, %v889
    %v944 = vpack.c.b16 %v892, %v891
    %v945 = vpack.c.b16 %v894, %v893
    %v946 = vpack.c.b16 %v896, %v895
    %v947 = vpack.c.b16 %v898, %v897
    %v948 = vpack.c.b16 %v900, %v899
    %v949 = vpack.c.b16 %v902, %v901
    %v950 = vpack.c.b16 %v904, %v903
    %v951 = vpack.c.b16 %v906, %v905
    %v952 = vpack.c.b16 %v908, %v907
    %v953 = vpack.c.b16 %v910, %v909
    %v954 = vpack.c.b16 %v912, %v911
    %v955 = vpack.c.b16 %v914, %v913
    %v956 = vpack.c.b16 %v916, %v915
    %v957 = vpack.c.b16 %v918, %v917
    %v958 = vpack.c.b16 %v920, %v919
    %v959 = vpack.c.b16 %v922, %v921
    %v960 = vpack.c.b16 %v924, %v923
    %v961 = vpack.c.b16 %v926, %v925
    %v962 = vpack.c.b16 %v928, %v927
    %v963 = vpack.c.b16 %v930, %v929
    %v964 = vpack.c.b16 %v932, %v931
    %997 = vmatprep.subr.bf16.mxu0 0
    %998 = vmatpush1.bf16.msra.mxu0 %v933
    %999 = vmatprep.subr.bf16.mxu0 0
    %1000 = vmatpush1.bf16.msra.mxu0 %v934
    %1001 = vmatprep.subr.bf16.mxu0 0
    %1002 = vmatpush1.bf16.msra.mxu0 %v935
    %1003 = vmatprep.subr.bf16.mxu0 0
    %1004 = vmatpush1.bf16.msra.mxu0 %v936
    %1005 = vmatprep.subr.bf16.mxu0 0
    %1006 = vmatpush1.bf16.msra.mxu0 %v937
    %1007 = vmatprep.subr.bf16.mxu0 0
    %1008 = vmatpush1.bf16.msra.mxu0 %v938
    %1009 = vmatprep.subr.bf16.mxu0 0
    %1010 = vmatpush1.bf16.msra.mxu0 %v939
    %1011 = vmatprep.subr.bf16.mxu0 0
    %1012 = vmatpush1.bf16.msra.mxu0 %v940
    %1013 = vmatprep.subr.bf16.mxu0 0
    %1014 = vmatpush1.bf16.msra.mxu0 %v941
    %1015 = vmatprep.subr.bf16.mxu0 0
    %1016 = vmatpush1.bf16.msra.mxu0 %v942
    %1017 = vmatprep.subr.bf16.mxu0 0
    %1018 = vmatpush1.bf16.msra.mxu0 %v943
    %1019 = vmatprep.subr.bf16.mxu0 0
    %1020 = vmatpush1.bf16.msra.mxu0 %v944
    %1021 = vmatprep.subr.bf16.mxu0 0
    %1022 = vmatpush1.bf16.msra.mxu0 %v945
    %1023 = vmatprep.subr.bf16.mxu0 0
    %1024 = vmatpush1.bf16.msra.mxu0 %v946
    %1025 = vmatprep.subr.bf16.mxu0 0
    %1026 = vmatpush1.bf16.msra.mxu0 %v947
    %1027 = vmatprep.subr.bf16.mxu0 0
    %1028 = vmatpush1.bf16.msra.mxu0 %v948
    %1029 = vmatprep.mubr.bf16.mxu0 %v766
    %1030 = vmatmul.mubr.bf16.gmra.mrb[0].mxu0 %v765
    %v1031 = vpop.f32.mrb[0].mxu0
    %v1032 = vadd.f32 0.0, %v1031
    %v1033 = vpop.f32.mrb[0].mxu0
    %v1034 = vpop.f32.mrb[0].mxu0
    %v1035 = vadd.f32 0.0, %v1034
    %v1036 = vpop.f32.mrb[0].mxu0
    %1037 = vmatprep.mubr.bf16.mxu0 %v770
    %1038 = vmatmul.mubr.bf16.gmra.mrb[0].mxu0 %v769
    %v1039 = vpop.f32.mrb[0].mxu0
    %v1040 = vadd.f32 0.0, %v1039
    %v1041 = vpop.f32.mrb[0].mxu0
    %v1042 = vpop.f32.mrb[0].mxu0
    %v1043 = vadd.f32 0.0, %v1042
    %v1044 = vpop.f32.mrb[0].mxu0
    %1045 = vmatprep.mubr.bf16.mxu0 %v774
    %1046 = vmatmul.mubr.bf16.gmra.mrb[0].mxu0 %v773
    %v1047 = vpop.f32.mrb[0].mxu0
    %v1048 = vadd.f32 0.0, %v1047
    %v1049 = vpop.f32.mrb[0].mxu0
    %v1050 = vpop.f32.mrb[0].mxu0
    %v1051 = vadd.f32 0.0, %v1050
    %v1052 = vpop.f32.mrb[0].mxu0
    %1053 = vmatprep.mubr.bf16.mxu0 %v778
    %1054 = vmatmul.mubr.bf16.gmra.mrb[0].mxu0 %v777
    %v1055 = vpop.f32.mrb[0].mxu0
    %v1056 = vadd.f32 0.0, %v1055
    %v1057 = vpop.f32.mrb[0].mxu0
    %v1058 = vpop.f32.mrb[0].mxu0
    %v1059 = vadd.f32 0.0, %v1058
    %v1060 = vpop.f32.mrb[0].mxu0
    %1061 = vmatprep.mubr.bf16.mxu0 %v782
    %1062 = vmatmul.mubr.bf16.gmra.mrb[0].mxu0 %v781
    %v1063 = vpop.f32.mrb[0].mxu0
    %v1064 = vadd.f32 0.0, %v1063
    %v1065 = vpop.f32.mrb[0].mxu0
    %v1066 = vpop.f32.mrb[0].mxu0
    %v1067 = vadd.f32 0.0, %v1066
    %v1068 = vpop.f32.mrb[0].mxu0
    %1069 = vdwg.mxu0
    %1070 = vmatprep.subr.bf16.mxu0 0
    %1071 = vmatpush1.bf16.msra.mxu0 %v949
    %1072 = vmatprep.subr.bf16.mxu0 0
    %1073 = vmatpush1.bf16.msra.mxu0 %v950
    %1074 = vmatprep.subr.bf16.mxu0 0
    %1075 = vmatpush1.bf16.msra.mxu0 %v951
    %1076 = vmatprep.subr.bf16.mxu0 0
    %1077 = vmatpush1.bf16.msra.mxu0 %v952
    %1078 = vmatprep.subr.bf16.mxu0 0
    %1079 = vmatpush1.bf16.msra.mxu0 %v953
    %1080 = vmatprep.subr.bf16.mxu0 0
    %1081 = vmatpush1.bf16.msra.mxu0 %v954
    %1082 = vmatprep.subr.bf16.mxu0 0
    %1083 = vmatpush1.bf16.msra.mxu0 %v955
    %1084 = vmatprep.subr.bf16.mxu0 0
    %1085 = vmatpush1.bf16.msra.mxu0 %v956
    %1086 = vmatprep.subr.bf16.mxu0 0
    %1087 = vmatpush1.bf16.msra.mxu0 %v957
    %1088 = vmatprep.subr.bf16.mxu0 0
    %1089 = vmatpush1.bf16.msra.mxu0 %v958
    %1090 = vmatprep.subr.bf16.mxu0 0
    %1091 = vmatpush1.bf16.msra.mxu0 %v959
    %1092 = vmatprep.subr.bf16.mxu0 0
    %1093 = vmatpush1.bf16.msra.mxu0 %v960
    %1094 = vmatprep.subr.bf16.mxu0 0
    %1095 = vmatpush1.bf16.msra.mxu0 %v961
    %1096 = vmatprep.subr.bf16.mxu0 0
    %1097 = vmatpush1.bf16.msra.mxu0 %v962
    %1098 = vmatprep.subr.bf16.mxu0 0
    %1099 = vmatpush1.bf16.msra.mxu0 %v963
    %1100 = vmatprep.subr.bf16.mxu0 0
    %1101 = vmatpush1.bf16.msra.mxu0 %v964
    %1102 = vmatprep.mubr.bf16.mxu0 %v768
    %1103 = vmatmul.mubr.bf16.gmra.mrb[0].mxu0 %v767
    %v1104 = vpop.f32.mrb[0].mxu0
    %v1105 = vadd.f32 %v1032, %v1104
    %v1106 = vpop.f32.mrb[0].mxu0
    %v1107 = vpop.f32.mrb[0].mxu0
    %v1108 = vadd.f32 %v1035, %v1107
    %v1109 = vpop.f32.mrb[0].mxu0
    %1110 = vmatprep.mubr.bf16.mxu0 %v772
    %1111 = vmatmul.mubr.bf16.gmra.mrb[0].mxu0 %v771
    %v1112 = vpop.f32.mrb[0].mxu0
    %v1113 = vadd.f32 %v1040, %v1112
    %v1114 = vpop.f32.mrb[0].mxu0
    %v1115 = vpop.f32.mrb[0].mxu0
    %v1116 = vadd.f32 %v1043, %v1115
    %v1117 = vpop.f32.mrb[0].mxu0
    %1118 = vmatprep.mubr.bf16.mxu0 %v776
    %1119 = vmatmul.mubr.bf16.gmra.mrb[0].mxu0 %v775
    %v1120 = vpop.f32.mrb[0].mxu0
    %v1121 = vadd.f32 %v1048, %v1120
    %v1122 = vpop.f32.mrb[0].mxu0
    %v1123 = vpop.f32.mrb[0].mxu0
    %v1124 = vadd.f32 %v1051, %v1123
    %v1125 = vpop.f32.mrb[0].mxu0
    %1126 = vmatprep.mubr.bf16.mxu0 %v780
    %1127 = vmatmul.mubr.bf16.gmra.mrb[0].mxu0 %v779
    %v1128 = vpop.f32.mrb[0].mxu0
    %v1129 = vadd.f32 %v1056, %v1128
    %v1130 = vpop.f32.mrb[0].mxu0
    %v1131 = vpop.f32.mrb[0].mxu0
    %v1132 = vadd.f32 %v1059, %v1131
    %v1133 = vpop.f32.mrb[0].mxu0
    %1134 = vmatprep.mubr.bf16.mxu0 %v784
    %1135 = vmatmul.mubr.bf16.gmra.mrb[0].mxu0 %v783
    %v1136 = vpop.f32.mrb[0].mxu0
    %v1137 = vadd.f32 %v1064, %v1136
    %v1138 = vpop.f32.mrb[0].mxu0
    %v1139 = vpop.f32.mrb[0].mxu0
    %v1140 = vadd.f32 %v1067, %v1139
    %v1141 = vpop.f32.mrb[0].mxu0
    %1142 = vdwg.mxu0
    %v1143 = vadd.f32 %v1105, %v1108
    %v1144 = vadd.f32 %v1143, %v1113
    %v1145 = vadd.f32 %v1144, %v1116
    %v1146 = vadd.f32 %v1145, %v1121
    %v1147 = vadd.f32 %v1146, %v1124
    %v1148 = vadd.f32 %v1147, %v1129
    %v1149 = vadd.f32 %v1148, %v1132
    %v1150 = vadd.f32 %v1149, %v1137
    %v1151 = vadd.f32 %v1150, %v1140
    %v1152 = vrot.slane %v1151, 4
    %v1153 = vadd.f32 %v1151, %v1152
    %v1154 = vrot.slane %v1153, 2
    %v1155 = vadd.f32 %v1153, %v1154
    %v1156 = vrot.slane %v1155, 1
    %v1157 = vadd.f32 %v1155, %v1156
    %v1158 = vmul.f32 %v1157, 0.013888889
    %v1159 = vsub.f32 %v1105, %v1158
    %v1160 = vsub.f32 %v1108, %v1158
    %v1161 = vsub.f32 %v1113, %v1158
    %v1162 = vsub.f32 %v1116, %v1158
    %v1163 = vsub.f32 %v1121, %v1158
    %v1164 = vsub.f32 %v1124, %v1158
    %v1165 = vsub.f32 %v1129, %v1158
    %v1166 = vsub.f32 %v1132, %v1158
    %v1167 = vsub.f32 %v1137, %v1158
    %v1168 = vsub.f32 %v1140, %v1158
    %v1169 = vmul.f32 %v1159, %v1159
    %v1170 = vmul.f32 %v1160, %v1160
    %v1171 = vmul.f32 %v1161, %v1161
    %v1172 = vmul.f32 %v1162, %v1162
    %v1173 = vmul.f32 %v1163, %v1163
    %v1174 = vmul.f32 %v1164, %v1164
    %v1175 = vmul.f32 %v1165, %v1165
    %v1176 = vmul.f32 %v1166, %v1166
    %v1177 = vmul.f32 %v1167, %v1167
    %v1178 = vmul.f32 %v1168, %v1168
    %v1179 = vadd.f32 %v1169, %v1170
    %v1180 = vadd.f32 %v1179, %v1171
    %v1181 = vadd.f32 %v1180, %v1172
    %v1182 = vadd.f32 %v1181, %v1173
    %v1183 = vadd.f32 %v1182, %v1174
    %v1184 = vadd.f32 %v1183, %v1175
    %v1185 = vadd.f32 %v1184, %v1176
    %v1186 = vadd.f32 %v1185, %v1177
    %v1187 = vadd.f32 %v1186, %v1178
    %v1188 = vrot.slane %v1187, 4
    %v1189 = vadd.f32 %v1187, %v1188
    %v1190 = vrot.slane %v1189, 2
    %v1191 = vadd.f32 %v1189, %v1190
    %v1192 = vrot.slane %v1191, 1
    %v1193 = vadd.f32 %v1191, %v1192
    %v1194 = vmul.f32 %v1158, 8.0
    %v1195 = vmul.f32 %v1194, %v1158
    %v1196 = vsub.f32 %v1193, %v1195
    %v1197 = vmul.f32 %v1196, 0.013888889
    %v1198 = vld [vmem:[%s2] sm:$0x3]
    %v1199 = vadd.f32 %v1197, 1e-05
    %v1200 = vrsqrt.pop %v1199
    %v1201 = vmul.f32 %v1198, %v1200
    %v1202 = vmul.f32 %v1158, %v1201
    %v1204 = vrot.slane %v1202, 7
    %v1206 = vsub.f32 %v1198, %v1204
    %v1207 = vlaneseq
    %v1208 = vshrl.u32 %v1207, 7
    %v1209 = vsub.s32 0, %v1208
    %v1210 = vrot.slane %v1201, %v1209
    %v1211 = vmul.f32 %v1105, %v1210
    %v1212 = vmul.f32 %v1108, %v1210
    %v1213 = vmul.f32 %v1113, %v1210
    %v1214 = vmul.f32 %v1116, %v1210
    %v1215 = vmul.f32 %v1121, %v1210
    %v1216 = vmul.f32 %v1124, %v1210
    %v1217 = vmul.f32 %v1129, %v1210
    %v1218 = vmul.f32 %v1132, %v1210
    %v1219 = vmul.f32 %v1137, %v1210
    %v1220 = vmul.f32 %v1140, %v1210
    %v1221 = vlaneseq
    %v1222 = vshrl.u32 %v1221, 7
    %v1223 = vsub.s32 1, %v1222
    %v1224 = vrot.slane %v1206, %v1223
    %v1225 = vadd.f32 %v1211, %v1224
    %v1226 = vadd.f32 %v1212, %v1224
    %v1227 = vadd.f32 %v1213, %v1224
    %v1228 = vadd.f32 %v1214, %v1224
    %v1229 = vadd.f32 %v1215, %v1224
    %v1230 = vadd.f32 %v1216, %v1224
    %v1231 = vadd.f32 %v1217, %v1224
    %v1232 = vadd.f32 %v1218, %v1224
    %v1233 = vadd.f32 %v1219, %v1224
    %v1234 = vadd.f32 %v1220, %v1224
    %1235 = vst [vmem:[#allocation2] sm:$0xff] %v1225
    %1236 = vst [vmem:[#allocation2 + $0x8] sm:$0xff] %v1226
    %1237 = vst [vmem:[#allocation2 + $0x10] sm:$0xff] %v1227
    %1238 = vst [vmem:[#allocation2 + $0x18] sm:$0xff] %v1228
    %1239 = vst [vmem:[#allocation2 + $0x20] sm:$0xff] %v1229
    %1240 = vst [vmem:[#allocation2 + $0x28] sm:$0xff] %v1230
    %1241 = vst [vmem:[#allocation2 + $0x30] sm:$0xff] %v1231
    %1242 = vst [vmem:[#allocation2 + $0x38] sm:$0xff] %v1232
    %1243 = vst [vmem:[#allocation2 + $0x40] sm:$0xff] %v1233
    %1244 = vst [vmem:[#allocation2 + $0x48] sm:$0xff] %v1234
    %v1245 = vld [vmem:[#allocation2] sm:$0x3]
    %v1246 = vpack.c.bf16 %v1245, %v1245
    %1247 = vst [vmem:[#allocation3] sm:$0x1] %v1246
    %v1248 = vld [vmem:[#allocation2 + $0x1] sm:$0x3]
    %v1249 = vpack.c.bf16 %v1248, %v1248
    %1250 = vst [vmem:[#allocation3 + $0x4] sm:$0x1] %v1249
    %v1251 = vld [vmem:[#allocation2 + $0x2] sm:$0x3]
    %v1252 = vpack.c.bf16 %v1251, %v1251
    %1253 = vst [vmem:[#allocation3 + $0x8] sm:$0x1] %v1252
    %v1254 = vld [vmem:[#allocation2 + $0x3] sm:$0x3]
    %v1255 = vpack.c.bf16 %v1254, %v1254
    %1256 = vst [vmem:[#allocation3 + $0xc] sm:$0x1] %v1255
    %v1257 = vld [vmem:[#allocation2 + $0x4] sm:$0x3]
    %v1258 = vpack.c.bf16 %v1257, %v1257
    %1259 = vst [vmem:[#allocation3 + $0x10] sm:$0x1] %v1258
    %v1260 = vld [vmem:[#allocation2 + $0x6] sm:$0x3]
    %v1261 = vpack.c.bf16 %v1260, %v1260
    %1262 = vst [vmem:[#allocation3 + $0x14] sm:$0x1] %v1261
    %v1263 = vld [vmem:[#allocation2 + $0x7] sm:$0x3]
    %v1264 = vpack.c.bf16 %v1263, %v1263
    %1265 = vst [vmem:[#allocation3 + $0x18] sm:$0x1] %v1264
    %v1266 = vld [vmem:[#allocation2 + $0x8] sm:$0x3]
    %v1267 = vpack.c.bf16 %v1266, %v1266
    %1268 = vst [vmem:[#allocation3 + $0x1c] sm:$0x1] %v1267
    %v1269 = vld [vmem:[#allocation2 + $0x9] sm:$0x3]
    %v1270 = vpack.c.bf16 %v1269, %v1269
    %1271 = vst [vmem:[#allocation3 + $0x20] sm:$0x1] %v1270
    %v1272 = vld [vmem:[#allocation2 + $0xa] sm:$0x3]
    %v1273 = vpack.c.bf16 %v1272, %v1272
    %1274 = vst [vmem:[#allocation3 + $0x24] sm:$0x1] %v1273
    %v1275 = vld [vmem:[#allocation2 + $0xc] sm:$0x3]
    %v1276 = vpack.c.bf16 %v1275, %v1275
    %1277 = vst [vmem:[#allocation3 + $0x28] sm:$0x1] %v1276
    %v1278 = vld [vmem:[#allocation2 + $0xd] sm:$0x3]
    %v1279 = vpack.c.bf16 %v1278, %v1278
    %1280 = vst [vmem:[#allocation3 + $0x2c] sm:$0x1] %v1279
    %v1281 = vld [vmem:[#allocation2 + $0xe] sm:$0x3]
    %v1282 = vpack.c.bf16 %v1281, %v1281
    %1283 = vst [vmem:[#allocation3 + $0x30] sm:$0x1] %v1282
    %v1284 = vld [vmem:[#allocation2 + $0xf] sm:$0x3]
    %v1285 = vpack.c.bf16 %v1284, %v1284
    %1286 = vst [vmem:[#allocation3 + $0x34] sm:$0x1] %v1285
    %v1287 = vld [vmem:[#allocation2 + $0x10] sm:$0x3]
    %v1288 = vpack.c.bf16 %v1287, %v1287
    %1289 = vst [vmem:[#allocation3 + $0x38] sm:$0x1] %v1288
    %v1290 = vld [vmem:[#allocation2 + $0x12] sm:$0x3]
    %v1291 = vpack.c.bf16 %v1290, %v1290
    %1292 = vst [vmem:[#allocation3 + $0x3c] sm:$0x1] %v1291
    %v1293 = vld [vmem:[#allocation2 + $0x13] sm:$0x3]
    %v1294 = vpack.c.bf16 %v1293, %v1293
    %1295 = vst [vmem:[#allocation3 + $0x40] sm:$0x1] %v1294
    %v1296 = vld [vmem:[#allocation2 + $0x14] sm:$0x3]
    %v1297 = vpack.c.bf16 %v1296, %v1296
    %1298 = vst [vmem:[#allocation3 + $0x44] sm:$0x1] %v1297
    %v1299 = vld [vmem:[#allocation2 + $0x15] sm:$0x3]
    %v1300 = vpack.c.bf16 %v1299, %v1299
    %1301 = vst [vmem:[#allocation3 + $0x48] sm:$0x1] %v1300
    %v1302 = vld [vmem:[#allocation2 + $0x16] sm:$0x3]
    %v1303 = vpack.c.bf16 %v1302, %v1302
    %1304 = vst [vmem:[#allocation3 + $0x4c] sm:$0x1] %v1303
    %v1305 = vld [vmem:[#allocation2 + $0x18] sm:$0x3]
    %v1306 = vpack.c.bf16 %v1305, %v1305
    %1307 = vst [vmem:[#allocation3 + $0x50] sm:$0x1] %v1306
    %v1308 = vld [vmem:[#allocation2 + $0x19] sm:$0x3]
    %v1309 = vpack.c.bf16 %v1308, %v1308
    %1310 = vst [vmem:[#allocation3 + $0x54] sm:$0x1] %v1309
    %v1311 = vld [vmem:[#allocation2 + $0x1a] sm:$0x3]
    %v1312 = vpack.c.bf16 %v1311, %v1311
    %1313 = vst [vmem:[#allocation3 + $0x58] sm:$0x1] %v1312
    %v1314 = vld [vmem:[#allocation2 + $0x1b] sm:$0x3]
    %v1315 = vpack.c.bf16 %v1314, %v1314
    %1316 = vst [vmem:[#allocation3 + $0x5c] sm:$0x1] %v1315
    %v1317 = vld [vmem:[#allocation2 + $0x1c] sm:$0x3]
    %v1318 = vpack.c.bf16 %v1317, %v1317
    %1319 = vst [vmem:[#allocation3 + $0x60] sm:$0x1] %v1318
    %v1320 = vld [vmem:[#allocation2 + $0x6] sm:$0x3]
    %v1321 = vpack.c.bf16 %v1320, %v1320
    %v1323 = vunpack.c.l.b16 %v1321
    %v1324 = vpack.c.b16 %v1323, %v1323
    %v1325 = vrot.slane %v1324, 7
    %1327 = vst [vmem:[#allocation3] sm:$0x2] %v1325
    %v1328 = vld [vmem:[#allocation2 + $0x7] sm:$0x3]
    %v1329 = vpack.c.bf16 %v1328, %v1328
    %v1331 = vunpack.c.l.b16 %v1329
    %v1332 = vpack.c.b16 %v1331, %v1331
    %v1333 = vrot.slane %v1332, 7
    %1335 = vst [vmem:[#allocation3 + $0x4] sm:$0x2] %v1333
    %v1336 = vld [vmem:[#allocation2 + $0x8] sm:$0x3]
    %v1337 = vpack.c.bf16 %v1336, %v1336
    %v1339 = vunpack.c.l.b16 %v1337
    %v1340 = vpack.c.b16 %v1339, %v1339
    %v1341 = vrot.slane %v1340, 7
    %1343 = vst [vmem:[#allocation3 + $0x8] sm:$0x2] %v1341
    %v1344 = vld [vmem:[#allocation2 + $0x9] sm:$0x3]
    %v1345 = vpack.c.bf16 %v1344, %v1344
    %v1347 = vunpack.c.l.b16 %v1345
    %v1348 = vpack.c.b16 %v1347, %v1347
    %v1349 = vrot.slane %v1348, 7
    %1351 = vst [vmem:[#allocation3 + $0xc] sm:$0x2] %v1349
    %v1352 = vld [vmem:[#allocation2 + $0xa] sm:$0x3]
    %v1353 = vpack.c.bf16 %v1352, %v1352
    %v1355 = vunpack.c.l.b16 %v1353
    %v1356 = vpack.c.b16 %v1355, %v1355
    %v1357 = vrot.slane %v1356, 7
    %1359 = vst [vmem:[#allocation3 + $0x10] sm:$0x2] %v1357
    %v1360 = vld [vmem:[#allocation2 + $0xc] sm:$0x3]
    %v1361 = vpack.c.bf16 %v1360, %v1360
    %v1363 = vunpack.c.l.b16 %v1361
    %v1364 = vpack.c.b16 %v1363, %v1363
    %v1365 = vrot.slane %v1364, 7
    %1367 = vst [vmem:[#allocation3 + $0x14] sm:$0x2] %v1365
    %v1368 = vld [vmem:[#allocation2 + $0xd] sm:$0x3]
    %v1369 = vpack.c.bf16 %v1368, %v1368
    %v1371 = vunpack.c.l.b16 %v1369
    %v1372 = vpack.c.b16 %v1371, %v1371
    %v1373 = vrot.slane %v1372, 7
    %1375 = vst [vmem:[#allocation3 + $0x18] sm:$0x2] %v1373
    %v1376 = vld [vmem:[#allocation2 + $0xe] sm:$0x3]
    %v1377 = vpack.c.bf16 %v1376, %v1376
    %v1379 = vunpack.c.l.b16 %v1377
    %v1380 = vpack.c.b16 %v1379, %v1379
    %v1381 = vrot.slane %v1380, 7
    %1383 = vst [vmem:[#allocation3 + $0x1c] sm:$0x2] %v1381
    %v1384 = vld [vmem:[#allocation2 + $0xf] sm:$0x3]
    %v1385 = vpack.c.bf16 %v1384, %v1384
    %v1387 = vunpack.c.l.b16 %v1385
    %v1388 = vpack.c.b16 %v1387, %v1387
    %v1389 = vrot.slane %v1388, 7
    %1391 = vst [vmem:[#allocation3 + $0x20] sm:$0x2] %v1389
    %v1392 = vld [vmem:[#allocation2 + $0x10] sm:$0x3]
    %v1393 = vpack.c.bf16 %v1392, %v1392
    %v1395 = vunpack.c.l.b16 %v1393
    %v1396 = vpack.c.b16 %v1395, %v1395
    %v1397 = vrot.slane %v1396, 7
    %1399 = vst [vmem:[#allocation3 + $0x24] sm:$0x2] %v1397
    %v1400 = vld [vmem:[#allocation2 + $0x12] sm:$0x3]
    %v1401 = vpack.c.bf16 %v1400, %v1400
    %v1403 = vunpack.c.l.b16 %v1401
    %v1404 = vpack.c.b16 %v1403, %v1403
    %v1405 = vrot.slane %v1404, 7
    %1407 = vst [vmem:[#allocation3 + $0x28] sm:$0x2] %v1405
    %v1408 = vld [vmem:[#allocation2 + $0x13] sm:$0x3]
    %v1409 = vpack.c.bf16 %v1408, %v1408
    %v1411 = vunpack.c.l.b16 %v1409
    %v1412 = vpack.c.b16 %v1411, %v1411
    %v1413 = vrot.slane %v1412, 7
    %1415 = vst [vmem:[#allocation3 + $0x2c] sm:$0x2] %v1413
    %v1416 = vld [vmem:[#allocation2 + $0x14] sm:$0x3]
    %v1417 = vpack.c.bf16 %v1416, %v1416
    %v1419 = vunpack.c.l.b16 %v1417
    %v1420 = vpack.c.b16 %v1419, %v1419
    %v1421 = vrot.slane %v1420, 7
    %1423 = vst [vmem:[#allocation3 + $0x30] sm:$0x2] %v1421
    %v1424 = vld [vmem:[#allocation2 + $0x15] sm:$0x3]
    %v1425 = vpack.c.bf16 %v1424, %v1424
    %v1427 = vunpack.c.l.b16 %v1425
    %v1428 = vpack.c.b16 %v1427, %v1427
    %v1429 = vrot.slane %v1428, 7
    %1431 = vst [vmem:[#allocation3 + $0x34] sm:$0x2] %v1429
    %v1432 = vld [vmem:[#allocation2 + $0x16] sm:$0x3]
    %v1433 = vpack.c.bf16 %v1432, %v1432
    %v1435 = vunpack.c.l.b16 %v1433
    %v1436 = vpack.c.b16 %v1435, %v1435
    %v1437 = vrot.slane %v1436, 7
    %1439 = vst [vmem:[#allocation3 + $0x38] sm:$0x2] %v1437
    %v1440 = vld [vmem:[#allocation2 + $0x18] sm:$0x3]
    %v1441 = vpack.c.bf16 %v1440, %v1440
    %v1443 = vunpack.c.l.b16 %v1441
    %v1444 = vpack.c.b16 %v1443, %v1443
    %v1445 = vrot.slane %v1444, 7
    %1447 = vst [vmem:[#allocation3 + $0x3c] sm:$0x2] %v1445
    %v1448 = vld [vmem:[#allocation2 + $0x19] sm:$0x3]
    %v1449 = vpack.c.bf16 %v1448, %v1448
    %v1451 = vunpack.c.l.b16 %v1449
    %v1452 = vpack.c.b16 %v1451, %v1451
    %v1453 = vrot.slane %v1452, 7
    %1455 = vst [vmem:[#allocation3 + $0x40] sm:$0x2] %v1453
    %v1456 = vld [vmem:[#allocation2 + $0x1a] sm:$0x3]
    %v1457 = vpack.c.bf16 %v1456, %v1456
    %v1459 = vunpack.c.l.b16 %v1457
    %v1460 = vpack.c.b16 %v1459, %v1459
    %v1461 = vrot.slane %v1460, 7
    %1463 = vst [vmem:[#allocation3 + $0x44] sm:$0x2] %v1461
    %v1464 = vld [vmem:[#allocation2 + $0x1b] sm:$0x3]
    %v1465 = vpack.c.bf16 %v1464, %v1464
    %v1467 = vunpack.c.l.b16 %v1465
    %v1468 = vpack.c.b16 %v1467, %v1467
    %v1469 = vrot.slane %v1468, 7
    %1471 = vst [vmem:[#allocation3 + $0x48] sm:$0x2] %v1469
    %v1472 = vld [vmem:[#allocation2 + $0x1c] sm:$0x3]
    %v1473 = vpack.c.bf16 %v1472, %v1472
    %v1475 = vunpack.c.l.b16 %v1473
    %v1476 = vpack.c.b16 %v1475, %v1475
    %v1477 = vrot.slane %v1476, 7
    %1479 = vst [vmem:[#allocation3 + $0x4c] sm:$0x2] %v1477
    %v1480 = vld [vmem:[#allocation2 + $0x1e] sm:$0x3]
    %v1481 = vpack.c.bf16 %v1480, %v1480
    %v1483 = vunpack.c.l.b16 %v1481
    %v1484 = vpack.c.b16 %v1483, %v1483
    %v1485 = vrot.slane %v1484, 7
    %1487 = vst [vmem:[#allocation3 + $0x50] sm:$0x2] %v1485
    %v1488 = vld [vmem:[#allocation2 + $0x1f] sm:$0x3]
    %v1489 = vpack.c.bf16 %v1488, %v1488
    %v1491 = vunpack.c.l.b16 %v1489
    %v1492 = vpack.c.b16 %v1491, %v1491
    %v1493 = vrot.slane %v1492, 7
    %1495 = vst [vmem:[#allocation3 + $0x54] sm:$0x2] %v1493
    %v1496 = vld [vmem:[#allocation2 + $0x20] sm:$0x3]
    %v1497 = vpack.c.bf16 %v1496, %v1496
    %v1499 = vunpack.c.l.b16 %v1497
    %v1500 = vpack.c.b16 %v1499, %v1499
    %v1501 = vrot.slane %v1500, 7
    %1503 = vst [vmem:[#allocation3 + $0x58] sm:$0x2] %v1501
    %v1504 = vld [vmem:[#allocation2 + $0x21] sm:$0x3]
    %v1505 = vpack.c.bf16 %v1504, %v1504
    %v1507 = vunpack.c.l.b16 %v1505
    %v1508 = vpack.c.b16 %v1507, %v1507
    %v1509 = vrot.slane %v1508, 7
    %1511 = vst [vmem:[#allocation3 + $0x5c] sm:$0x2] %v1509
    %v1512 = vld [vmem:[#allocation2 + $0x22] sm:$0x3]
    %v1513 = vpack.c.bf16 %v1512, %v1512
    %v1515 = vunpack.c.l.b16 %v1513
    %v1516 = vpack.c.b16 %v1515, %v1515
    %v1517 = vrot.slane %v1516, 7
    %1519 = vst [vmem:[#allocation3 + $0x60] sm:$0x2] %v1517
    %v1520 = vld [vmem:[#allocation2 + $0x24] sm:$0x3]
    %v1521 = vpack.c.bf16 %v1520, %v1520
    %v1523 = vunpack.c.l.b16 %v1521
    %v1524 = vpack.c.b16 %v1523, %v1523
    %v1525 = vrot.slane %v1524, 6
    %1527 = vst [vmem:[#allocation3] sm:$0x4] %v1525
    %v1528 = vld [vmem:[#allocation2 + $0x25] sm:$0x3]
    %v1529 = vpack.c.bf16 %v1528, %v1528
    %v1531 = vunpack.c.l.b16 %v1529
    %v1532 = vpack.c.b16 %v1531, %v1531
    %v1533 = vrot.slane %v1532, 6
    %1535 = vst [vmem:[#allocation3 + $0x4] sm:$0x4] %v1533
    %v1536 = vld [vmem:[#allocation2 + $0x26] sm:$0x3]
    %v1537 = vpack.c.bf16 %v1536, %v1536
    %v1539 = vunpack.c.l.b16 %v1537
    %v1540 = vpack.c.b16 %v1539, %v1539
    %v1541 = vrot.slane %v1540, 6
    %1543 = vst [vmem:[#allocation3 + $0x8] sm:$0x4] %v1541
    %v1544 = vld [vmem:[#allocation2 + $0x27] sm:$0x3]
    %v1545 = vpack.c.bf16 %v1544, %v1544
    %v1547 = vunpack.c.l.b16 %v1545
    %v1548 = vpack.c.b16 %v1547, %v1547
    %v1549 = vrot.slane %v1548, 6
    %1551 = vst [vmem:[#allocation3 + $0xc] sm:$0x4] %v1549
    %v1552 = vld [vmem:[#allocation2 + $0x28] sm:$0x3]
    %v1553 = vpack.c.bf16 %v1552, %v1552
    %v1555 = vunpack.c.l.b16 %v1553
    %v1556 = vpack.c.b16 %v1555, %v1555
    %v1557 = vrot.slane %v1556, 6
    %1559 = vst [vmem:[#allocation3 + $0x10] sm:$0x4] %v1557
    %v1560 = vld [vmem:[#allocation2 + $0x2a] sm:$0x3]
    %v1561 = vpack.c.bf16 %v1560, %v1560
    %v1563 = vunpack.c.l.b16 %v1561
    %v1564 = vpack.c.b16 %v1563, %v1563
    %v1565 = vrot.slane %v1564, 6
    %1567 = vst [vmem:[#allocation3 + $0x14] sm:$0x4] %v1565
    %v1568 = vld [vmem:[#allocation2 + $0x2b] sm:$0x3]
    %v1569 = vpack.c.bf16 %v1568, %v1568
    %v1571 = vunpack.c.l.b16 %v1569
    %v1572 = vpack.c.b16 %v1571, %v1571
    %v1573 = vrot.slane %v1572, 6
    %1575 = vst [vmem:[#allocation3 + $0x18] sm:$0x4] %v1573
    %v1576 = vld [vmem:[#allocation2 + $0x2c] sm:$0x3]
    %v1577 = vpack.c.bf16 %v1576, %v1576
    %v1579 = vunpack.c.l.b16 %v1577
    %v1580 = vpack.c.b16 %v1579, %v1579
    %v1581 = vrot.slane %v1580, 6
    %1583 = vst [vmem:[#allocation3 + $0x1c] sm:$0x4] %v1581
    %v1584 = vld [vmem:[#allocation2 + $0x2d] sm:$0x3]
    %v1585 = vpack.c.bf16 %v1584, %v1584
    %v1587 = vunpack.c.l.b16 %v1585
    %v1588 = vpack.c.b16 %v1587, %v1587
    %v1589 = vrot.slane %v1588, 6
    %1591 = vst [vmem:[#allocation3 + $0x20] sm:$0x4] %v1589
    %v1592 = vld [vmem:[#allocation2 + $0x2e] sm:$0x3]
    %v1593 = vpack.c.bf16 %v1592, %v1592
    %v1595 = vunpack.c.l.b16 %v1593
    %v1596 = vpack.c.b16 %v1595, %v1595
    %v1597 = vrot.slane %v1596, 6
    %1599 = vst [vmem:[#allocation3 + $0x24] sm:$0x4] %v1597
    %v1600 = vld [vmem:[#allocation2 + $0x30] sm:$0x3]
    %v1601 = vpack.c.bf16 %v1600, %v1600
    %v1603 = vunpack.c.l.b16 %v1601
    %v1604 = vpack.c.b16 %v1603, %v1603
    %v1605 = vrot.slane %v1604, 6
    %1607 = vst [vmem:[#allocation3 + $0x28] sm:$0x4] %v1605
    %v1608 = vld [vmem:[#allocation2 + $0x31] sm:$0x3]
    %v1609 = vpack.c.bf16 %v1608, %v1608
    %v1611 = vunpack.c.l.b16 %v1609
    %v1612 = vpack.c.b16 %v1611, %v1611
    %v1613 = vrot.slane %v1612, 6
    %1615 = vst [vmem:[#allocation3 + $0x2c] sm:$0x4] %v1613
    %v1616 = vld [vmem:[#allocation2 + $0x32] sm:$0x3]
    %v1617 = vpack.c.bf16 %v1616, %v1616
    %v1619 = vunpack.c.l.b16 %v1617
    %v1620 = vpack.c.b16 %v1619, %v1619
    %v1621 = vrot.slane %v1620, 6
    %1623 = vst [vmem:[#allocation3 + $0x30] sm:$0x4] %v1621
    %v1624 = vld [vmem:[#allocation2 + $0x33] sm:$0x3]
    %v1625 = vpack.c.bf16 %v1624, %v1624
    %v1627 = vunpack.c.l.b16 %v1625
    %v1628 = vpack.c.b16 %v1627, %v1627
    %v1629 = vrot.slane %v1628, 6
    %1631 = vst [vmem:[#allocation3 + $0x34] sm:$0x4] %v1629
    %v1632 = vld [vmem:[#allocation2 + $0x34] sm:$0x3]
    %v1633 = vpack.c.bf16 %v1632, %v1632
    %v1635 = vunpack.c.l.b16 %v1633
    %v1636 = vpack.c.b16 %v1635, %v1635
    %v1637 = vrot.slane %v1636, 6
    %1639 = vst [vmem:[#allocation3 + $0x38] sm:$0x4] %v1637
    %v1640 = vld [vmem:[#allocation2 + $0x36] sm:$0x3]
    %v1641 = vpack.c.bf16 %v1640, %v1640
    %v1643 = vunpack.c.l.b16 %v1641
    %v1644 = vpack.c.b16 %v1643, %v1643
    %v1645 = vrot.slane %v1644, 6
    %1647 = vst [vmem:[#allocation3 + $0x3c] sm:$0x4] %v1645
    %v1648 = vld [vmem:[#allocation2 + $0x37] sm:$0x3]
    %v1649 = vpack.c.bf16 %v1648, %v1648
    %v1651 = vunpack.c.l.b16 %v1649
    %v1652 = vpack.c.b16 %v1651, %v1651
    %v1653 = vrot.slane %v1652, 6
    %1655 = vst [vmem:[#allocation3 + $0x40] sm:$0x4] %v1653
    %v1656 = vld [vmem:[#allocation2 + $0x38] sm:$0x3]
    %v1657 = vpack.c.bf16 %v1656, %v1656
    %v1659 = vunpack.c.l.b16 %v1657
    %v1660 = vpack.c.b16 %v1659, %v1659
    %v1661 = vrot.slane %v1660, 6
    %1663 = vst [vmem:[#allocation3 + $0x44] sm:$0x4] %v1661
    %v1664 = vld [vmem:[#allocation2 + $0x39] sm:$0x3]
    %v1665 = vpack.c.bf16 %v1664, %v1664
    %v1667 = vunpack.c.l.b16 %v1665
    %v1668 = vpack.c.b16 %v1667, %v1667
    %v1669 = vrot.slane %v1668, 6
    %1671 = vst [vmem:[#allocation3 + $0x48] sm:$0x4] %v1669
    %v1672 = vld [vmem:[#allocation2 + $0x3a] sm:$0x3]
    %v1673 = vpack.c.bf16 %v1672, %v1672
    %v1675 = vunpack.c.l.b16 %v1673
    %v1676 = vpack.c.b16 %v1675, %v1675
    %v1677 = vrot.slane %v1676, 6
    %1679 = vst [vmem:[#allocation3 + $0x4c] sm:$0x4] %v1677
    %v1680 = vld [vmem:[#allocation2 + $0x3c] sm:$0x3]
    %v1681 = vpack.c.bf16 %v1680, %v1680
    %v1683 = vunpack.c.l.b16 %v1681
    %v1684 = vpack.c.b16 %v1683, %v1683
    %v1685 = vrot.slane %v1684, 6
    %1687 = vst [vmem:[#allocation3 + $0x50] sm:$0x4] %v1685
    %v1688 = vld [vmem:[#allocation2 + $0x3d] sm:$0x3]
    %v1689 = vpack.c.bf16 %v1688, %v1688
    %v1691 = vunpack.c.l.b16 %v1689
    %v1692 = vpack.c.b16 %v1691, %v1691
    %v1693 = vrot.slane %v1692, 6
    %1695 = vst [vmem:[#allocation3 + $0x54] sm:$0x4] %v1693
    %v1696 = vld [vmem:[#allocation2 + $0x3e] sm:$0x3]
    %v1697 = vpack.c.bf16 %v1696, %v1696
    %v1699 = vunpack.c.l.b16 %v1697
    %v1700 = vpack.c.b16 %v1699, %v1699
    %v1701 = vrot.slane %v1700, 6
    %1703 = vst [vmem:[#allocation3 + $0x58] sm:$0x4] %v1701
    %v1704 = vld [vmem:[#allocation2 + $0x3f] sm:$0x3]
    %v1705 = vpack.c.bf16 %v1704, %v1704
    %v1707 = vunpack.c.l.b16 %v1705
    %v1708 = vpack.c.b16 %v1707, %v1707
    %v1709 = vrot.slane %v1708, 6
    %1711 = vst [vmem:[#allocation3 + $0x5c] sm:$0x4] %v1709
    %v1712 = vld [vmem:[#allocation2 + $0x40] sm:$0x3]
    %v1713 = vpack.c.bf16 %v1712, %v1712
    %v1715 = vunpack.c.l.b16 %v1713
    %v1716 = vpack.c.b16 %v1715, %v1715
    %v1717 = vrot.slane %v1716, 6
    %1719 = vst [vmem:[#allocation3 + $0x60] sm:$0x4] %v1717
    %v1720 = vld [vmem:[#allocation2 + $0x2a] sm:$0x3]
    %v1721 = vpack.c.bf16 %v1720, %v1720
    %v1723 = vunpack.c.l.b16 %v1721
    %v1724 = vpack.c.b16 %v1723, %v1723
    %v1725 = vrot.slane %v1724, 5
    %1727 = vst [vmem:[#allocation3] sm:$0x8] %v1725
    %v1728 = vld [vmem:[#allocation2 + $0x2b] sm:$0x3]
    %v1729 = vpack.c.bf16 %v1728, %v1728
    %v1731 = vunpack.c.l.b16 %v1729
    %v1732 = vpack.c.b16 %v1731, %v1731
    %v1733 = vrot.slane %v1732, 5
    %1735 = vst [vmem:[#allocation3 + $0x4] sm:$0x8] %v1733
    %v1736 = vld [vmem:[#allocation2 + $0x2c] sm:$0x3]
    %v1737 = vpack.c.bf16 %v1736, %v1736
    %v1739 = vunpack.c.l.b16 %v1737
    %v1740 = vpack.c.b16 %v1739, %v1739
    %v1741 = vrot.slane %v1740, 5
    %1743 = vst [vmem:[#allocation3 + $0x8] sm:$0x8] %v1741
    %v1744 = vld [vmem:[#allocation2 + $0x2d] sm:$0x3]
    %v1745 = vpack.c.bf16 %v1744, %v1744
    %v1747 = vunpack.c.l.b16 %v1745
    %v1748 = vpack.c.b16 %v1747, %v1747
    %v1749 = vrot.slane %v1748, 5
    %1751 = vst [vmem:[#allocation3 + $0xc] sm:$0x8] %v1749
    %v1752 = vld [vmem:[#allocation2 + $0x2e] sm:$0x3]
    %v1753 = vpack.c.bf16 %v1752, %v1752
    %v1755 = vunpack.c.l.b16 %v1753
    %v1756 = vpack.c.b16 %v1755, %v1755
    %v1757 = vrot.slane %v1756, 5
    %1759 = vst [vmem:[#allocation3 + $0x10] sm:$0x8] %v1757
    %v1760 = vld [vmem:[#allocation2 + $0x30] sm:$0x3]
    %v1761 = vpack.c.bf16 %v1760, %v1760
    %v1763 = vunpack.c.l.b16 %v1761
    %v1764 = vpack.c.b16 %v1763, %v1763
    %v1765 = vrot.slane %v1764, 5
    %1767 = vst [vmem:[#allocation3 + $0x14] sm:$0x8] %v1765
    %v1768 = vld [vmem:[#allocation2 + $0x31] sm:$0x3]
    %v1769 = vpack.c.bf16 %v1768, %v1768
    %v1771 = vunpack.c.l.b16 %v1769
    %v1772 = vpack.c.b16 %v1771, %v1771
    %v1773 = vrot.slane %v1772, 5
    %1775 = vst [vmem:[#allocation3 + $0x18] sm:$0x8] %v1773
    %v1776 = vld [vmem:[#allocation2 + $0x32] sm:$0x3]
    %v1777 = vpack.c.bf16 %v1776, %v1776
    %v1779 = vunpack.c.l.b16 %v1777
    %v1780 = vpack.c.b16 %v1779, %v1779
    %v1781 = vrot.slane %v1780, 5
    %1783 = vst [vmem:[#allocation3 + $0x1c] sm:$0x8] %v1781
    %v1784 = vld [vmem:[#allocation2 + $0x33] sm:$0x3]
    %v1785 = vpack.c.bf16 %v1784, %v1784
    %v1787 = vunpack.c.l.b16 %v1785
    %v1788 = vpack.c.b16 %v1787, %v1787
    %v1789 = vrot.slane %v1788, 5
    %1791 = vst [vmem:[#allocation3 + $0x20] sm:$0x8] %v1789
    %v1792 = vld [vmem:[#allocation2 + $0x34] sm:$0x3]
    %v1793 = vpack.c.bf16 %v1792, %v1792
    %v1795 = vunpack.c.l.b16 %v1793
    %v1796 = vpack.c.b16 %v1795, %v1795
    %v1797 = vrot.slane %v1796, 5
    %1799 = vst [vmem:[#allocation3 + $0x24] sm:$0x8] %v1797
    %v1800 = vld [vmem:[#allocation2 + $0x36] sm:$0x3]
    %v1801 = vpack.c.bf16 %v1800, %v1800
    %v1803 = vunpack.c.l.b16 %v1801
    %v1804 = vpack.c.b16 %v1803, %v1803
    %v1805 = vrot.slane %v1804, 5
    %1807 = vst [vmem:[#allocation3 + $0x28] sm:$0x8] %v1805
    %v1808 = vld [vmem:[#allocation2 + $0x37] sm:$0x3]
    %v1809 = vpack.c.bf16 %v1808, %v1808
    %v1811 = vunpack.c.l.b16 %v1809
    %v1812 = vpack.c.b16 %v1811, %v1811
    %v1813 = vrot.slane %v1812, 5
    %1815 = vst [vmem:[#allocation3 + $0x2c] sm:$0x8] %v1813
    %v1816 = vld [vmem:[#allocation2 + $0x38] sm:$0x3]
    %v1817 = vpack.c.bf16 %v1816, %v1816
    %v1819 = vunpack.c.l.b16 %v1817
    %v1820 = vpack.c.b16 %v1819, %v1819
    %v1821 = vrot.slane %v1820, 5
    %1823 = vst [vmem:[#allocation3 + $0x30] sm:$0x8] %v1821
    %v1824 = vld [vmem:[#allocation2 + $0x39] sm:$0x3]
    %v1825 = vpack.c.bf16 %v1824, %v1824
    %v1827 = vunpack.c.l.b16 %v1825
    %v1828 = vpack.c.b16 %v1827, %v1827
    %v1829 = vrot.slane %v1828, 5
    %1831 = vst [vmem:[#allocation3 + $0x34] sm:$0x8] %v1829
    %v1832 = vld [vmem:[#allocation2 + $0x3a] sm:$0x3]
    %v1833 = vpack.c.bf16 %v1832, %v1832
    %v1835 = vunpack.c.l.b16 %v1833
    %v1836 = vpack.c.b16 %v1835, %v1835
    %v1837 = vrot.slane %v1836, 5
    %1839 = vst [vmem:[#allocation3 + $0x38] sm:$0x8] %v1837
    %v1840 = vld [vmem:[#allocation2 + $0x3c] sm:$0x3]
    %v1841 = vpack.c.bf16 %v1840, %v1840
    %v1843 = vunpack.c.l.b16 %v1841
    %v1844 = vpack.c.b16 %v1843, %v1843
    %v1845 = vrot.slane %v1844, 5
    %1847 = vst [vmem:[#allocation3 + $0x3c] sm:$0x8] %v1845
    %v1848 = vld [vmem:[#allocation2 + $0x3d] sm:$0x3]
    %v1849 = vpack.c.bf16 %v1848, %v1848
    %v1851 = vunpack.c.l.b16 %v1849
    %v1852 = vpack.c.b16 %v1851, %v1851
    %v1853 = vrot.slane %v1852, 5
    %1855 = vst [vmem:[#allocation3 + $0x40] sm:$0x8] %v1853
    %v1856 = vld [vmem:[#allocation2 + $0x3e] sm:$0x3]
    %v1857 = vpack.c.bf16 %v1856, %v1856
    %v1859 = vunpack.c.l.b16 %v1857
    %v1860 = vpack.c.b16 %v1859, %v1859
    %v1861 = vrot.slane %v1860, 5
    %1863 = vst [vmem:[#allocation3 + $0x44] sm:$0x8] %v1861
    %v1864 = vld [vmem:[#allocation2 + $0x3f] sm:$0x3]
    %v1865 = vpack.c.bf16 %v1864, %v1864
    %v1867 = vunpack.c.l.b16 %v1865
    %v1868 = vpack.c.b16 %v1867, %v1867
    %v1869 = vrot.slane %v1868, 5
    %1871 = vst [vmem:[#allocation3 + $0x48] sm:$0x8] %v1869
    %v1872 = vld [vmem:[#allocation2 + $0x40] sm:$0x3]
    %v1873 = vpack.c.bf16 %v1872, %v1872
    %v1875 = vunpack.c.l.b16 %v1873
    %v1876 = vpack.c.b16 %v1875, %v1875
    %v1877 = vrot.slane %v1876, 5
    %1879 = vst [vmem:[#allocation3 + $0x4c] sm:$0x8] %v1877
    %v1880 = vld [vmem:[#allocation2 + $0x42] sm:$0x3]
    %v1881 = vpack.c.bf16 %v1880, %v1880
    %v1883 = vunpack.c.l.b16 %v1881
    %v1884 = vpack.c.b16 %v1883, %v1883
    %v1885 = vrot.slane %v1884, 5
    %1887 = vst [vmem:[#allocation3 + $0x50] sm:$0x8] %v1885
    %v1888 = vld [vmem:[#allocation2 + $0x43] sm:$0x3]
    %v1889 = vpack.c.bf16 %v1888, %v1888
    %v1891 = vunpack.c.l.b16 %v1889
    %v1892 = vpack.c.b16 %v1891, %v1891
    %v1893 = vrot.slane %v1892, 5
    %1895 = vst [vmem:[#allocation3 + $0x54] sm:$0x8] %v1893
    %v1896 = vld [vmem:[#allocation2 + $0x44] sm:$0x3]
    %v1897 = vpack.c.bf16 %v1896, %v1896
    %v1899 = vunpack.c.l.b16 %v1897
    %v1900 = vpack.c.b16 %v1899, %v1899
    %v1901 = vrot.slane %v1900, 5
    %1903 = vst [vmem:[#allocation3 + $0x58] sm:$0x8] %v1901
    %v1904 = vld [vmem:[#allocation2 + $0x45] sm:$0x3]
    %v1905 = vpack.c.bf16 %v1904, %v1904
    %v1907 = vunpack.c.l.b16 %v1905
    %v1908 = vpack.c.b16 %v1907, %v1907
    %v1909 = vrot.slane %v1908, 5
    %1911 = vst [vmem:[#allocation3 + $0x5c] sm:$0x8] %v1909
    %v1912 = vld [vmem:[#allocation2 + $0x46] sm:$0x3]
    %v1913 = vpack.c.bf16 %v1912, %v1912
    %v1915 = vunpack.c.l.b16 %v1913
    %v1916 = vpack.c.b16 %v1915, %v1915
    %v1917 = vrot.slane %v1916, 5
    %1919 = vst [vmem:[#allocation3 + $0x60] sm:$0x8] %v1917
    %v1920 = vld [vmem:[#allocation3] sm:$0xff]
    %v1921 = vld [vmem:[#allocation3 + $0x8] sm:$0xff]
    %v1922 = vld [vmem:[#allocation3 + $0x10] sm:$0xff]
    %v1923 = vld [vmem:[#allocation3 + $0x18] sm:$0xff]
    %v1924 = vld [vmem:[#allocation3 + $0x20] sm:$0xff]
    %v1925 = vld [vmem:[#allocation3 + $0x28] sm:$0xff]
    %v1926 = vld [vmem:[#allocation3 + $0x30] sm:$0xff]
    %v1927 = vld [vmem:[#allocation3 + $0x38] sm:$0xff]
    %v1928 = vld [vmem:[#allocation3 + $0x40] sm:$0xff]
    %v1929 = vld [vmem:[#allocation3 + $0x48] sm:$0xff]
    %v1930 = vld [vmem:[#allocation3 + $0x50] sm:$0xff]
    %v1931 = vld [vmem:[#allocation3 + $0x58] sm:$0xff]
    %v1932 = vld [vmem:[#allocation3 + $0x60] sm:$0xf]
    %v1933 = vld [vmem:[#allocation4] sm:$0xff]
    %v1934 = vld [vmem:[#allocation4 + $0x8] sm:$0xff]
    %v1935 = vld [vmem:[#allocation4 + $0x10] sm:$0xff]
    %v1936 = vld [vmem:[#allocation4 + $0x18] sm:$0xff]
    %v1937 = vld [vmem:[#allocation4 + $0x20] sm:$0xff]
    %v1938 = vld [vmem:[#allocation4 + $0x28] sm:$0xff]
    %v1939 = vld [vmem:[#allocation4 + $0x30] sm:$0xff]
    %v1940 = vld [vmem:[#allocation4 + $0x38] sm:$0xff]
    %v1941 = vld [vmem:[#allocation4 + $0x40] sm:$0xff]
    %v1942 = vld [vmem:[#allocation4 + $0x48] sm:$0xff]
    %v1943 = vld [vmem:[#allocation4 + $0x50] sm:$0xff]
    %v1944 = vld [vmem:[#allocation4 + $0x58] sm:$0xff]
    %v1945 = vld [vmem:[#allocation4 + $0x60] sm:$0xff]
    %v1946 = vld [vmem:[#allocation4 + $0x68] sm:$0xff]
    %v1947 = vld [vmem:[#allocation4 + $0x70] sm:$0xff]
    %v1948 = vld [vmem:[#allocation4 + $0x78] sm:$0xff]
    %v1949 = vld [vmem:[#allocation4 + $0x80] sm:$0xff]
    %v1950 = vld [vmem:[#allocation4 + $0x88] sm:$0xff]
    %v1951 = vld [vmem:[#allocation4 + $0x90] sm:$0xff]
    %v1952 = vld [vmem:[#allocation4 + $0x98] sm:$0xff]
    %v1953 = vld [vmem:[#allocation4 + $0xa0] sm:$0xff]
    %v1954 = vld [vmem:[#allocation4 + $0xa8] sm:$0xff]
    %v1955 = vld [vmem:[#allocation4 + $0xb0] sm:$0xff]
    %v1956 = vld [vmem:[#allocation4 + $0xb8] sm:$0xff]
    %v1957 = vld [vmem:[#allocation4 + $0xc0] sm:$0xff]
    %v1958 = vld [vmem:[#allocation4 + $0xc8] sm:$0xff]
    %v1959 = vld [vmem:[#allocation4 + $0xd0] sm:$0xff]
    %v1960 = vld [vmem:[#allocation4 + $0xd8] sm:$0xff]
    %v1961 = vld [vmem:[#allocation4 + $0xe0] sm:$0xff]
    %v1962 = vld [vmem:[#allocation4 + $0xe8] sm:$0xff]
    %v1963 = vld [vmem:[#allocation4 + $0xf0] sm:$0xff]
    %v1964 = vld [vmem:[#allocation4 + $0xf8] sm:$0xff]
    %v1965 = vld [vmem:[#allocation4 + $0x100] sm:$0xff]
    %v1966 = vld [vmem:[#allocation4 + $0x108] sm:$0xff]
    %v1967 = vld [vmem:[#allocation4 + $0x110] sm:$0xff]
    %v1968 = vld [vmem:[#allocation4 + $0x118] sm:$0xff]
    %v1969 = vld [vmem:[#allocation4 + $0x120] sm:$0xff]
    %v1970 = vld [vmem:[#allocation4 + $0x128] sm:$0xff]
    %v1971 = vld [vmem:[#allocation4 + $0x130] sm:$0xff]
    %v1972 = vld [vmem:[#allocation4 + $0x138] sm:$0xff]
    %v1973 = vld [vmem:[#allocation4 + $0x140] sm:$0xff]
    %v1974 = vld [vmem:[#allocation4 + $0x148] sm:$0xff]
    %v1975 = vld [vmem:[#allocation4 + $0x150] sm:$0xff]
    %v1976 = vld [vmem:[#allocation4 + $0x158] sm:$0xff]
    %v1977 = vld [vmem:[#allocation4 + $0x160] sm:$0xff]
    %v1978 = vld [vmem:[#allocation4 + $0x168] sm:$0xff]
    %v1979 = vld [vmem:[#allocation4 + $0x170] sm:$0xff]
    %v1980 = vld [vmem:[#allocation4 + $0x178] sm:$0xff]
    %v1981 = vld [vmem:[#allocation4 + $0x180] sm:$0xff]
    %v1982 = vld [vmem:[#allocation4 + $0x188] sm:$0xff]
    %v1983 = vld [vmem:[#allocation4 + $0x190] sm:$0xff]
    %v1984 = vld [vmem:[#allocation4 + $0x198] sm:$0xff]
    %v1985 = vld [vmem:[#allocation4 + $0x1a0] sm:$0xff]
    %v1986 = vld [vmem:[#allocation4 + $0x1a8] sm:$0xff]
    %v1987 = vld [vmem:[#allocation4 + $0x1b0] sm:$0xff]
    %v1988 = vld [vmem:[#allocation4 + $0x1b8] sm:$0xff]
    %v1989 = vld [vmem:[#allocation4 + $0x1c0] sm:$0xff]
    %v1990 = vld [vmem:[#allocation4 + $0x1c8] sm:$0xff]
    %v1991 = vld [vmem:[#allocation4 + $0x1d0] sm:$0xff]
    %v1992 = vld [vmem:[#allocation4 + $0x1d8] sm:$0xff]
    %v1993 = vld [vmem:[#allocation4 + $0x1e0] sm:$0xff]
    %v1994 = vld [vmem:[#allocation4 + $0x1e8] sm:$0xff]
    %v1995 = vld [vmem:[#allocation4 + $0x1f0] sm:$0xff]
    %v1996 = vld [vmem:[#allocation4 + $0x1f8] sm:$0xff]
    %v1997 = vld [vmem:[#allocation4 + $0x200] sm:$0xff]
    %v1998 = vld [vmem:[#allocation4 + $0x208] sm:$0xff]
    %v1999 = vld [vmem:[#allocation4 + $0x210] sm:$0xff]
    %v2000 = vld [vmem:[#allocation4 + $0x218] sm:$0xff]
    %v2001 = vld [vmem:[#allocation4 + $0x220] sm:$0xff]
    %v2002 = vld [vmem:[#allocation4 + $0x228] sm:$0xff]
    %v2003 = vld [vmem:[#allocation4 + $0x230] sm:$0xff]
    %v2004 = vld [vmem:[#allocation4 + $0x238] sm:$0xff]
    %v2005 = vld [vmem:[#allocation4 + $0x240] sm:$0xff]
    %v2006 = vld [vmem:[#allocation4 + $0x248] sm:$0xff]
    %v2007 = vld [vmem:[#allocation4 + $0x250] sm:$0xff]
    %v2008 = vld [vmem:[#allocation4 + $0x258] sm:$0xff]
    %v2009 = vld [vmem:[#allocation4 + $0x260] sm:$0xff]
    %v2010 = vld [vmem:[#allocation4 + $0x268] sm:$0xff]
    %v2011 = vld [vmem:[#allocation4 + $0x270] sm:$0xff]
    %v2012 = vld [vmem:[#allocation4 + $0x278] sm:$0xff]
    %v2013 = vld [vmem:[#allocation4 + $0x280] sm:$0xff]
    %v2014 = vld [vmem:[#allocation4 + $0x288] sm:$0xff]
    %v2015 = vld [vmem:[#allocation4 + $0x290] sm:$0xff]
    %v2016 = vld [vmem:[#allocation4 + $0x298] sm:$0xff]
    %v2017 = vld [vmem:[#allocation4 + $0x2a0] sm:$0xff]
    %v2018 = vld [vmem:[#allocation4 + $0x2a8] sm:$0xff]
    %v2019 = vld [vmem:[#allocation4 + $0x2b0] sm:$0xff]
    %v2020 = vld [vmem:[#allocation4 + $0x2b8] sm:$0xff]
    %v2021 = vld [vmem:[#allocation4 + $0x2c0] sm:$0xff]
    %v2022 = vld [vmem:[#allocation4 + $0x2c8] sm:$0xff]
    %v2023 = vld [vmem:[#allocation4 + $0x2d0] sm:$0xff]
    %v2024 = vld [vmem:[#allocation4 + $0x2d8] sm:$0xff]
    %v2025 = vld [vmem:[#allocation4 + $0x2e0] sm:$0xff]
    %v2026 = vld [vmem:[#allocation4 + $0x2e8] sm:$0xff]
    %v2027 = vld [vmem:[#allocation4 + $0x2f0] sm:$0xff]
    %v2028 = vld [vmem:[#allocation4 + $0x2f8] sm:$0xff]
    %v2029 = vld [vmem:[#allocation4 + $0x300] sm:$0xff]
    %v2030 = vld [vmem:[#allocation4 + $0x308] sm:$0xff]
    %v2031 = vld [vmem:[#allocation4 + $0x310] sm:$0xff]
    %v2032 = vld [vmem:[#allocation4 + $0x318] sm:$0xff]
    %v2033 = vld [vmem:[#allocation4 + $0x320] sm:$0xff]
    %v2034 = vld [vmem:[#allocation4 + $0x328] sm:$0xff]
    %v2035 = vld [vmem:[#allocation4 + $0x330] sm:$0xff]
    %v2036 = vld [vmem:[#allocation4 + $0x338] sm:$0xff]
    %v2037 = vld [vmem:[#allocation4 + $0x340] sm:$0xff]
    %v2038 = vld [vmem:[#allocation4 + $0x348] sm:$0xff]
    %v2039 = vld [vmem:[#allocation4 + $0x350] sm:$0xff]
    %v2040 = vld [vmem:[#allocation4 + $0x358] sm:$0xff]
    %v2041 = vld [vmem:[#allocation4 + $0x360] sm:$0xff]
    %v2042 = vld [vmem:[#allocation4 + $0x368] sm:$0xff]
    %v2043 = vld [vmem:[#allocation4 + $0x370] sm:$0xff]
    %v2044 = vld [vmem:[#allocation4 + $0x378] sm:$0xff]
    %v2045 = vld [vmem:[#allocation4 + $0x380] sm:$0xff]
    %v2046 = vld [vmem:[#allocation4 + $0x388] sm:$0xff]
    %v2047 = vld [vmem:[#allocation4 + $0x390] sm:$0xff]
    %v2048 = vld [vmem:[#allocation4 + $0x398] sm:$0xff]
    %v2049 = vld [vmem:[#allocation4 + $0x3a0] sm:$0xff]
    %v2050 = vld [vmem:[#allocation4 + $0x3a8] sm:$0xff]
    %v2051 = vld [vmem:[#allocation4 + $0x3b0] sm:$0xff]
    %v2052 = vld [vmem:[#allocation4 + $0x3b8] sm:$0xff]
    %v2053 = vld [vmem:[#allocation4 + $0x3c0] sm:$0xff]
    %v2054 = vld [vmem:[#allocation4 + $0x3c8] sm:$0xff]
    %v2055 = vld [vmem:[#allocation4 + $0x3d0] sm:$0xff]
    %v2056 = vld [vmem:[#allocation4 + $0x3d8] sm:$0xff]
    %v2057 = vld [vmem:[#allocation4 + $0x3e0] sm:$0xff]
    %v2058 = vld [vmem:[#allocation4 + $0x3e8] sm:$0xff]
    %v2059 = vld [vmem:[#allocation4 + $0x3f0] sm:$0xff]
    %v2060 = vld [vmem:[#allocation4 + $0x3f8] sm:$0xff]
    %v2061 = vld [vmem:[#allocation4 + $0x400] sm:$0xff]
    %v2062 = vld [vmem:[#allocation4 + $0x408] sm:$0xff]
    %v2063 = vld [vmem:[#allocation4 + $0x410] sm:$0xff]
    %v2064 = vld [vmem:[#allocation4 + $0x418] sm:$0xff]
    %v2065 = vld [vmem:[#allocation4 + $0x420] sm:$0xff]
    %v2066 = vld [vmem:[#allocation4 + $0x428] sm:$0xff]
    %v2067 = vld [vmem:[#allocation4 + $0x430] sm:$0xff]
    %v2068 = vld [vmem:[#allocation4 + $0x438] sm:$0xff]
    %v2069 = vld [vmem:[#allocation4 + $0x440] sm:$0xff]
    %v2070 = vld [vmem:[#allocation4 + $0x448] sm:$0xff]
    %v2071 = vld [vmem:[#allocation4 + $0x450] sm:$0xff]
    %v2072 = vld [vmem:[#allocation4 + $0x458] sm:$0xff]
    %v2073 = vld [vmem:[#allocation4 + $0x460] sm:$0xff]
    %v2074 = vld [vmem:[#allocation4 + $0x468] sm:$0xff]
    %v2075 = vld [vmem:[#allocation4 + $0x470] sm:$0xff]
    %v2076 = vld [vmem:[#allocation4 + $0x478] sm:$0xff]
    %v2077 = vld [vmem:[#allocation4 + $0x480] sm:$0xff]
    %v2078 = vld [vmem:[#allocation4 + $0x488] sm:$0xff]
    %v2079 = vld [vmem:[#allocation4 + $0x490] sm:$0xff]
    %v2080 = vld [vmem:[#allocation4 + $0x498] sm:$0xff]
    %v2081 = vld [vmem:[#allocation4 + $0x4a0] sm:$0xff]
    %v2082 = vld [vmem:[#allocation4 + $0x4a8] sm:$0xff]
    %v2083 = vld [vmem:[#allocation4 + $0x4b0] sm:$0xff]
    %v2084 = vld [vmem:[#allocation4 + $0x4b8] sm:$0xff]
    %v2085 = vld [vmem:[#allocation4 + $0x4c0] sm:$0xff]
    %v2086 = vld [vmem:[#allocation4 + $0x4c8] sm:$0xff]
    %v2087 = vld [vmem:[#allocation4 + $0x4d0] sm:$0xff]
    %v2088 = vld [vmem:[#allocation4 + $0x4d8] sm:$0xff]
    %v2089 = vld [vmem:[#allocation4 + $0x4e0] sm:$0xff]
    %v2090 = vld [vmem:[#allocation4 + $0x4e8] sm:$0xff]
    %v2091 = vld [vmem:[#allocation4 + $0x4f0] sm:$0xff]
    %v2092 = vld [vmem:[#allocation4 + $0x4f8] sm:$0xff]
    %v2093 = vld [vmem:[#allocation4 + $0x500] sm:$0xff]
    %v2094 = vld [vmem:[#allocation4 + $0x508] sm:$0xff]
    %v2095 = vld [vmem:[#allocation4 + $0x510] sm:$0xff]
    %v2096 = vld [vmem:[#allocation4 + $0x518] sm:$0xff]
    %v2097 = vld [vmem:[#allocation4 + $0x520] sm:$0xff]
    %v2098 = vld [vmem:[#allocation4 + $0x528] sm:$0xff]
    %v2099 = vld [vmem:[#allocation4 + $0x530] sm:$0xff]
    %v2100 = vld [vmem:[#allocation4 + $0x538] sm:$0xff]
    %v2101 = vld [vmem:[#allocation4 + $0x540] sm:$0xff]
    %v2102 = vld [vmem:[#allocation4 + $0x548] sm:$0xff]
    %v2103 = vld [vmem:[#allocation4 + $0x550] sm:$0xff]
    %v2104 = vld [vmem:[#allocation4 + $0x558] sm:$0xff]
    %v2105 = vld [vmem:[#allocation4 + $0x560] sm:$0xff]
    %v2106 = vld [vmem:[#allocation4 + $0x568] sm:$0xff]
    %v2107 = vld [vmem:[#allocation4 + $0x570] sm:$0xff]
    %v2108 = vld [vmem:[#allocation4 + $0x578] sm:$0xff]
    %v2109 = vld [vmem:[#allocation4 + $0x580] sm:$0xff]
    %v2110 = vld [vmem:[#allocation4 + $0x588] sm:$0xff]
    %v2111 = vld [vmem:[#allocation4 + $0x590] sm:$0xff]
    %v2112 = vld [vmem:[#allocation4 + $0x598] sm:$0xff]
    %v2113 = vld [vmem:[#allocation4 + $0x5a0] sm:$0xff]
    %v2114 = vld [vmem:[#allocation4 + $0x5a8] sm:$0xff]
    %v2115 = vld [vmem:[#allocation4 + $0x5b0] sm:$0xff]
    %v2116 = vld [vmem:[#allocation4 + $0x5b8] sm:$0xff]
    %v2117 = vld [vmem:[#allocation4 + $0x5c0] sm:$0xff]
    %v2118 = vld [vmem:[#allocation4 + $0x5c8] sm:$0xff]
    %v2119 = vld [vmem:[#allocation4 + $0x5d0] sm:$0xff]
    %v2120 = vld [vmem:[#allocation4 + $0x5d8] sm:$0xff]
    %v2121 = vld [vmem:[#allocation4 + $0x5e0] sm:$0xff]
    %v2122 = vld [vmem:[#allocation4 + $0x5e8] sm:$0xff]
    %v2123 = vld [vmem:[#allocation4 + $0x5f0] sm:$0xff]
    %v2124 = vld [vmem:[#allocation4 + $0x5f8] sm:$0xff]
    %v2125 = vld [vmem:[#allocation4 + $0x600] sm:$0xff]
    %v2126 = vld [vmem:[#allocation4 + $0x608] sm:$0xff]
    %v2127 = vld [vmem:[#allocation4 + $0x610] sm:$0xff]
    %v2128 = vld [vmem:[#allocation4 + $0x618] sm:$0xff]
    %v2129 = vld [vmem:[#allocation4 + $0x620] sm:$0xff]
    %v2130 = vld [vmem:[#allocation4 + $0x628] sm:$0xff]
    %v2131 = vld [vmem:[#allocation4 + $0x630] sm:$0xff]
    %v2132 = vld [vmem:[#allocation4 + $0x638] sm:$0xff]
    %v2146 = vunpack.c.l.b16 %v1920
    %v2147 = vunpack.c.h.b16 %v1920
    %v2148 = vunpack.c.l.b16 %v1921
    %v2149 = vunpack.c.h.b16 %v1921
    %v2150 = vunpack.c.l.b16 %v1922
    %v2151 = vunpack.c.h.b16 %v1922
    %v2152 = vunpack.c.l.b16 %v1923
    %v2153 = vunpack.c.h.b16 %v1923
    %v2154 = vunpack.c.l.b16 %v1924
    %v2155 = vunpack.c.h.b16 %v1924
    %v2156 = vunpack.c.l.b16 %v1925
    %v2157 = vunpack.c.h.b16 %v1925
    %v2158 = vunpack.c.l.b16 %v1926
    %v2159 = vunpack.c.h.b16 %v1926
    %v2160 = vunpack.c.l.b16 %v1927
    %v2161 = vunpack.c.h.b16 %v1927
    %v2162 = vunpack.c.l.b16 %v1928
    %v2163 = vunpack.c.h.b16 %v1928
    %v2164 = vunpack.c.l.b16 %v1929
    %v2165 = vunpack.c.h.b16 %v1929
    %v2166 = vunpack.c.l.b16 %v1930
    %v2167 = vunpack.c.h.b16 %v1930
    %v2168 = vunpack.c.l.b16 %v1931
    %v2169 = vunpack.c.h.b16 %v1931
    %v2170 = vunpack.c.l.b16 %v1932
    %v2171 = vpack.c.b16 %v2146, %v2146
    %v2172 = vpack.c.b16 %v2147, %v2147
    %v2173 = vpack.c.b16 %v2148, %v2148
    %v2174 = vpack.c.b16 %v2149, %v2149
    %v2175 = vpack.c.b16 %v2150, %v2150
    %v2176 = vpack.c.b16 %v2151, %v2151
    %v2177 = vpack.c.b16 %v2152, %v2152
    %v2178 = vpack.c.b16 %v2153, %v2153
    %v2179 = vpack.c.b16 %v2154, %v2154
    %v2180 = vpack.c.b16 %v2155, %v2155
    %v2181 = vpack.c.b16 %v2156, %v2156
    %v2182 = vpack.c.b16 %v2157, %v2157
    %v2183 = vpack.c.b16 %v2158, %v2158
    %v2184 = vpack.c.b16 %v2159, %v2159
    %v2185 = vpack.c.b16 %v2160, %v2160
    %v2186 = vpack.c.b16 %v2161, %v2161
    %v2187 = vpack.c.b16 %v2162, %v2162
    %v2188 = vpack.c.b16 %v2163, %v2163
    %v2189 = vpack.c.b16 %v2164, %v2164
    %v2190 = vpack.c.b16 %v2165, %v2165
    %v2191 = vpack.c.b16 %v2166, %v2166
    %v2192 = vpack.c.b16 %v2167, %v2167
    %v2193 = vpack.c.b16 %v2168, %v2168
    %v2194 = vpack.c.b16 %v2169, %v2169
    %v2195 = vpack.c.b16 %v2170, %v2170
    %2221 = vmatprep.subr.bf16.mxu0 0
    %2222 = vmatpush1.bf16.msra.mxu0 %v1933
    %2223 = vmatprep.subr.bf16.mxu0 0
    %2224 = vmatpush1.bf16.msra.mxu0 %v1934
    %2225 = vmatprep.subr.bf16.mxu0 0
    %2226 = vmatpush1.bf16.msra.mxu0 %v1935
    %2227 = vmatprep.subr.bf16.mxu0 0
    %2228 = vmatpush1.bf16.msra.mxu0 %v1936
    %2229 = vmatprep.subr.bf16.mxu0 0
    %2230 = vmatpush1.bf16.msra.mxu0 %v1937
    %2231 = vmatprep.subr.bf16.mxu0 0
    %2232 = vmatpush1.bf16.msra.mxu0 %v1938
    %2233 = vmatprep.subr.bf16.mxu0 0
    %2234 = vmatpush1.bf16.msra.mxu0 %v1939
    %2235 = vmatprep.subr.bf16.mxu0 0
    %2236 = vmatpush1.bf16.msra.mxu0 %v1940
    %2237 = vmatprep.subr.bf16.mxu0 0
    %2238 = vmatpush1.bf16.msra.mxu0 %v1941
    %2239 = vmatprep.subr.bf16.mxu0 0
    %2240 = vmatpush1.bf16.msra.mxu0 %v1942
    %2241 = vmatprep.subr.bf16.mxu0 0
    %2242 = vmatpush1.bf16.msra.mxu0 %v1943
    %2243 = vmatprep.subr.bf16.mxu0 0
    %2244 = vmatpush1.bf16.msra.mxu0 %v1944
    %2245 = vmatprep.subr.bf16.mxu0 0
    %2246 = vmatpush1.bf16.msra.mxu0 %v1945
    %2247 = vmatprep.subr.bf16.mxu0 0
    %2248 = vmatpush1.bf16.msra.mxu0 %v1946
    %2249 = vmatprep.subr.bf16.mxu0 0
    %2250 = vmatpush1.bf16.msra.mxu0 %v1947
    %2251 = vmatprep.subr.bf16.mxu0 0
    %2252 = vmatpush1.bf16.msra.mxu0 %v1948
    %2253 = vmatprep.mubr.bf16.mxu0 %v2172
    %2254 = vmatmul.mubr.bf16.gmra.mrb[0].mxu0 %v2171
    %v2255 = vpop.f32.mrb[0].mxu0
    %v2256 = vadd.f32 0.0, %v2255
    %v2257 = vpop.f32.mrb[0].mxu0
    %v2258 = vpop.f32.mrb[0].mxu0
    %v2259 = vpop.f32.mrb[0].mxu0
    %2260 = vdwg.mxu0
    %2261 = vmatprep.subr.bf16.mxu0 0
    %2262 = vmatpush1.bf16.msra.mxu0 %v1949
    %2263 = vmatprep.subr.bf16.mxu0 0
    %2264 = vmatpush1.bf16.msra.mxu0 %v1950
    %2265 = vmatprep.subr.bf16.mxu0 0
    %2266 = vmatpush1.bf16.msra.mxu0 %v1951
    %2267 = vmatprep.subr.bf16.mxu0 0
    %2268 = vmatpush1.bf16.msra.mxu0 %v1952
    %2269 = vmatprep.subr.bf16.mxu0 0
    %2270 = vmatpush1.bf16.msra.mxu0 %v1953
    %2271 = vmatprep.subr.bf16.mxu0 0
    %2272 = vmatpush1.bf16.msra.mxu0 %v1954
    %2273 = vmatprep.subr.bf16.mxu0 0
    %2274 = vmatpush1.bf16.msra.mxu0 %v1955
    %2275 = vmatprep.subr.bf16.mxu0 0
    %2276 = vmatpush1.bf16.msra.mxu0 %v1956
    %2277 = vmatprep.subr.bf16.mxu0 0
    %2278 = vmatpush1.bf16.msra.mxu0 %v1957
    %2279 = vmatprep.subr.bf16.mxu0 0
    %2280 = vmatpush1.bf16.msra.mxu0 %v1958
    %2281 = vmatprep.subr.bf16.mxu0 0
    %2282 = vmatpush1.bf16.msra.mxu0 %v1959
    %2283 = vmatprep.subr.bf16.mxu0 0
    %2284 = vmatpush1.bf16.msra.mxu0 %v1960
    %2285 = vmatprep.subr.bf16.mxu0 0
    %2286 = vmatpush1.bf16.msra.mxu0 %v1961
    %2287 = vmatprep.subr.bf16.mxu0 0
    %2288 = vmatpush1.bf16.msra.mxu0 %v1962
    %2289 = vmatprep.subr.bf16.mxu0 0
    %2290 = vmatpush1.bf16.msra.mxu0 %v1963
    %2291 = vmatprep.subr.bf16.mxu0 0
    %2292 = vmatpush1.bf16.msra.mxu0 %v1964
    %2293 = vmatprep.mubr.bf16.mxu0 %v2174
    %2294 = vmatmul.mubr.bf16.gmra.mrb[0].mxu0 %v2173
    %v2295 = vpop.f32.mrb[0].mxu0
    %v2296 = vadd.f32 %v2256, %v2295
    %v2297 = vpop.f32.mrb[0].mxu0
    %v2298 = vpop.f32.mrb[0].mxu0
    %v2299 = vpop.f32.mrb[0].mxu0
    %2300 = vdwg.mxu0
    %2301 = vmatprep.subr.bf16.mxu0 0
    %2302 = vmatpush1.bf16.msra.mxu0 %v1965
    %2303 = vmatprep.subr.bf16.mxu0 0
    %2304 = vmatpush1.bf16.msra.mxu0 %v1966
    %2305 = vmatprep.subr.bf16.mxu0 0
    %2306 = vmatpush1.bf16.msra.mxu0 %v1967
    %2307 = vmatprep.subr.bf16.mxu0 0
    %2308 = vmatpush1.bf16.msra.mxu0 %v1968
    %2309 = vmatprep.subr.bf16.mxu0 0
    %2310 = vmatpush1.bf16.msra.mxu0 %v1969
    %2311 = vmatprep.subr.bf16.mxu0 0
    %2312 = vmatpush1.bf16.msra.mxu0 %v1970
    %2313 = vmatprep.subr.bf16.mxu0 0
    %2314 = vmatpush1.bf16.msra.mxu0 %v1971
    %2315 = vmatprep.subr.bf16.mxu0 0
    %2316 = vmatpush1.bf16.msra.mxu0 %v1972
    %2317 = vmatprep.subr.bf16.mxu0 0
    %2318 = vmatpush1.bf16.msra.mxu0 %v1973
    %2319 = vmatprep.subr.bf16.mxu0 0
    %2320 = vmatpush1.bf16.msra.mxu0 %v1974
    %2321 = vmatprep.subr.bf16.mxu0 0
    %2322 = vmatpush1.bf16.msra.mxu0 %v1975
    %2323 = vmatprep.subr.bf16.mxu0 0
    %2324 = vmatpush1.bf16.msra.mxu0 %v1976
    %2325 = vmatprep.subr.bf16.mxu0 0
    %2326 = vmatpush1.bf16.msra.mxu0 %v1977
    %2327 = vmatprep.subr.bf16.mxu0 0
    %2328 = vmatpush1.bf16.msra.mxu0 %v1978
    %2329 = vmatprep.subr.bf16.mxu0 0
    %2330 = vmatpush1.bf16.msra.mxu0 %v1979
    %2331 = vmatprep.subr.bf16.mxu0 0
    %2332 = vmatpush1.bf16.msra.mxu0 %v1980
    %2333 = vmatprep.mubr.bf16.mxu0 %v2176
    %2334 = vmatmul.mubr.bf16.gmra.mrb[0].mxu0 %v2175
    %v2335 = vpop.f32.mrb[0].mxu0
    %v2336 = vadd.f32 %v2296, %v2335
    %v2337 = vpop.f32.mrb[0].mxu0
    %v2338 = vpop.f32.mrb[0].mxu0
    %v2339 = vpop.f32.mrb[0].mxu0
    %2340 = vdwg.mxu0
    %2341 = vmatprep.subr.bf16.mxu0 0
    %2342 = vmatpush1.bf16.msra.mxu0 %v1981
    %2343 = vmatprep.subr.bf16.mxu0 0
    %2344 = vmatpush1.bf16.msra.mxu0 %v1982
    %2345 = vmatprep.subr.bf16.mxu0 0
    %2346 = vmatpush1.bf16.msra.mxu0 %v1983
    %2347 = vmatprep.subr.bf16.mxu0 0
    %2348 = vmatpush1.bf16.msra.mxu0 %v1984
    %2349 = vmatprep.subr.bf16.mxu0 0
    %2350 = vmatpush1.bf16.msra.mxu0 %v1985
    %2351 = vmatprep.subr.bf16.mxu0 0
    %2352 = vmatpush1.bf16.msra.mxu0 %v1986
    %2353 = vmatprep.subr.bf16.mxu0 0
    %2354 = vmatpush1.bf16.msra.mxu0 %v1987
    %2355 = vmatprep.subr.bf16.mxu0 0
    %2356 = vmatpush1.bf16.msra.mxu0 %v1988
    %2357 = vmatprep.subr.bf16.mxu0 0
    %2358 = vmatpush1.bf16.msra.mxu0 %v1989
    %2359 = vmatprep.subr.bf16.mxu0 0
    %2360 = vmatpush1.bf16.msra.mxu0 %v1990
    %2361 = vmatprep.subr.bf16.mxu0 0
    %2362 = vmatpush1.bf16.msra.mxu0 %v1991
    %2363 = vmatprep.subr.bf16.mxu0 0
    %2364 = vmatpush1.bf16.msra.mxu0 %v1992
    %2365 = vmatprep.subr.bf16.mxu0 0
    %2366 = vmatpush1.bf16.msra.mxu0 %v1993
    %2367 = vmatprep.subr.bf16.mxu0 0
    %2368 = vmatpush1.bf16.msra.mxu0 %v1994
    %2369 = vmatprep.subr.bf16.mxu0 0
    %2370 = vmatpush1.bf16.msra.mxu0 %v1995
    %2371 = vmatprep.subr.bf16.mxu0 0
    %2372 = vmatpush1.bf16.msra.mxu0 %v1996
    %2373 = vmatprep.mubr.bf16.mxu0 %v2178
    %2374 = vmatmul.mubr.bf16.gmra.mrb[0].mxu0 %v2177
    %v2375 = vpop.f32.mrb[0].mxu0
    %v2376 = vadd.f32 %v2336, %v2375
    %v2377 = vpop.f32.mrb[0].mxu0
    %v2378 = vpop.f32.mrb[0].mxu0
    %v2379 = vpop.f32.mrb[0].mxu0
    %2380 = vdwg.mxu0
    %2381 = vmatprep.subr.bf16.mxu0 0
    %2382 = vmatpush1.bf16.msra.mxu0 %v1997
    %2383 = vmatprep.subr.bf16.mxu0 0
    %2384 = vmatpush1.bf16.msra.mxu0 %v1998
    %2385 = vmatprep.subr.bf16.mxu0 0
    %2386 = vmatpush1.bf16.msra.mxu0 %v1999
    %2387 = vmatprep.subr.bf16.mxu0 0
    %2388 = vmatpush1.bf16.msra.mxu0 %v2000
    %2389 = vmatprep.subr.bf16.mxu0 0
    %2390 = vmatpush1.bf16.msra.mxu0 %v2001
    %2391 = vmatprep.subr.bf16.mxu0 0
    %2392 = vmatpush1.bf16.msra.mxu0 %v2002
    %2393 = vmatprep.subr.bf16.mxu0 0
    %2394 = vmatpush1.bf16.msra.mxu0 %v2003
    %2395 = vmatprep.subr.bf16.mxu0 0
    %2396 = vmatpush1.bf16.msra.mxu0 %v2004
    %2397 = vmatprep.subr.bf16.mxu0 0
    %2398 = vmatpush1.bf16.msra.mxu0 %v2005
    %2399 = vmatprep.subr.bf16.mxu0 0
    %2400 = vmatpush1.bf16.msra.mxu0 %v2006
    %2401 = vmatprep.subr.bf16.mxu0 0
    %2402 = vmatpush1.bf16.msra.mxu0 %v2007
    %2403 = vmatprep.subr.bf16.mxu0 0
    %2404 = vmatpush1.bf16.msra.mxu0 %v2008
    %2405 = vmatprep.subr.bf16.mxu0 0
    %2406 = vmatpush1.bf16.msra.mxu0 %v2009
    %2407 = vmatprep.subr.bf16.mxu0 0
    %2408 = vmatpush1.bf16.msra.mxu0 %v2010
    %2409 = vmatprep.subr.bf16.mxu0 0
    %2410 = vmatpush1.bf16.msra.mxu0 %v2011
    %2411 = vmatprep.subr.bf16.mxu0 0
    %2412 = vmatpush1.bf16.msra.mxu0 %v2012
    %2413 = vmatprep.mubr.bf16.mxu0 %v2180
    %2414 = vmatmul.mubr.bf16.gmra.mrb[0].mxu0 %v2179
    %v2415 = vpop.f32.mrb[0].mxu0
    %v2416 = vadd.f32 %v2376, %v2415
    %v2417 = vpop.f32.mrb[0].mxu0
    %v2418 = vpop.f32.mrb[0].mxu0
    %v2419 = vpop.f32.mrb[0].mxu0
    %2420 = vdwg.mxu0
    %2421 = vmatprep.subr.bf16.mxu0 0
    %2422 = vmatpush1.bf16.msra.mxu0 %v2013
    %2423 = vmatprep.subr.bf16.mxu0 0
    %2424 = vmatpush1.bf16.msra.mxu0 %v2014
    %2425 = vmatprep.subr.bf16.mxu0 0
    %2426 = vmatpush1.bf16.msra.mxu0 %v2015
    %2427 = vmatprep.subr.bf16.mxu0 0
    %2428 = vmatpush1.bf16.msra.mxu0 %v2016
    %2429 = vmatprep.subr.bf16.mxu0 0
    %2430 = vmatpush1.bf16.msra.mxu0 %v2017
    %2431 = vmatprep.subr.bf16.mxu0 0
    %2432 = vmatpush1.bf16.msra.mxu0 %v2018
    %2433 = vmatprep.subr.bf16.mxu0 0
    %2434 = vmatpush1.bf16.msra.mxu0 %v2019
    %2435 = vmatprep.subr.bf16.mxu0 0
    %2436 = vmatpush1.bf16.msra.mxu0 %v2020
    %2437 = vmatprep.subr.bf16.mxu0 0
    %2438 = vmatpush1.bf16.msra.mxu0 %v2021
    %2439 = vmatprep.subr.bf16.mxu0 0
    %2440 = vmatpush1.bf16.msra.mxu0 %v2022
    %2441 = vmatprep.subr.bf16.mxu0 0
    %2442 = vmatpush1.bf16.msra.mxu0 %v2023
    %2443 = vmatprep.subr.bf16.mxu0 0
    %2444 = vmatpush1.bf16.msra.mxu0 %v2024
    %2445 = vmatprep.subr.bf16.mxu0 0
    %2446 = vmatpush1.bf16.msra.mxu0 %v2025
    %2447 = vmatprep.subr.bf16.mxu0 0
    %2448 = vmatpush1.bf16.msra.mxu0 %v2026
    %2449 = vmatprep.subr.bf16.mxu0 0
    %2450 = vmatpush1.bf16.msra.mxu0 %v2027
    %2451 = vmatprep.subr.bf16.mxu0 0
    %2452 = vmatpush1.bf16.msra.mxu0 %v2028
    %2453 = vmatprep.mubr.bf16.mxu0 %v2182
    %2454 = vmatmul.mubr.bf16.gmra.mrb[0].mxu0 %v2181
    %v2455 = vpop.f32.mrb[0].mxu0
    %v2456 = vadd.f32 %v2416, %v2455
    %v2457 = vpop.f32.mrb[0].mxu0
    %v2458 = vpop.f32.mrb[0].mxu0
    %v2459 = vpop.f32.mrb[0].mxu0
    %2460 = vdwg.mxu0
    %2461 = vmatprep.subr.bf16.mxu0 0
    %2462 = vmatpush1.bf16.msra.mxu0 %v2029
    %2463 = vmatprep.subr.bf16.mxu0 0
    %2464 = vmatpush1.bf16.msra.mxu0 %v2030
    %2465 = vmatprep.subr.bf16.mxu0 0
    %2466 = vmatpush1.bf16.msra.mxu0 %v2031
    %2467 = vmatprep.subr.bf16.mxu0 0
    %2468 = vmatpush1.bf16.msra.mxu0 %v2032
    %2469 = vmatprep.subr.bf16.mxu0 0
    %2470 = vmatpush1.bf16.msra.mxu0 %v2033
    %2471 = vmatprep.subr.bf16.mxu0 0
    %2472 = vmatpush1.bf16.msra.mxu0 %v2034
    %2473 = vmatprep.subr.bf16.mxu0 0
    %2474 = vmatpush1.bf16.msra.mxu0 %v2035
    %2475 = vmatprep.subr.bf16.mxu0 0
    %2476 = vmatpush1.bf16.msra.mxu0 %v2036
    %2477 = vmatprep.subr.bf16.mxu0 0
    %2478 = vmatpush1.bf16.msra.mxu0 %v2037
    %2479 = vmatprep.subr.bf16.mxu0 0
    %2480 = vmatpush1.bf16.msra.mxu0 %v2038
    %2481 = vmatprep.subr.bf16.mxu0 0
    %2482 = vmatpush1.bf16.msra.mxu0 %v2039
    %2483 = vmatprep.subr.bf16.mxu0 0
    %2484 = vmatpush1.bf16.msra.mxu0 %v2040
    %2485 = vmatprep.subr.bf16.mxu0 0
    %2486 = vmatpush1.bf16.msra.mxu0 %v2041
    %2487 = vmatprep.subr.bf16.mxu0 0
    %2488 = vmatpush1.bf16.msra.mxu0 %v2042
    %2489 = vmatprep.subr.bf16.mxu0 0
    %2490 = vmatpush1.bf16.msra.mxu0 %v2043
    %2491 = vmatprep.subr.bf16.mxu0 0
    %2492 = vmatpush1.bf16.msra.mxu0 %v2044
    %2493 = vmatprep.mubr.bf16.mxu0 %v2184
    %2494 = vmatmul.mubr.bf16.gmra.mrb[0].mxu0 %v2183
    %v2495 = vpop.f32.mrb[0].mxu0
    %v2496 = vadd.f32 %v2456, %v2495
    %v2497 = vpop.f32.mrb[0].mxu0
    %v2498 = vpop.f32.mrb[0].mxu0
    %v2499 = vpop.f32.mrb[0].mxu0
    %2500 = vdwg.mxu0
    %2501 = vmatprep.subr.bf16.mxu0 0
    %2502 = vmatpush1.bf16.msra.mxu0 %v2045
    %2503 = vmatprep.subr.bf16.mxu0 0
    %2504 = vmatpush1.bf16.msra.mxu0 %v2046
    %2505 = vmatprep.subr.bf16.mxu0 0
    %2506 = vmatpush1.bf16.msra.mxu0 %v2047
    %2507 = vmatprep.subr.bf16.mxu0 0
    %2508 = vmatpush1.bf16.msra.mxu0 %v2048
    %2509 = vmatprep.subr.bf16.mxu0 0
    %2510 = vmatpush1.bf16.msra.mxu0 %v2049
    %2511 = vmatprep.subr.bf16.mxu0 0
    %2512 = vmatpush1.bf16.msra.mxu0 %v2050
    %2513 = vmatprep.subr.bf16.mxu0 0
    %2514 = vmatpush1.bf16.msra.mxu0 %v2051
    %2515 = vmatprep.subr.bf16.mxu0 0
    %2516 = vmatpush1.bf16.msra.mxu0 %v2052
    %2517 = vmatprep.subr.bf16.mxu0 0
    %2518 = vmatpush1.bf16.msra.mxu0 %v2053
    %2519 = vmatprep.subr.bf16.mxu0 0
    %2520 = vmatpush1.bf16.msra.mxu0 %v2054
    %2521 = vmatprep.subr.bf16.mxu0 0
    %2522 = vmatpush1.bf16.msra.mxu0 %v2055
    %2523 = vmatprep.subr.bf16.mxu0 0
    %2524 = vmatpush1.bf16.msra.mxu0 %v2056
    %2525 = vmatprep.subr.bf16.mxu0 0
    %2526 = vmatpush1.bf16.msra.mxu0 %v2057
    %2527 = vmatprep.subr.bf16.mxu0 0
    %2528 = vmatpush1.bf16.msra.mxu0 %v2058
    %2529 = vmatprep.subr.bf16.mxu0 0
    %2530 = vmatpush1.bf16.msra.mxu0 %v2059
    %2531 = vmatprep.subr.bf16.mxu0 0
    %2532 = vmatpush1.bf16.msra.mxu0 %v2060
    %2533 = vmatprep.mubr.bf16.mxu0 %v2186
    %2534 = vmatmul.mubr.bf16.gmra.mrb[0].mxu0 %v2185
    %v2535 = vpop.f32.mrb[0].mxu0
    %v2536 = vadd.f32 %v2496, %v2535
    %v2537 = vpop.f32.mrb[0].mxu0
    %v2538 = vpop.f32.mrb[0].mxu0
    %v2539 = vpop.f32.mrb[0].mxu0
    %2540 = vdwg.mxu0
    %2541 = vmatprep.subr.bf16.mxu0 0
    %2542 = vmatpush1.bf16.msra.mxu0 %v2061
    %2543 = vmatprep.subr.bf16.mxu0 0
    %2544 = vmatpush1.bf16.msra.mxu0 %v2062
    %2545 = vmatprep.subr.bf16.mxu0 0
    %2546 = vmatpush1.bf16.msra.mxu0 %v2063
    %2547 = vmatprep.subr.bf16.mxu0 0
    %2548 = vmatpush1.bf16.msra.mxu0 %v2064
    %2549 = vmatprep.subr.bf16.mxu0 0
    %2550 = vmatpush1.bf16.msra.mxu0 %v2065
    %2551 = vmatprep.subr.bf16.mxu0 0
    %2552 = vmatpush1.bf16.msra.mxu0 %v2066
    %2553 = vmatprep.subr.bf16.mxu0 0
    %2554 = vmatpush1.bf16.msra.mxu0 %v2067
    %2555 = vmatprep.subr.bf16.mxu0 0
    %2556 = vmatpush1.bf16.msra.mxu0 %v2068
    %2557 = vmatprep.subr.bf16.mxu0 0
    %2558 = vmatpush1.bf16.msra.mxu0 %v2069
    %2559 = vmatprep.subr.bf16.mxu0 0
    %2560 = vmatpush1.bf16.msra.mxu0 %v2070
    %2561 = vmatprep.subr.bf16.mxu0 0
    %2562 = vmatpush1.bf16.msra.mxu0 %v2071
    %2563 = vmatprep.subr.bf16.mxu0 0
    %2564 = vmatpush1.bf16.msra.mxu0 %v2072
    %2565 = vmatprep.subr.bf16.mxu0 0
    %2566 = vmatpush1.bf16.msra.mxu0 %v2073
    %2567 = vmatprep.subr.bf16.mxu0 0
    %2568 = vmatpush1.bf16.msra.mxu0 %v2074
    %2569 = vmatprep.subr.bf16.mxu0 0
    %2570 = vmatpush1.bf16.msra.mxu0 %v2075
    %2571 = vmatprep.subr.bf16.mxu0 0
    %2572 = vmatpush1.bf16.msra.mxu0 %v2076
    %2573 = vmatprep.mubr.bf16.mxu0 %v2188
    %2574 = vmatmul.mubr.bf16.gmra.mrb[0].mxu0 %v2187
    %v2575 = vpop.f32.mrb[0].mxu0
    %v2576 = vadd.f32 %v2536, %v2575
    %v2577 = vpop.f32.mrb[0].mxu0
    %v2578 = vpop.f32.mrb[0].mxu0
    %v2579 = vpop.f32.mrb[0].mxu0
    %2580 = vdwg.mxu0
    %2581 = vmatprep.subr.bf16.mxu0 0
    %2582 = vmatpush1.bf16.msra.mxu0 %v2077
    %2583 = vmatprep.subr.bf16.mxu0 0
    %2584 = vmatpush1.bf16.msra.mxu0 %v2078
    %2585 = vmatprep.subr.bf16.mxu0 0
    %2586 = vmatpush1.bf16.msra.mxu0 %v2079
    %2587 = vmatprep.subr.bf16.mxu0 0
    %2588 = vmatpush1.bf16.msra.mxu0 %v2080
    %2589 = vmatprep.subr.bf16.mxu0 0
    %2590 = vmatpush1.bf16.msra.mxu0 %v2081
    %2591 = vmatprep.subr.bf16.mxu0 0
    %2592 = vmatpush1.bf16.msra.mxu0 %v2082
    %2593 = vmatprep.subr.bf16.mxu0 0
    %2594 = vmatpush1.bf16.msra.mxu0 %v2083
    %2595 = vmatprep.subr.bf16.mxu0 0
    %2596 = vmatpush1.bf16.msra.mxu0 %v2084
    %2597 = vmatprep.subr.bf16.mxu0 0
    %2598 = vmatpush1.bf16.msra.mxu0 %v2085
    %2599 = vmatprep.subr.bf16.mxu0 0
    %2600 = vmatpush1.bf16.msra.mxu0 %v2086
    %2601 = vmatprep.subr.bf16.mxu0 0
    %2602 = vmatpush1.bf16.msra.mxu0 %v2087
    %2603 = vmatprep.subr.bf16.mxu0 0
    %2604 = vmatpush1.bf16.msra.mxu0 %v2088
    %2605 = vmatprep.subr.bf16.mxu0 0
    %2606 = vmatpush1.bf16.msra.mxu0 %v2089
    %2607 = vmatprep.subr.bf16.mxu0 0
    %2608 = vmatpush1.bf16.msra.mxu0 %v2090
    %2609 = vmatprep.subr.bf16.mxu0 0
    %2610 = vmatpush1.bf16.msra.mxu0 %v2091
    %2611 = vmatprep.subr.bf16.mxu0 0
    %2612 = vmatpush1.bf16.msra.mxu0 %v2092
    %2613 = vmatprep.mubr.bf16.mxu0 %v2190
    %2614 = vmatmul.mubr.bf16.gmra.mrb[0].mxu0 %v2189
    %v2615 = vpop.f32.mrb[0].mxu0
    %v2616 = vadd.f32 %v2576, %v2615
    %v2617 = vpop.f32.mrb[0].mxu0
    %v2618 = vpop.f32.mrb[0].mxu0
    %v2619 = vpop.f32.mrb[0].mxu0
    %2620 = vdwg.mxu0
    %2621 = vmatprep.subr.bf16.mxu0 0
    %2622 = vmatpush1.bf16.msra.mxu0 %v2093
    %2623 = vmatprep.subr.bf16.mxu0 0
    %2624 = vmatpush1.bf16.msra.mxu0 %v2094
    %2625 = vmatprep.subr.bf16.mxu0 0
    %2626 = vmatpush1.bf16.msra.mxu0 %v2095
    %2627 = vmatprep.subr.bf16.mxu0 0
    %2628 = vmatpush1.bf16.msra.mxu0 %v2096
    %2629 = vmatprep.subr.bf16.mxu0 0
    %2630 = vmatpush1.bf16.msra.mxu0 %v2097
    %2631 = vmatprep.subr.bf16.mxu0 0
    %2632 = vmatpush1.bf16.msra.mxu0 %v2098
    %2633 = vmatprep.subr.bf16.mxu0 0
    %2634 = vmatpush1.bf16.msra.mxu0 %v2099
    %2635 = vmatprep.subr.bf16.mxu0 0
    %2636 = vmatpush1.bf16.msra.mxu0 %v2100
    %2637 = vmatprep.subr.bf16.mxu0 0
    %2638 = vmatpush1.bf16.msra.mxu0 %v2101
    %2639 = vmatprep.subr.bf16.mxu0 0
    %2640 = vmatpush1.bf16.msra.mxu0 %v2102
    %2641 = vmatprep.subr.bf16.mxu0 0
    %2642 = vmatpush1.bf16.msra.mxu0 %v2103
    %2643 = vmatprep.subr.bf16.mxu0 0
    %2644 = vmatpush1.bf16.msra.mxu0 %v2104
    %2645 = vmatprep.subr.bf16.mxu0 0
    %2646 = vmatpush1.bf16.msra.mxu0 %v2105
    %2647 = vmatprep.subr.bf16.mxu0 0
    %2648 = vmatpush1.bf16.msra.mxu0 %v2106
    %2649 = vmatprep.subr.bf16.mxu0 0
    %2650 = vmatpush1.bf16.msra.mxu0 %v2107
    %2651 = vmatprep.subr.bf16.mxu0 0
    %2652 = vmatpush1.bf16.msra.mxu0 %v2108
    %2653 = vmatprep.mubr.bf16.mxu0 %v2192
    %2654 = vmatmul.mubr.bf16.gmra.mrb[0].mxu0 %v2191
    %v2655 = vpop.f32.mrb[0].mxu0
    %v2656 = vadd.f32 %v2616, %v2655
    %v2657 = vpop.f32.mrb[0].mxu0
    %v2658 = vpop.f32.mrb[0].mxu0
    %v2659 = vpop.f32.mrb[0].mxu0
    %2660 = vdwg.mxu0
    %2661 = vmatprep.subr.bf16.mxu0 0
    %2662 = vmatpush1.bf16.msra.mxu0 %v2109
    %2663 = vmatprep.subr.bf16.mxu0 0
    %2664 = vmatpush1.bf16.msra.mxu0 %v2110
    %2665 = vmatprep.subr.bf16.mxu0 0
    %2666 = vmatpush1.bf16.msra.mxu0 %v2111
    %2667 = vmatprep.subr.bf16.mxu0 0
    %2668 = vmatpush1.bf16.msra.mxu0 %v2112
    %2669 = vmatprep.subr.bf16.mxu0 0
    %2670 = vmatpush1.bf16.msra.mxu0 %v2113
    %2671 = vmatprep.subr.bf16.mxu0 0
    %2672 = vmatpush1.bf16.msra.mxu0 %v2114
    %2673 = vmatprep.subr.bf16.mxu0 0
    %2674 = vmatpush1.bf16.msra.mxu0 %v2115
    %2675 = vmatprep.subr.bf16.mxu0 0
    %2676 = vmatpush1.bf16.msra.mxu0 %v2116
    %2677 = vmatprep.subr.bf16.mxu0 0
    %2678 = vmatpush1.bf16.msra.mxu0 %v2117
    %2679 = vmatprep.subr.bf16.mxu0 0
    %2680 = vmatpush1.bf16.msra.mxu0 %v2118
    %2681 = vmatprep.subr.bf16.mxu0 0
    %2682 = vmatpush1.bf16.msra.mxu0 %v2119
    %2683 = vmatprep.subr.bf16.mxu0 0
    %2684 = vmatpush1.bf16.msra.mxu0 %v2120
    %2685 = vmatprep.subr.bf16.mxu0 0
    %2686 = vmatpush1.bf16.msra.mxu0 %v2121
    %2687 = vmatprep.subr.bf16.mxu0 0
    %2688 = vmatpush1.bf16.msra.mxu0 %v2122
    %2689 = vmatprep.subr.bf16.mxu0 0
    %2690 = vmatpush1.bf16.msra.mxu0 %v2123
    %2691 = vmatprep.subr.bf16.mxu0 0
    %2692 = vmatpush1.bf16.msra.mxu0 %v2124
    %2693 = vmatprep.mubr.bf16.mxu0 %v2194
    %2694 = vmatmul.mubr.bf16.gmra.mrb[0].mxu0 %v2193
    %v2695 = vpop.f32.mrb[0].mxu0
    %v2696 = vadd.f32 %v2656, %v2695
    %v2697 = vpop.f32.mrb[0].mxu0
    %v2698 = vpop.f32.mrb[0].mxu0
    %v2699 = vpop.f32.mrb[0].mxu0
    %2700 = vdwg.mxu0
    %2701 = vmatprep.subr.bf16.mxu0 0
    %2702 = vmatpush1.bf16.msra.mxu0 %v2125
    %2703 = vmatprep.subr.bf16.mxu0 0
    %2704 = vmatpush1.bf16.msra.mxu0 %v2126
    %2705 = vmatprep.subr.bf16.mxu0 0
    %2706 = vmatpush1.bf16.msra.mxu0 %v2127
    %2707 = vmatprep.subr.bf16.mxu0 0
    %2708 = vmatpush1.bf16.msra.mxu0 %v2128
    %2709 = vmatprep.subr.bf16.mxu0 0
    %2710 = vmatpush1.bf16.msra.mxu0 %v2129
    %2711 = vmatprep.subr.bf16.mxu0 0
    %2712 = vmatpush1.bf16.msra.mxu0 %v2130
    %2713 = vmatprep.subr.bf16.mxu0 0
    %2714 = vmatpush1.bf16.msra.mxu0 %v2131
    %2715 = vmatprep.subr.bf16.mxu0 0
    %2716 = vmatpush1.bf16.msra.mxu0 %v2132
    %2717 = vmatprep.subr.bf16.mxu0 0
    %2718 = vmatpush1.bf16.msra.mxu0 0
    %2719 = vmatprep.subr.bf16.mxu0 0
    %2720 = vmatpush1.bf16.msra.mxu0 0
    %2721 = vmatprep.subr.bf16.mxu0 0
    %2722 = vmatpush1.bf16.msra.mxu0 0
    %2723 = vmatprep.subr.bf16.mxu0 0
    %2724 = vmatpush1.bf16.msra.mxu0 0
    %2725 = vmatprep.subr.bf16.mxu0 0
    %2726 = vmatpush1.bf16.msra.mxu0 0
    %2727 = vmatprep.subr.bf16.mxu0 0
    %2728 = vmatpush1.bf16.msra.mxu0 0
    %2729 = vmatprep.subr.bf16.mxu0 0
    %2730 = vmatpush1.bf16.msra.mxu0 0
    %2731 = vmatprep.subr.bf16.mxu0 0
    %2732 = vmatpush1.bf16.msra.mxu0 0
    %2733 = vmatprep.mubr.bf16.mxu0 0
    %2734 = vmatmul.mubr.bf16.gmra.mrb[0].mxu0 %v2195
    %v2735 = vpop.f32.mrb[0].mxu0
    %v2736 = vadd.f32 %v2696, %v2735
    %v2737 = vpop.f32.mrb[0].mxu0
    %v2738 = vpop.f32.mrb[0].mxu0
    %v2739 = vpop.f32.mrb[0].mxu0
    %2740 = vdwg.mxu0
    %v2741 = vrot.slane %v2736, 4
    %v2742 = vadd.f32 %v2736, %v2741
    %v2743 = vrot.slane %v2742, 2
    %v2744 = vadd.f32 %v2742, %v2743
    %v2745 = vrot.slane %v2744, 1
    %v2746 = vadd.f32 %v2744, %v2745
    %v2747 = vmul.f32 %v2746, 0.125
    %v2748 = vsub.f32 %v2736, %v2747
    %v2749 = vmul.f32 %v2748, %v2748
    %v2750 = vrot.slane %v2749, 4
    %v2751 = vadd.f32 %v2749, %v2750
    %v2752 = vrot.slane %v2751, 2
    %v2753 = vadd.f32 %v2751, %v2752
    %v2754 = vrot.slane %v2753, 1
    %v2755 = vadd.f32 %v2753, %v2754
    %v2756 = vmul.f32 %v2755, 0.125
    %v2757 = vld [vmem:[%s4] sm:$0x3]
    %v2758 = vadd.f32 %v2756, 1e-05
    %v2759 = vrsqrt.pop %v2758
    %v2760 = vmul.f32 %v2757, %v2759
    %v2761 = vlaneseq
    %v2762 = vshrl.u32 %v2761, 7
    %v2763 = vsub.s32 0, %v2762
    %v2764 = vrot.slane %v2760, %v2763
    %v2765 = vmul.f32 %v2748, %v2764
    %v2766 = vlaneseq
    %v2767 = vshrl.u32 %v2766, 7
    %v2768 = vsub.s32 1, %v2767
    %v2769 = vrot.slane %v2757, %v2768
    %v2770 = vadd.f32 %v2765, %v2769
    %2771 = vst [vmem:[#allocation5] sm:$0xff] %v2770
    // Predicated region
    $region22: #{model_forward.1} parent=1 // pred_check
      _
    $region23: #{model_forward.1} parent=1 // pred_check_branch
      %2773 = sbr.rel (0) target = $region25
    $region24: #{model_forward.1} parent=1 // pred_region
      %s2775 = ssub.s32 128, 128
      %2776 = vsyncadd [#allocation6], %s2775
      %s2778 = sshll.u32 [#allocation5], 4
      %s2779 = int_to_ptr.vmem [resolvable:$true] %s2778
      %2781 = dma.vmem_to_hbm [thread:$0]  %s2779, 128, %s5, [#allocation6]
    $region25: #{model_forward.1} parent=1 // pred_fallthru
      _
    // Predicated region
    $region26: #{model_forward.1} parent=1 // pred_check
      _
    $region27: #{model_forward.1} parent=1 // pred_check_branch
      %2783 = sbr.rel (0) target = $region29
    $region28: #{model_forward.1} parent=1 // pred_region
      %2784 = dma.done [#allocation6], 128
    $region29: #{model_forward.1} parent=1 // pred_fallthru
      _
    %2785 = vsyncpa [#allocation6], 1

</llo_original>
